<compile_context>
chip_gen: v7x
topology: tpu7x:2x2x1
jax: 0.10.0
libtpu: 0.0.40
codegen_flags: <defaults>
</compile_context>

<pallas_src>
import functools

import jax
import jax.numpy as jnp
from jax import lax
from jax.experimental import pallas as pl
from jax.experimental.pallas import tpu as pltpu


# ---------------- fused SPPF kernel ----------------

def _sppf_fused_kernel(x_ref, w1_ref, b1_ref, w2_ref, b2_ref, o_ref, pad_ref, *, k):
    """One batch image per grid step, NHWC, channels on lanes.

    x_ref:   (H, W, Cin)      input image (leading N squeezed by BlockSpec)
    w1_ref:  (Cin, C)         conv1 1x1 weight with BN scale folded in
    b1_ref:  (1, C)           conv1 folded BN shift (f32)
    w2_ref:  (4*C, Cout)      conv2 1x1 weight (BN scale folded); rows [0:C)
                              hit x1, [C:2C) y1, [2C:3C) y2, [3C:4C) y3
    b2_ref:  (1, Cout)        conv2 folded BN shift (f32)
    o_ref:   (H, W, Cout)     output image
    pad_ref: (H+2p, W+2p, C)  VMEM scratch (f32); zero halo emulates pool padding
    """
    H, W, cin = x_ref.shape
    c = w1_ref.shape[1]
    outc = w2_ref.shape[1]
    p = k // 2
    cdt = w1_ref.dtype  # MXU operand dtype (f32 default, optionally bf16)

    # --- zero only the halo strips each step (interior fully overwritten). ---
    # Zero (not -inf) padding is exact because everything pooled is post-ReLU.
    zrow = jnp.zeros((p, W + 2 * p, c), jnp.float32)
    pad_ref[0:p, :, :] = zrow
    pad_ref[p + H:p + H + p, :, :] = zrow
    zcol = jnp.zeros((H, p, c), jnp.float32)          # corners already zeroed above
    pad_ref[p:p + H, 0:p, :] = zcol
    pad_ref[p:p + H, p + W:p + W + p, :] = zcol

    # --- conv1 (1x1) + folded BN + ReLU  ->  x1 >= 0 ---
    x2d = x_ref[...].reshape(H * W, cin).astype(cdt)
    x1 = jnp.maximum(
        jnp.dot(x2d, w1_ref[...], preferred_element_type=jnp.float32)
        + b1_ref[...], 0.0)                                   # (H*W, c) f32

    # conv2 accumulator, branch 0 (x1): the 4c concat is never materialized.
    acc = jnp.dot(x1.astype(cdt), w2_ref[0:c, :],
                  preferred_element_type=jnp.float32)

    cur = x1.reshape(H, W, c)
    for stage in range(1, 4):
        # ---- k x k stride-1 "same" max pool (separable: W pass, then H pass) ----
        # Direct 4-tap max per axis; a log-tree would save one VALU max but
        # needs an extra full interior store (store slots are scarcer).
        pad_ref[p:p + H, p:p + W, :] = cur
        m = cur
        for d in range(-p, p + 1):
            if d == 0:
                continue
            m = jnp.maximum(m, pad_ref[p:p + H, p + d:p + d + W, :])
        pad_ref[p:p + H, p:p + W, :] = m
        r = m
        for d in range(-p, p + 1):
            if d == 0:
                continue
            r = jnp.maximum(r, pad_ref[p + d:p + d + H, p:p + W, :])
        cur = r
        acc = acc + jnp.dot(cur.reshape(H * W, c).astype(cdt),
                            w2_ref[stage * c:(stage + 1) * c, :],
                            preferred_element_type=jnp.float32)

    out = jnp.maximum(acc + b2_ref[...], 0.0)
    o_ref[...] = out.reshape(H, W, outc).astype(o_ref.dtype)


# ---------------- wrappers ----------------

def sppf_forward_nhwc(x_nhwc, w1, s1, b1, w2, s2, b2, *, k=5,
                      compute_dtype=jnp.float32):
    """x_nhwc: (N, H, W, Cin) -> (N, H, W, Cout).  Fully fused SPPF, no relayouts.

    compute_dtype: dtype of the MXU operands (f32 or bf16).  Accumulation,
    bias add, ReLU and pooling always stay f32.
    """
    N, H, W, cin = x_nhwc.shape
    c = w1.shape[1]
    outc = w2.shape[1]
    p = k // 2

    # Fold BN scale into weight columns on the host (free at runtime).
    w1f = (w1.astype(jnp.float32) * s1[None, :]).astype(compute_dtype)
    w2f = (w2.astype(jnp.float32) * s2[None, :]).astype(compute_dtype)
    b1f = b1.reshape(1, c).astype(jnp.float32)
    b2f = b2.reshape(1, outc).astype(jnp.float32)

    f32 = 4
    wbytes = jnp.dtype(compute_dtype).itemsize
    est = (2 * (H * W * cin + H * W * outc) * f32           # double-buffered I/O blocks
           + (cin * c + 4 * c * outc) * wbytes               # resident folded weights
           + (c + outc) * f32                                 # resident shifts
           + (H + 2 * p) * (W + 2 * p) * c * f32              # pool scratch
           + 8 * H * W * c * f32)                             # live intermediates headroom
    vmem_limit = int(min(max(2 * est, 16 * 2**20), 48 * 2**20))  # v7x: 64 MiB physical

    flops = 2 * N * H * W * (cin * c + 4 * c * outc)
    bytes_accessed = (N * H * W * (cin + outc)) * f32 + (cin * c + 4 * c * outc) * wbytes

    grid_spec = pltpu.PrefetchScalarGridSpec(
        num_scalar_prefetch=0,
        grid=(N,),
        in_specs=[
            pl.BlockSpec((None, H, W, cin), lambda n: (n, 0, 0, 0)),
            pl.BlockSpec((cin, c), lambda n: (0, 0)),
            pl.BlockSpec((1, c), lambda n: (0, 0)),
            pl.BlockSpec((4 * c, outc), lambda n: (0, 0)),
            pl.BlockSpec((1, outc), lambda n: (0, 0)),
        ],
        out_specs=pl.BlockSpec((None, H, W, outc), lambda n: (n, 0, 0, 0)),
        scratch_shapes=[pltpu.VMEM((H + 2 * p, W + 2 * p, c), jnp.float32)],
    )
    return pl.pallas_call(
        functools.partial(_sppf_fused_kernel, k=k),
        out_shape=jax.ShapeDtypeStruct((N, H, W, outc), jnp.float32),
        grid_spec=grid_spec,
        compiler_params=pltpu.CompilerParams(
            dimension_semantics=("parallel",),     # even N -> both v7x TCs busy
            vmem_limit_bytes=vmem_limit),
        cost_estimate=pl.CostEstimate(
            flops=flops, transcendentals=0, bytes_accessed=bytes_accessed),
    )(x_nhwc, w1f, b1f, w2f, b2f)


def sppf_forward(x_nchw, w1, s1, b1, w2, s2, b2, *, k=5,
                 compute_dtype=jnp.float32):
    """NCHW wrapper matching the PyTorch module's I/O layout.

    These two transposes are the only relayouts in the whole pipeline; an NHWC
    network should call sppf_forward_nhwc directly and skip them entirely.
    """
    x_nhwc = jnp.transpose(x_nchw, (0, 2, 3, 1))
    out_nhwc = sppf_forward_nhwc(x_nhwc, w1, s1, b1, w2, s2, b2, k=k,
                                 compute_dtype=compute_dtype)
    return jnp.transpose(out_nhwc, (0, 3, 1, 2))


# ---------------- pure-JAX reference for verification ----------------

def ref_sppf(x, w1, s1, b1, w2, s2, b2, k=5):
    def pwconv(x, w, s, b):
        y = jnp.einsum('nchw,co->nohw', x, w)
        y = y * s[None, :, None, None] + b[None, :, None, None]
        return jnp.maximum(y, 0.0)

    def pool(x):
        return lax.reduce_window(
            x, -jnp.inf, lax.max, (1, 1, k, k), (1, 1, 1, 1),
            [(0, 0), (0, 0), (k // 2, k // 2), (k // 2, k // 2)])

    x1 = pwconv(x, w1, s1, b1)
    y1 = pool(x1)
    y2 = pool(y1)
    y3 = pool(y2)
    return pwconv(jnp.concatenate([x1, y1, y2, y3], axis=1), w2, s2, b2)


if __name__ == "__main__":
    key = jax.random.PRNGKey(0)
    N, inc, H, W = 2, 4, 16, 16
    outc = 8
    c = inc // 2  # conv1 output channels

    k1, k2, k3, k4, k5, k6 = jax.random.split(key, 6)
    x = jax.random.normal(k1, (N, inc, H, W), jnp.float32)

    # conv1.weight (c, inc, 1, 1) stored as matrix (inc, c); conv2 likewise.
    w1 = jax.random.normal(k2, (inc, c), jnp.float32) * 0.5
    g1 = jax.random.uniform(k3, (c,), jnp.float32, minval=0.5, maxval=1.5)
    beta1 = jax.random.normal(k4, (c,), jnp.float32) * 0.1
    w2 = jax.random.normal(k5, (4 * c, outc), jnp.float32) * 0.5
    g2 = jax.random.uniform(k6, (outc,), jnp.float32, minval=0.5, maxval=1.5)
    beta2 = jnp.zeros((outc,), jnp.float32)

    eps = 1e-5
    # eval-mode BN fold with fresh buffers (mean=0, var=1)
    s1 = g1 / jnp.sqrt(1.0 + eps)
    b1 = beta1
    s2 = g2 / jnp.sqrt(1.0 + eps)
    b2 = beta2

    out = sppf_forward(x, w1, s1, b1, w2, s2, b2, k=5)
    out = jax.block_until_ready(out)

    ref = ref_sppf(x, w1, s1, b1, w2, s2, b2, k=5)
    assert out.shape == (N, outc, H, W), out.shape
    assert jnp.allclose(out, ref, atol=1e-4, rtol=1e-4), "mismatch vs reference"

    print("KERNEL_OK")
</pallas_src>

<mosaic_0001>
module attributes {stable_mosaic.version = 11 : i64} {
  func.func @_sppf_fused_kernel(%arg0: i32, %arg1: memref<1x16x16x4xf32, #tpu.memory_space<vmem>>, %arg2: memref<4x2xf32, #tpu.memory_space<vmem>>, %arg3: memref<1x2xf32, #tpu.memory_space<vmem>>, %arg4: memref<8x8xf32, #tpu.memory_space<vmem>>, %arg5: memref<1x8xf32, #tpu.memory_space<vmem>>, %arg6: memref<1x16x16x8xf32, #tpu.memory_space<vmem>>, %arg7: memref<20x20x2xf32, #tpu.memory_space<vmem>>) attributes {dimension_semantics = [#tpu.dimension_semantics<parallel>], iteration_bounds = array<i64: 2>, scalar_prefetch = 0 : i64, scratch_operands = 1 : i64, tpu.core_type = #tpu.core_type<tc>, window_params = [{transform_indices = @transform_0, window_bounds = array<i64: 1, 16, 16, 4>}, {pipeline_mode = #tpu.pipeline_mode<synchronous>, transform_indices = @transform_1, window_bounds = array<i64: 4, 2>}, {pipeline_mode = #tpu.pipeline_mode<synchronous>, transform_indices = @transform_2, window_bounds = array<i64: 1, 2>}, {pipeline_mode = #tpu.pipeline_mode<synchronous>, transform_indices = @transform_3, window_bounds = array<i64: 8, 8>}, {pipeline_mode = #tpu.pipeline_mode<synchronous>, transform_indices = @transform_4, window_bounds = array<i64: 1, 8>}, {transform_indices = @transform_5, window_bounds = array<i64: 1, 16, 16, 8>}]} {
    %cst = arith.constant 0.000000e+00 : f32
    %0 = vector.broadcast %cst : f32 to vector<2x20x2xf32>
    %c0 = arith.constant 0 : index
    %c0_0 = arith.constant 0 : index
    %c0_1 = arith.constant 0 : index
    %1 = vector.load %arg7[%c0, %c0_0, %c0_1] : memref<20x20x2xf32, #tpu.memory_space<vmem>>, vector<2x20x2xf32>
    tpu.vector_store %arg7[%c0, %c0_0, %c0_1], %0 {strides = array<i32>} : memref<20x20x2xf32, #tpu.memory_space<vmem>>, vector<2x20x2xf32>,
    %c18 = arith.constant 18 : index
    %c0_2 = arith.constant 0 : index
    %c0_3 = arith.constant 0 : index
    %2 = vector.load %arg7[%c18, %c0_2, %c0_3] : memref<20x20x2xf32, #tpu.memory_space<vmem>>, vector<2x20x2xf32>
    tpu.vector_store %arg7[%c18, %c0_2, %c0_3], %0 {strides = array<i32>} : memref<20x20x2xf32, #tpu.memory_space<vmem>>, vector<2x20x2xf32>,
    %cst_4 = arith.constant 0.000000e+00 : f32
    %3 = vector.broadcast %cst_4 : f32 to vector<16x2x2xf32>
    %c2 = arith.constant 2 : index
    %c0_5 = arith.constant 0 : index
    %c0_6 = arith.constant 0 : index
    %4 = vector.load %arg7[%c2, %c0_5, %c0_6] : memref<20x20x2xf32, #tpu.memory_space<vmem>>, vector<16x2x2xf32>
    tpu.vector_store %arg7[%c2, %c0_5, %c0_6], %3 {strides = array<i32>} : memref<20x20x2xf32, #tpu.memory_space<vmem>>, vector<16x2x2xf32>,
    %c2_7 = arith.constant 2 : index
    %c18_8 = arith.constant 18 : index
    %c0_9 = arith.constant 0 : index
    %5 = vector.load %arg7[%c2_7, %c18_8, %c0_9] : memref<20x20x2xf32, #tpu.memory_space<vmem>>, vector<16x2x2xf32>
    tpu.vector_store %arg7[%c2_7, %c18_8, %c0_9], %3 {strides = array<i32>} : memref<20x20x2xf32, #tpu.memory_space<vmem>>, vector<16x2x2xf32>,
    %c0_10 = arith.constant 0 : index
    %c0_11 = arith.constant 0 : index
    %c0_12 = arith.constant 0 : index
    %c0_13 = arith.constant 0 : index
    %6 = vector.load %arg1[%c0_10, %c0_11, %c0_12, %c0_13] : memref<1x16x16x4xf32, #tpu.memory_space<vmem>>, vector<1x16x16x4xf32>
    %7 = vector.shape_cast %6 : vector<1x16x16x4xf32> to vector<16x16x4xf32>
    %8 = vector.shape_cast %7 : vector<16x16x4xf32> to vector<256x4xf32>
    %c0_14 = arith.constant 0 : index
    %c0_15 = arith.constant 0 : index
    %9 = vector.load %arg2[%c0_14, %c0_15] : memref<4x2xf32, #tpu.memory_space<vmem>>, vector<4x2xf32>
    %cst_16 = arith.constant dense<0.000000e+00> : vector<256x2xf32>
    %10 = tpu.matmul %8, %9, %cst_16 {dimension_numbers = #tpu.dot_dimension_numbers<[1], [0], [0], [1], [0, 0, 1, 1], [], []>} : vector<256x4xf32>, vector<4x2xf32>, vector<256x2xf32> -> vector<256x2xf32>
    %c0_17 = arith.constant 0 : index
    %c0_18 = arith.constant 0 : index
    %11 = vector.load %arg3[%c0_17, %c0_18] : memref<1x2xf32, #tpu.memory_space<vmem>>, vector<1x2xf32>
    %12 = vector.broadcast %11 : vector<1x2xf32> to vector<256x2xf32>
    %13 = arith.addf %10, %12 : vector<256x2xf32>
    %cst_19 = arith.constant 0.000000e+00 : f32
    %14 = vector.broadcast %cst_19 : f32 to vector<256x2xf32>
    %15 = arith.maximumf %13, %14 : vector<256x2xf32>
    %c0_20 = arith.constant 0 : index
    %c0_21 = arith.constant 0 : index
    %16 = vector.load %arg4[%c0_20, %c0_21] : memref<8x8xf32, #tpu.memory_space<vmem>>, vector<2x8xf32>
    %cst_22 = arith.constant dense<0.000000e+00> : vector<256x8xf32>
    %17 = tpu.matmul %15, %16, %cst_22 {dimension_numbers = #tpu.dot_dimension_numbers<[1], [0], [0], [1], [0, 0, 1, 1], [], []>} : vector<256x2xf32>, vector<2x8xf32>, vector<256x8xf32> -> vector<256x8xf32>
    %18 = vector.shape_cast %15 : vector<256x2xf32> to vector<16x16x2xf32>
    %c2_23 = arith.constant 2 : index
    %c2_24 = arith.constant 2 : index
    %c0_25 = arith.constant 0 : index
    %19 = vector.load %arg7[%c2_23, %c2_24, %c0_25] : memref<20x20x2xf32, #tpu.memory_space<vmem>>, vector<16x16x2xf32>
    tpu.vector_store %arg7[%c2_23, %c2_24, %c0_25], %18 {strides = array<i32>} : memref<20x20x2xf32, #tpu.memory_space<vmem>>, vector<16x16x2xf32>,
    %c2_26 = arith.constant 2 : index
    %c0_27 = arith.constant 0 : index
    %c0_28 = arith.constant 0 : index
    %20 = vector.load %arg7[%c2_26, %c0_27, %c0_28] : memref<20x20x2xf32, #tpu.memory_space<vmem>>, vector<16x16x2xf32>
    %21 = arith.maximumf %18, %20 : vector<16x16x2xf32>
    %c2_29 = arith.constant 2 : index
    %c1 = arith.constant 1 : index
    %c0_30 = arith.constant 0 : index
    %22 = vector.load %arg7[%c2_29, %c1, %c0_30] : memref<20x20x2xf32, #tpu.memory_space<vmem>>, vector<16x16x2xf32>
    %23 = arith.maximumf %21, %22 : vector<16x16x2xf32>
    %c2_31 = arith.constant 2 : index
    %c3 = arith.constant 3 : index
    %c0_32 = arith.constant 0 : index
    %24 = vector.load %arg7[%c2_31, %c3, %c0_32] : memref<20x20x2xf32, #tpu.memory_space<vmem>>, vector<16x16x2xf32>
    %25 = arith.maximumf %23, %24 : vector<16x16x2xf32>
    %c2_33 = arith.constant 2 : index
    %c4 = arith.constant 4 : index
    %c0_34 = arith.constant 0 : index
    %26 = vector.load %arg7[%c2_33, %c4, %c0_34] : memref<20x20x2xf32, #tpu.memory_space<vmem>>, vector<16x16x2xf32>
    %27 = arith.maximumf %25, %26 : vector<16x16x2xf32>
    %c2_35 = arith.constant 2 : index
    %c2_36 = arith.constant 2 : index
    %c0_37 = arith.constant 0 : index
    %28 = vector.load %arg7[%c2_35, %c2_36, %c0_37] : memref<20x20x2xf32, #tpu.memory_space<vmem>>, vector<16x16x2xf32>
    tpu.vector_store %arg7[%c2_35, %c2_36, %c0_37], %27 {strides = array<i32>} : memref<20x20x2xf32, #tpu.memory_space<vmem>>, vector<16x16x2xf32>,
    %c0_38 = arith.constant 0 : index
    %c2_39 = arith.constant 2 : index
    %c0_40 = arith.constant 0 : index
    %29 = vector.load %arg7[%c0_38, %c2_39, %c0_40] : memref<20x20x2xf32, #tpu.memory_space<vmem>>, vector<16x16x2xf32>
    %30 = arith.maximumf %27, %29 : vector<16x16x2xf32>
    %c1_41 = arith.constant 1 : index
    %c2_42 = arith.constant 2 : index
    %c0_43 = arith.constant 0 : index
    %31 = vector.load %arg7[%c1_41, %c2_42, %c0_43] : memref<20x20x2xf32, #tpu.memory_space<vmem>>, vector<16x16x2xf32>
    %32 = arith.maximumf %30, %31 : vector<16x16x2xf32>
    %c3_44 = arith.constant 3 : index
    %c2_45 = arith.constant 2 : index
    %c0_46 = arith.constant 0 : index
    %33 = vector.load %arg7[%c3_44, %c2_45, %c0_46] : memref<20x20x2xf32, #tpu.memory_space<vmem>>, vector<16x16x2xf32>
    %34 = arith.maximumf %32, %33 : vector<16x16x2xf32>
    %c4_47 = arith.constant 4 : index
    %c2_48 = arith.constant 2 : index
    %c0_49 = arith.constant 0 : index
    %35 = vector.load %arg7[%c4_47, %c2_48, %c0_49] : memref<20x20x2xf32, #tpu.memory_space<vmem>>, vector<16x16x2xf32>
    %36 = arith.maximumf %34, %35 : vector<16x16x2xf32>
    %37 = vector.shape_cast %36 : vector<16x16x2xf32> to vector<256x2xf32>
    %c2_50 = arith.constant 2 : index
    %c0_51 = arith.constant 0 : index
    %38 = vector.load %arg4[%c2_50, %c0_51] : memref<8x8xf32, #tpu.memory_space<vmem>>, vector<2x8xf32>
    %cst_52 = arith.constant dense<0.000000e+00> : vector<256x8xf32>
    %39 = tpu.matmul %37, %38, %cst_52 {dimension_numbers = #tpu.dot_dimension_numbers<[1], [0], [0], [1], [0, 0, 1, 1], [], []>} : vector<256x2xf32>, vector<2x8xf32>, vector<256x8xf32> -> vector<256x8xf32>
    %40 = arith.addf %17, %39 : vector<256x8xf32>
    %c2_53 = arith.constant 2 : index
    %c2_54 = arith.constant 2 : index
    %c0_55 = arith.constant 0 : index
    %41 = vector.load %arg7[%c2_53, %c2_54, %c0_55] : memref<20x20x2xf32, #tpu.memory_space<vmem>>, vector<16x16x2xf32>
    tpu.vector_store %arg7[%c2_53, %c2_54, %c0_55], %36 {strides = array<i32>} : memref<20x20x2xf32, #tpu.memory_space<vmem>>, vector<16x16x2xf32>,
    %c2_56 = arith.constant 2 : index
    %c0_57 = arith.constant 0 : index
    %c0_58 = arith.constant 0 : index
    %42 = vector.load %arg7[%c2_56, %c0_57, %c0_58] : memref<20x20x2xf32, #tpu.memory_space<vmem>>, vector<16x16x2xf32>
    %43 = arith.maximumf %36, %42 : vector<16x16x2xf32>
    %c2_59 = arith.constant 2 : index
    %c1_60 = arith.constant 1 : index
    %c0_61 = arith.constant 0 : index
    %44 = vector.load %arg7[%c2_59, %c1_60, %c0_61] : memref<20x20x2xf32, #tpu.memory_space<vmem>>, vector<16x16x2xf32>
    %45 = arith.maximumf %43, %44 : vector<16x16x2xf32>
    %c2_62 = arith.constant 2 : index
    %c3_63 = arith.constant 3 : index
    %c0_64 = arith.constant 0 : index
    %46 = vector.load %arg7[%c2_62, %c3_63, %c0_64] : memref<20x20x2xf32, #tpu.memory_space<vmem>>, vector<16x16x2xf32>
    %47 = arith.maximumf %45, %46 : vector<16x16x2xf32>
    %c2_65 = arith.constant 2 : index
    %c4_66 = arith.constant 4 : index
    %c0_67 = arith.constant 0 : index
    %48 = vector.load %arg7[%c2_65, %c4_66, %c0_67] : memref<20x20x2xf32, #tpu.memory_space<vmem>>, vector<16x16x2xf32>
    %49 = arith.maximumf %47, %48 : vector<16x16x2xf32>
    %c2_68 = arith.constant 2 : index
    %c2_69 = arith.constant 2 : index
    %c0_70 = arith.constant 0 : index
    %50 = vector.load %arg7[%c2_68, %c2_69, %c0_70] : memref<20x20x2xf32, #tpu.memory_space<vmem>>, vector<16x16x2xf32>
    tpu.vector_store %arg7[%c2_68, %c2_69, %c0_70], %49 {strides = array<i32>} : memref<20x20x2xf32, #tpu.memory_space<vmem>>, vector<16x16x2xf32>,
    %c0_71 = arith.constant 0 : index
    %c2_72 = arith.constant 2 : index
    %c0_73 = arith.constant 0 : index
    %51 = vector.load %arg7[%c0_71, %c2_72, %c0_73] : memref<20x20x2xf32, #tpu.memory_space<vmem>>, vector<16x16x2xf32>
    %52 = arith.maximumf %49, %51 : vector<16x16x2xf32>
    %c1_74 = arith.constant 1 : index
    %c2_75 = arith.constant 2 : index
    %c0_76 = arith.constant 0 : index
    %53 = vector.load %arg7[%c1_74, %c2_75, %c0_76] : memref<20x20x2xf32, #tpu.memory_space<vmem>>, vector<16x16x2xf32>
    %54 = arith.maximumf %52, %53 : vector<16x16x2xf32>
    %c3_77 = arith.constant 3 : index
    %c2_78 = arith.constant 2 : index
    %c0_79 = arith.constant 0 : index
    %55 = vector.load %arg7[%c3_77, %c2_78, %c0_79] : memref<20x20x2xf32, #tpu.memory_space<vmem>>, vector<16x16x2xf32>
    %56 = arith.maximumf %54, %55 : vector<16x16x2xf32>
    %c4_80 = arith.constant 4 : index
    %c2_81 = arith.constant 2 : index
    %c0_82 = arith.constant 0 : index
    %57 = vector.load %arg7[%c4_80, %c2_81, %c0_82] : memref<20x20x2xf32, #tpu.memory_space<vmem>>, vector<16x16x2xf32>
    %58 = arith.maximumf %56, %57 : vector<16x16x2xf32>
    %59 = vector.shape_cast %58 : vector<16x16x2xf32> to vector<256x2xf32>
    %c4_83 = arith.constant 4 : index
    %c0_84 = arith.constant 0 : index
    %60 = vector.load %arg4[%c4_83, %c0_84] : memref<8x8xf32, #tpu.memory_space<vmem>>, vector<2x8xf32>
    %cst_85 = arith.constant dense<0.000000e+00> : vector<256x8xf32>
    %61 = tpu.matmul %59, %60, %cst_85 {dimension_numbers = #tpu.dot_dimension_numbers<[1], [0], [0], [1], [0, 0, 1, 1], [], []>} : vector<256x2xf32>, vector<2x8xf32>, vector<256x8xf32> -> vector<256x8xf32>
    %62 = arith.addf %40, %61 : vector<256x8xf32>
    %c2_86 = arith.constant 2 : index
    %c2_87 = arith.constant 2 : index
    %c0_88 = arith.constant 0 : index
    %63 = vector.load %arg7[%c2_86, %c2_87, %c0_88] : memref<20x20x2xf32, #tpu.memory_space<vmem>>, vector<16x16x2xf32>
    tpu.vector_store %arg7[%c2_86, %c2_87, %c0_88], %58 {strides = array<i32>} : memref<20x20x2xf32, #tpu.memory_space<vmem>>, vector<16x16x2xf32>,
    %c2_89 = arith.constant 2 : index
    %c0_90 = arith.constant 0 : index
    %c0_91 = arith.constant 0 : index
    %64 = vector.load %arg7[%c2_89, %c0_90, %c0_91] : memref<20x20x2xf32, #tpu.memory_space<vmem>>, vector<16x16x2xf32>
    %65 = arith.maximumf %58, %64 : vector<16x16x2xf32>
    %c2_92 = arith.constant 2 : index
    %c1_93 = arith.constant 1 : index
    %c0_94 = arith.constant 0 : index
    %66 = vector.load %arg7[%c2_92, %c1_93, %c0_94] : memref<20x20x2xf32, #tpu.memory_space<vmem>>, vector<16x16x2xf32>
    %67 = arith.maximumf %65, %66 : vector<16x16x2xf32>
    %c2_95 = arith.constant 2 : index
    %c3_96 = arith.constant 3 : index
    %c0_97 = arith.constant 0 : index
    %68 = vector.load %arg7[%c2_95, %c3_96, %c0_97] : memref<20x20x2xf32, #tpu.memory_space<vmem>>, vector<16x16x2xf32>
    %69 = arith.maximumf %67, %68 : vector<16x16x2xf32>
    %c2_98 = arith.constant 2 : index
    %c4_99 = arith.constant 4 : index
    %c0_100 = arith.constant 0 : index
    %70 = vector.load %arg7[%c2_98, %c4_99, %c0_100] : memref<20x20x2xf32, #tpu.memory_space<vmem>>, vector<16x16x2xf32>
    %71 = arith.maximumf %69, %70 : vector<16x16x2xf32>
    %c2_101 = arith.constant 2 : index
    %c2_102 = arith.constant 2 : index
    %c0_103 = arith.constant 0 : index
    %72 = vector.load %arg7[%c2_101, %c2_102, %c0_103] : memref<20x20x2xf32, #tpu.memory_space<vmem>>, vector<16x16x2xf32>
    tpu.vector_store %arg7[%c2_101, %c2_102, %c0_103], %71 {strides = array<i32>} : memref<20x20x2xf32, #tpu.memory_space<vmem>>, vector<16x16x2xf32>,
    %c0_104 = arith.constant 0 : index
    %c2_105 = arith.constant 2 : index
    %c0_106 = arith.constant 0 : index
    %73 = vector.load %arg7[%c0_104, %c2_105, %c0_106] : memref<20x20x2xf32, #tpu.memory_space<vmem>>, vector<16x16x2xf32>
    %74 = arith.maximumf %71, %73 : vector<16x16x2xf32>
    %c1_107 = arith.constant 1 : index
    %c2_108 = arith.constant 2 : index
    %c0_109 = arith.constant 0 : index
    %75 = vector.load %arg7[%c1_107, %c2_108, %c0_109] : memref<20x20x2xf32, #tpu.memory_space<vmem>>, vector<16x16x2xf32>
    %76 = arith.maximumf %74, %75 : vector<16x16x2xf32>
    %c3_110 = arith.constant 3 : index
    %c2_111 = arith.constant 2 : index
    %c0_112 = arith.constant 0 : index
    %77 = vector.load %arg7[%c3_110, %c2_111, %c0_112] : memref<20x20x2xf32, #tpu.memory_space<vmem>>, vector<16x16x2xf32>
    %78 = arith.maximumf %76, %77 : vector<16x16x2xf32>
    %c4_113 = arith.constant 4 : index
    %c2_114 = arith.constant 2 : index
    %c0_115 = arith.constant 0 : index
    %79 = vector.load %arg7[%c4_113, %c2_114, %c0_115] : memref<20x20x2xf32, #tpu.memory_space<vmem>>, vector<16x16x2xf32>
    %80 = arith.maximumf %78, %79 : vector<16x16x2xf32>
    %81 = vector.shape_cast %80 : vector<16x16x2xf32> to vector<256x2xf32>
    %c6 = arith.constant 6 : index
    %c0_116 = arith.constant 0 : index
    %82 = vector.load %arg4[%c6, %c0_116] : memref<8x8xf32, #tpu.memory_space<vmem>>, vector<2x8xf32>
    %cst_117 = arith.constant dense<0.000000e+00> : vector<256x8xf32>
    %83 = tpu.matmul %81, %82, %cst_117 {dimension_numbers = #tpu.dot_dimension_numbers<[1], [0], [0], [1], [0, 0, 1, 1], [], []>} : vector<256x2xf32>, vector<2x8xf32>, vector<256x8xf32> -> vector<256x8xf32>
    %84 = arith.addf %62, %83 : vector<256x8xf32>
    %c0_118 = arith.constant 0 : index
    %c0_119 = arith.constant 0 : index
    %85 = vector.load %arg5[%c0_118, %c0_119] : memref<1x8xf32, #tpu.memory_space<vmem>>, vector<1x8xf32>
    %86 = vector.broadcast %85 : vector<1x8xf32> to vector<256x8xf32>
    %87 = arith.addf %84, %86 : vector<256x8xf32>
    %cst_120 = arith.constant 0.000000e+00 : f32
    %88 = vector.broadcast %cst_120 : f32 to vector<256x8xf32>
    %89 = arith.maximumf %87, %88 : vector<256x8xf32>
    %90 = vector.shape_cast %89 : vector<256x8xf32> to vector<16x16x8xf32>
    %c0_121 = arith.constant 0 : index
    %c0_122 = arith.constant 0 : index
    %c0_123 = arith.constant 0 : index
    %c0_124 = arith.constant 0 : index
    %91 = vector.load %arg6[%c0_121, %c0_122, %c0_123, %c0_124] : memref<1x16x16x8xf32, #tpu.memory_space<vmem>>, vector<1x16x16x8xf32>
    %92 = vector.shape_cast %91 : vector<1x16x16x8xf32> to vector<16x16x8xf32>
    %93 = vector.shape_cast %90 : vector<16x16x8xf32> to vector<1x16x16x8xf32>
    tpu.vector_store %arg6[%c0_121, %c0_122, %c0_123, %c0_124], %93 {strides = array<i32>} : memref<1x16x16x8xf32, #tpu.memory_space<vmem>>, vector<1x16x16x8xf32>,
    return
  }
  func.func @transform_0(%arg0: i32) -> (i32, i32, i32, i32) {
    %c0_i32 = arith.constant 0 : i32
    %c0_i32_0 = arith.constant 0 : i32
    %c0_i32_1 = arith.constant 0 : i32
    %c0_i32_2 = arith.constant 0 : i32
    return %arg0, %c0_i32, %c0_i32_0, %c0_i32_1 : i32, i32, i32, i32
  }
  func.func @transform_1(%arg0: i32) -> (i32, i32) {
    %c0_i32 = arith.constant 0 : i32
    %c0_i32_0 = arith.constant 0 : i32
    %c0_i32_1 = arith.constant 0 : i32
    return %c0_i32, %c0_i32_0 : i32, i32
  }
  func.func @transform_2(%arg0: i32) -> (i32, i32) {
    %c0_i32 = arith.constant 0 : i32
    %c0_i32_0 = arith.constant 0 : i32
    %c0_i32_1 = arith.constant 0 : i32
    return %c0_i32, %c0_i32_0 : i32, i32
  }
  func.func @transform_3(%arg0: i32) -> (i32, i32) {
    %c0_i32 = arith.constant 0 : i32
    %c0_i32_0 = arith.constant 0 : i32
    %c0_i32_1 = arith.constant 0 : i32
    return %c0_i32, %c0_i32_0 : i32, i32
  }
  func.func @transform_4(%arg0: i32) -> (i32, i32) {
    %c0_i32 = arith.constant 0 : i32
    %c0_i32_0 = arith.constant 0 : i32
    %c0_i32_1 = arith.constant 0 : i32
    return %c0_i32, %c0_i32_0 : i32, i32
  }
  func.func @transform_5(%arg0: i32) -> (i32, i32, i32, i32) {
    %c0_i32 = arith.constant 0 : i32
    %c0_i32_0 = arith.constant 0 : i32
    %c0_i32_1 = arith.constant 0 : i32
    %c0_i32_2 = arith.constant 0 : i32
    return %arg0, %c0_i32, %c0_i32_0, %c0_i32_1 : i32, i32, i32, i32
  }
}

</mosaic_0001>

<llo_original>
// kernel: tpu_custom_call.1
$region0: #{tpu_custom_call.1}
  #allocation0 [shape = 'u32[]', space=smem, size = 0x4, offset = 0x4, fixed_abs, tag = 'smem constant byte address 0x4 - core index']
  #allocation1 [shape = 'u32[144,128]{1,0:T(1,128)}', space=vmem, size = 0x12000, scoped, tag = 'internal scratch']
  #allocation2 [shape = 'f32[20,20,2]{2,1,0:T(8,128)}', space=vmem, size = 0x3c000, scoped, tag = 'scratch operand']
  %s0 = inlined_call_operand.vmem [shape: f32[2,16,16,4], index: 0, kind: input, shape index: {}]
  %s1 = inlined_call_operand.vmem [shape: f32[4,2], index: 1, kind: input, shape index: {}]
  %s2 = inlined_call_operand.vmem [shape: f32[1,2], index: 2, kind: input, shape index: {}]
  %s3 = inlined_call_operand.vmem [shape: f32[8,8], index: 3, kind: input, shape index: {}]
  %s4 = inlined_call_operand.vmem [shape: f32[1,8], index: 4, kind: input, shape index: {}]
  %s5 = inlined_call_operand.vmem [shape: f32[2,16,16,8], index: 5, kind: output, shape index: {}]
  %s6 = sld [smem:[#allocation0]]
  $region53: #{tpu_custom_call.1} parent=0
    _
  %s8 = ssub.s32 1, %s6
  %s9 = scalar_select 0, %s8, %s6
  loop: start=0, step=1, limit=4
  $region2: #{tpu_custom_call.1} parent=0 // loop_pre_header
    _
  $region3: #{tpu_custom_call.1} parent=0 // loop_header
    %s11 = sphi 0, %s15
    %p12 = scmp.ge.s32.totalorder %s11, 4
    %s21 = sphi 0, %s23
    %s24 = sphi 0, %s21
    %s25 = sphi 0, %s24
    %s41 = sphi 0, %s25
    %s45 = sphi 0, %s45
    %s47 = sphi 0, %s45
    %s48 = sphi 0, %s47
    %s62 = sphi 0, %s48
    %s66 = sphi 0, %s66
    %s68 = sphi 0, %s66
    %s69 = sphi 0, %s68
    %s83 = sphi 0, %s69
    %s87 = sphi 0, %s87
    %s89 = sphi 0, %s87
    %s90 = sphi 0, %s89
    %s104 = sphi 0, %s90
    %s108 = sphi 0, %s108
    %s110 = sphi 0, %s108
    %s111 = sphi 0, %s110
    %s125 = sphi 0, %s111
    %s131 = sphi 0, %s133
    %s134 = sphi 0, %s131
    %s135 = sphi 0, %s134
    %s151 = sphi 0, %s135
  $region4: #{tpu_custom_call.1} parent=0 // loop_header_branch
    %14 = sbr.rel (%p12) target = $region8
  $region5: #{tpu_custom_call.1} parent=0 // loop_body
    %s16 = ssub.s32 %s11, 1
    %s17 = ssub.s32 %s11, 2
    %s18 = sadd.s32 %s11, 1
    %s19 = ssub.s32 %s11, %s18
    %p20 = scmp.eq.s32.totalorder %s19, 0
    %s22 = sadd.s32 %s21, 1
    %s23 = scalar_select %p20, %s21, %s22
    %p26 = pneg %p20
    %p27 = scmp.eq.s32.totalorder %s11, 1
    %p28 = por %p26, %p27
    %p29 = scmp.ne.s32.totalorder %s21, %s24
    %p30 = scmp.eq.s32.totalorder %s11, 0
    %p31 = por %p29, %p30
    %p32 = scmp.ne.s32.totalorder %s21, %s24
    %p33 = scmp.eq.s32.totalorder %s16, 1
    %p34 = por %p32, %p33
    %p35 = scmp.ne.s32.totalorder %s24, %s25
    %p36 = scmp.eq.s32.totalorder %s16, 0
    %p37 = por %p35, %p36
    %p38 = scmp.ne.s32.totalorder %s24, %s25
    %p39 = scmp.eq.s32.totalorder %s17, 1
    %p40 = por %p38, %p39
    %p42 = scmp.ne.s32.totalorder %s25, %s41
    %p43 = scmp.eq.s32.totalorder %s17, 0
    %p44 = por %p42, %p43
    %s46 = sadd.s32 %s45, 1
    %p49 = scmp.eq.s32.totalorder %s11, 1
    %p50 = scmp.ne.s32.totalorder %s45, %s47
    %p51 = scmp.eq.s32.totalorder %s11, 0
    %p52 = por %p50, %p51
    %p53 = scmp.ne.s32.totalorder %s45, %s47
    %p54 = scmp.eq.s32.totalorder %s16, 1
    %p55 = por %p53, %p54
    %p56 = scmp.ne.s32.totalorder %s47, %s48
    %p57 = scmp.eq.s32.totalorder %s16, 0
    %p58 = por %p56, %p57
    %p59 = scmp.ne.s32.totalorder %s47, %s48
    %p60 = scmp.eq.s32.totalorder %s17, 1
    %p61 = por %p59, %p60
    %p63 = scmp.ne.s32.totalorder %s48, %s62
    %p64 = scmp.eq.s32.totalorder %s17, 0
    %p65 = por %p63, %p64
    %s67 = sadd.s32 %s66, 1
    %p70 = scmp.eq.s32.totalorder %s11, 1
    %p71 = scmp.ne.s32.totalorder %s66, %s68
    %p72 = scmp.eq.s32.totalorder %s11, 0
    %p73 = por %p71, %p72
    %p74 = scmp.ne.s32.totalorder %s66, %s68
    %p75 = scmp.eq.s32.totalorder %s16, 1
    %p76 = por %p74, %p75
    %p77 = scmp.ne.s32.totalorder %s68, %s69
    %p78 = scmp.eq.s32.totalorder %s16, 0
    %p79 = por %p77, %p78
    %p80 = scmp.ne.s32.totalorder %s68, %s69
    %p81 = scmp.eq.s32.totalorder %s17, 1
    %p82 = por %p80, %p81
    %p84 = scmp.ne.s32.totalorder %s69, %s83
    %p85 = scmp.eq.s32.totalorder %s17, 0
    %p86 = por %p84, %p85
    %s88 = sadd.s32 %s87, 1
    %p91 = scmp.eq.s32.totalorder %s11, 1
    %p92 = scmp.ne.s32.totalorder %s87, %s89
    %p93 = scmp.eq.s32.totalorder %s11, 0
    %p94 = por %p92, %p93
    %p95 = scmp.ne.s32.totalorder %s87, %s89
    %p96 = scmp.eq.s32.totalorder %s16, 1
    %p97 = por %p95, %p96
    %p98 = scmp.ne.s32.totalorder %s89, %s90
    %p99 = scmp.eq.s32.totalorder %s16, 0
    %p100 = por %p98, %p99
    %p101 = scmp.ne.s32.totalorder %s89, %s90
    %p102 = scmp.eq.s32.totalorder %s17, 1
    %p103 = por %p101, %p102
    %p105 = scmp.ne.s32.totalorder %s90, %s104
    %p106 = scmp.eq.s32.totalorder %s17, 0
    %p107 = por %p105, %p106
    %s109 = sadd.s32 %s108, 1
    %p112 = scmp.eq.s32.totalorder %s11, 1
    %p113 = scmp.ne.s32.totalorder %s108, %s110
    %p114 = scmp.eq.s32.totalorder %s11, 0
    %p115 = por %p113, %p114
    %p116 = scmp.ne.s32.totalorder %s108, %s110
    %p117 = scmp.eq.s32.totalorder %s16, 1
    %p118 = por %p116, %p117
    %p119 = scmp.ne.s32.totalorder %s110, %s111
    %p120 = scmp.eq.s32.totalorder %s16, 0
    %p121 = por %p119, %p120
    %p122 = scmp.ne.s32.totalorder %s110, %s111
    %p123 = scmp.eq.s32.totalorder %s17, 1
    %p124 = por %p122, %p123
    %p126 = scmp.ne.s32.totalorder %s111, %s125
    %p127 = scmp.eq.s32.totalorder %s17, 0
    %p128 = por %p126, %p127
    %s129 = ssub.s32 %s11, %s18
    %p130 = scmp.eq.s32.totalorder %s129, 0
    %s132 = sadd.s32 %s131, 1
    %s133 = scalar_select %p130, %s131, %s132
    %p136 = pneg %p130
    %p137 = scmp.eq.s32.totalorder %s11, 1
    %p138 = por %p136, %p137
    %p139 = scmp.ne.s32.totalorder %s131, %s134
    %p140 = scmp.eq.s32.totalorder %s11, 0
    %p141 = por %p139, %p140
    %p142 = scmp.ne.s32.totalorder %s131, %s134
    %p143 = scmp.eq.s32.totalorder %s16, 1
    %p144 = por %p142, %p143
    %p145 = scmp.ne.s32.totalorder %s134, %s135
    %p146 = scmp.eq.s32.totalorder %s16, 0
    %p147 = por %p145, %p146
    %p148 = scmp.ne.s32.totalorder %s134, %s135
    %p149 = scmp.eq.s32.totalorder %s17, 1
    %p150 = por %p148, %p149
    %p152 = scmp.ne.s32.totalorder %s135, %s151
    %p153 = scmp.eq.s32.totalorder %s17, 0
    %p154 = por %p152, %p153
    %p155 = scmp.le.s32.totalorder 1, %s11
    %p156 = scmp.lt.s32.totalorder %s11, 3
    %p157 = pnand %p155, %p156
    %p158 = pneg %p157
    // Predicated region
    $region9: #{tpu_custom_call.1} parent=5 // pred_check
      _
    $region10: #{tpu_custom_call.1} parent=5 // pred_check_branch
      %160 = sbr.rel (%p157) target = $region12
    $region11: #{tpu_custom_call.1} parent=5 // pred_region
      %s161 = ssub.s32 %s11, 1
      // Predicated region
      $region13: #{tpu_custom_call.1} parent=11 // pred_check
        %p162 = pneg %p58
      $region14: #{tpu_custom_call.1} parent=11 // pred_check_branch
        %164 = sbr.rel (%p162) target = $region16
      $region15: #{tpu_custom_call.1} parent=11 // pred_region
        _
      $region16: #{tpu_custom_call.1} parent=11 // pred_fallthru
        _
      // Predicated region
      $region17: #{tpu_custom_call.1} parent=11 // pred_check
        %p165 = pneg %p79
      $region18: #{tpu_custom_call.1} parent=11 // pred_check_branch
        %167 = sbr.rel (%p165) target = $region20
      $region19: #{tpu_custom_call.1} parent=11 // pred_region
        _
      $region20: #{tpu_custom_call.1} parent=11 // pred_fallthru
        _
      // Predicated region
      $region21: #{tpu_custom_call.1} parent=11 // pred_check
        %p168 = pneg %p100
      $region22: #{tpu_custom_call.1} parent=11 // pred_check_branch
        %170 = sbr.rel (%p168) target = $region24
      $region23: #{tpu_custom_call.1} parent=11 // pred_region
        _
      $region24: #{tpu_custom_call.1} parent=11 // pred_fallthru
        _
      // Predicated region
      $region25: #{tpu_custom_call.1} parent=11 // pred_check
        %p171 = pneg %p121
      $region26: #{tpu_custom_call.1} parent=11 // pred_check_branch
        %173 = sbr.rel (%p171) target = $region28
      $region27: #{tpu_custom_call.1} parent=11 // pred_region
        _
      $region28: #{tpu_custom_call.1} parent=11 // pred_fallthru
        _
    $region12: #{tpu_custom_call.1} parent=5 // pred_fallthru
      _
    %p174 = scmp.lt.s32.totalorder %s11, 2
    // Predicated region
    $region29: #{tpu_custom_call.1} parent=5 // pred_check
      %p175 = pneg %p174
    $region30: #{tpu_custom_call.1} parent=5 // pred_check_branch
      %177 = sbr.rel (%p175) target = $region32
    $region31: #{tpu_custom_call.1} parent=5 // pred_region
      // Predicated region
      $region33: #{tpu_custom_call.1} parent=31 // pred_check
        %p178 = pneg %p31
      $region34: #{tpu_custom_call.1} parent=31 // pred_check_branch
        %180 = sbr.rel (%p178) target = $region36
      $region35: #{tpu_custom_call.1} parent=31 // pred_region
        %p181 = scmp.lt.s32.totalorder %s11, 1
        %s182 = scalar_select %p181, %s11, 1
        %s183 = smul.addr %s182, 32
        %s184 = smul.addr %s183, 8
        %s185 = scalar_lea.vmem %s0, %s184
      $region36: #{tpu_custom_call.1} parent=31 // pred_fallthru
        _
    $region32: #{tpu_custom_call.1} parent=5 // pred_fallthru
      _
    %p186 = scmp.le.s32.totalorder 1, %s11
    %p187 = scmp.lt.s32.totalorder %s11, 3
    %p188 = pnand %p186, %p187
    %p189 = pneg %p188
    // Predicated region
    $region37: #{tpu_custom_call.1} parent=5 // pred_check
      _
    $region38: #{tpu_custom_call.1} parent=5 // pred_check_branch
      %191 = sbr.rel (%p188) target = $region40
    $region39: #{tpu_custom_call.1} parent=5 // pred_region
      %s192 = ssub.s32 %s11, 1
      %p193 = scmp.lt.s32.totalorder %s16, 1
      %s194 = scalar_select %p193, %s16, 1
      %s195 = smul.addr %s194, 32
      %s196 = smul.addr %s195, 8
      %s197 = scalar_lea.vmem %s0, %s196
      %p198 = pneg %p37
      %p199 = pneg %p34
      %p200 = pneg %p58
      %p201 = pneg %p55
      %p202 = pneg %p79
      %p203 = pneg %p76
      %p204 = pneg %p100
      %p205 = pneg %p97
      %p206 = pneg %p121
      %p207 = pneg %p118
      %p208 = pneg %p147
      %p209 = pneg %p144
      %p210 = scmp.lt.s32.totalorder %s16, 1
      %s211 = scalar_select %p210, %s16, 1
      %s212 = smul.addr %s211, 32
      %s213 = smul.addr %s212, 8
      %s214 = scalar_lea.vmem %s5, %s213
      %p215 = scmp.lt.s32.totalorder %s16, 1
      %s216 = scalar_select %p215, %s16, 1
      %s217 = smul.addr %s216, 32
      %s218 = smul.addr %s217, 8
      %s219 = scalar_lea.vmem %s0, %s218
      %p220 = scmp.lt.s32.totalorder %s16, 1
      %s221 = scalar_select %p220, %s16, 1
      %s222 = smul.addr %s221, 32
      %s223 = smul.addr %s222, 8
      %s224 = scalar_lea.vmem %s5, %s223
      %vm225 = vcmask 15360
      %226 = vst.msk [vmem:[#allocation2] sm:$0xff] %vm225, 0.0
      %227 = vst.msk [vmem:[#allocation2 + $0x8] sm:$0xff] %vm225, 0.0
      %vm228 = vcmask 11264
      %229 = vst.msk [vmem:[#allocation2 + $0x10] sm:$0xf] %vm228, 0.0
      %230 = vst.msk [vmem:[#allocation2 + $0x18] sm:$0xff] %vm225, 0.0
      %231 = vst.msk [vmem:[#allocation2 + $0x20] sm:$0xff] %vm225, 0.0
      %232 = vst.msk [vmem:[#allocation2 + $0x28] sm:$0xf] %vm228, 0.0
      %s233 = scalar_lea.vmem [#allocation2], 432
      %234 = vst.msk [vmem:[%s233] sm:$0xff] %vm225, 0.0
      %235 = vst.msk [vmem:[%s233 + $0x8] sm:$0xff] %vm225, 0.0
      %236 = vst.msk [vmem:[%s233 + $0x10] sm:$0xf] %vm228, 0.0
      %237 = vst.msk [vmem:[%s233 + $0x18] sm:$0xff] %vm225, 0.0
      %238 = vst.msk [vmem:[%s233 + $0x20] sm:$0xff] %vm225, 0.0
      %239 = vst.msk [vmem:[%s233 + $0x28] sm:$0xf] %vm228, 0.0
      %s240 = scalar_lea.vmem [#allocation2], 48
      %vm241 = vcmask 9216
      %242 = vst.msk [vmem:[%s240] sm:$0x3] %vm241, 0.0
      %243 = vst.msk [vmem:[%s240 + $0x18] sm:$0x3] %vm241, 0.0
      %244 = vst.msk [vmem:[%s240 + $0x30] sm:$0x3] %vm241, 0.0
      %245 = vst.msk [vmem:[%s240 + $0x48] sm:$0x3] %vm241, 0.0
      %246 = vst.msk [vmem:[%s240 + $0x60] sm:$0x3] %vm241, 0.0
      %247 = vst.msk [vmem:[%s240 + $0x78] sm:$0x3] %vm241, 0.0
      %248 = vst.msk [vmem:[%s240 + $0x90] sm:$0x3] %vm241, 0.0
      %249 = vst.msk [vmem:[%s240 + $0xa8] sm:$0x3] %vm241, 0.0
      %250 = vst.msk [vmem:[%s240 + $0xc0] sm:$0x3] %vm241, 0.0
      %251 = vst.msk [vmem:[%s240 + $0xd8] sm:$0x3] %vm241, 0.0
      %252 = vst.msk [vmem:[%s240 + $0xf0] sm:$0x3] %vm241, 0.0
      %253 = vst.msk [vmem:[%s240 + $0x108] sm:$0x3] %vm241, 0.0
      %254 = vst.msk [vmem:[%s240 + $0x120] sm:$0x3] %vm241, 0.0
      %255 = vst.msk [vmem:[%s240 + $0x138] sm:$0x3] %vm241, 0.0
      %256 = vst.msk [vmem:[%s240 + $0x150] sm:$0x3] %vm241, 0.0
      %257 = vst.msk [vmem:[%s240 + $0x168] sm:$0x3] %vm241, 0.0
      %258 = vst.msk [vmem:[%s240 + $0x12] sm:$0x3] %vm241, 0.0
      %259 = vst.msk [vmem:[%s240 + $0x2a] sm:$0x3] %vm241, 0.0
      %260 = vst.msk [vmem:[%s240 + $0x42] sm:$0x3] %vm241, 0.0
      %261 = vst.msk [vmem:[%s240 + $0x5a] sm:$0x3] %vm241, 0.0
      %262 = vst.msk [vmem:[%s240 + $0x72] sm:$0x3] %vm241, 0.0
      %263 = vst.msk [vmem:[%s240 + $0x8a] sm:$0x3] %vm241, 0.0
      %264 = vst.msk [vmem:[%s240 + $0xa2] sm:$0x3] %vm241, 0.0
      %265 = vst.msk [vmem:[%s240 + $0xba] sm:$0x3] %vm241, 0.0
      %266 = vst.msk [vmem:[%s240 + $0xd2] sm:$0x3] %vm241, 0.0
      %267 = vst.msk [vmem:[%s240 + $0xea] sm:$0x3] %vm241, 0.0
      %268 = vst.msk [vmem:[%s240 + $0x102] sm:$0x3] %vm241, 0.0
      %269 = vst.msk [vmem:[%s240 + $0x11a] sm:$0x3] %vm241, 0.0
      %270 = vst.msk [vmem:[%s240 + $0x132] sm:$0x3] %vm241, 0.0
      %271 = vst.msk [vmem:[%s240 + $0x14a] sm:$0x3] %vm241, 0.0
      %272 = vst.msk [vmem:[%s240 + $0x162] sm:$0x3] %vm241, 0.0
      %273 = vst.msk [vmem:[%s240 + $0x17a] sm:$0x3] %vm241, 0.0
      %v274 = vld [vmem:[%s219] sm:$0xff]
      %v275 = vld [vmem:[%s219 + $0x8] sm:$0xff]
      %v276 = vld [vmem:[%s219 + $0x10] sm:$0xff]
      %v277 = vld [vmem:[%s219 + $0x18] sm:$0xff]
      %v278 = vld [vmem:[%s219 + $0x20] sm:$0xff]
      %v279 = vld [vmem:[%s219 + $0x28] sm:$0xff]
      %v280 = vld [vmem:[%s219 + $0x30] sm:$0xff]
      %v281 = vld [vmem:[%s219 + $0x38] sm:$0xff]
      %v282 = vld [vmem:[%s219 + $0x40] sm:$0xff]
      %v283 = vld [vmem:[%s219 + $0x48] sm:$0xff]
      %v284 = vld [vmem:[%s219 + $0x50] sm:$0xff]
      %v285 = vld [vmem:[%s219 + $0x58] sm:$0xff]
      %v286 = vld [vmem:[%s219 + $0x60] sm:$0xff]
      %v287 = vld [vmem:[%s219 + $0x68] sm:$0xff]
      %v288 = vld [vmem:[%s219 + $0x70] sm:$0xff]
      %v289 = vld [vmem:[%s219 + $0x78] sm:$0xff]
      %v290 = vld [vmem:[%s219 + $0x80] sm:$0xff]
      %v291 = vld [vmem:[%s219 + $0x88] sm:$0xff]
      %v292 = vld [vmem:[%s219 + $0x90] sm:$0xff]
      %v293 = vld [vmem:[%s219 + $0x98] sm:$0xff]
      %v294 = vld [vmem:[%s219 + $0xa0] sm:$0xff]
      %v295 = vld [vmem:[%s219 + $0xa8] sm:$0xff]
      %v296 = vld [vmem:[%s219 + $0xb0] sm:$0xff]
      %v297 = vld [vmem:[%s219 + $0xb8] sm:$0xff]
      %v298 = vld [vmem:[%s219 + $0xc0] sm:$0xff]
      %v299 = vld [vmem:[%s219 + $0xc8] sm:$0xff]
      %v300 = vld [vmem:[%s219 + $0xd0] sm:$0xff]
      %v301 = vld [vmem:[%s219 + $0xd8] sm:$0xff]
      %v302 = vld [vmem:[%s219 + $0xe0] sm:$0xff]
      %v303 = vld [vmem:[%s219 + $0xe8] sm:$0xff]
      %v304 = vld [vmem:[%s219 + $0xf0] sm:$0xff]
      %v305 = vld [vmem:[%s219 + $0xf8] sm:$0xff]
      %v306 = vld [vmem:[%s1] sm:$0xf]
      %v307 = vld [vmem:[%s2] sm:$0x1]
      %v309 = vlaneseq
      %v310 = vshrl.u32 %v309, 7
      %v311 = vsub.s32 0, %v310
      %v312 = vrot.slane %v307, %v311
      %vm314 = vcmask 31744
      %v316 = vsel %vm314, %v274, 0
      %v319 = vsel %vm314, %v275, 0
      %v322 = vsel %vm314, %v276, 0
      %v325 = vsel %vm314, %v277, 0
      %v328 = vsel %vm314, %v278, 0
      %v331 = vsel %vm314, %v279, 0
      %v334 = vsel %vm314, %v280, 0
      %v337 = vsel %vm314, %v281, 0
      %v340 = vsel %vm314, %v282, 0
      %v343 = vsel %vm314, %v283, 0
      %v346 = vsel %vm314, %v284, 0
      %v349 = vsel %vm314, %v285, 0
      %v352 = vsel %vm314, %v286, 0
      %v355 = vsel %vm314, %v287, 0
      %v358 = vsel %vm314, %v288, 0
      %v361 = vsel %vm314, %v289, 0
      %v364 = vsel %vm314, %v290, 0
      %v367 = vsel %vm314, %v291, 0
      %v370 = vsel %vm314, %v292, 0
      %v373 = vsel %vm314, %v293, 0
      %v376 = vsel %vm314, %v294, 0
      %v379 = vsel %vm314, %v295, 0
      %v382 = vsel %vm314, %v296, 0
      %v385 = vsel %vm314, %v297, 0
      %v388 = vsel %vm314, %v298, 0
      %v391 = vsel %vm314, %v299, 0
      %v394 = vsel %vm314, %v300, 0
      %v397 = vsel %vm314, %v301, 0
      %v400 = vsel %vm314, %v302, 0
      %v403 = vsel %vm314, %v303, 0
      %v406 = vsel %vm314, %v304, 0
      %v409 = vsel %vm314, %v305, 0
      %vm411 = vcmask 1043456
      %v413 = vsel %vm411, %v306, 0
      %415 = vmatprep.subr.mxu0 0.0
      %416 = vmatpush1.msra.mxu0 %v413
      %417 = vmatprep.subr.mxu0 0.0
      %418 = vmatpush1.msra.mxu0 0.0
      %419 = vmatprep.subr.mxu0 0.0
      %420 = vmatpush1.msra.mxu0 0.0
      %421 = vmatprep.subr.mxu0 0.0
      %422 = vmatpush1.msra.mxu0 0.0
      %423 = vmatprep.subr.mxu0 0.0
      %424 = vmatpush1.msra.mxu0 0.0
      %425 = vmatprep.subr.mxu0 0.0
      %426 = vmatpush1.msra.mxu0 0.0
      %427 = vmatprep.subr.mxu0 0.0
      %428 = vmatpush1.msra.mxu0 0.0
      %429 = vmatprep.subr.mxu0 0.0
      %430 = vmatpush1.msra.mxu0 0.0
      %431 = vmatprep.subr.mxu0 0.0
      %432 = vmatpush1.msra.mxu0 0.0
      %433 = vmatprep.subr.mxu0 0.0
      %434 = vmatpush1.msra.mxu0 0.0
      %435 = vmatprep.subr.mxu0 0.0
      %436 = vmatpush1.msra.mxu0 0.0
      %437 = vmatprep.subr.mxu0 0.0
      %438 = vmatpush1.msra.mxu0 0.0
      %439 = vmatprep.subr.mxu0 0.0
      %440 = vmatpush1.msra.mxu0 0.0
      %441 = vmatprep.subr.mxu0 0.0
      %442 = vmatpush1.msra.mxu0 0.0
      %443 = vmatprep.subr.mxu0 0.0
      %444 = vmatpush1.msra.mxu0 0.0
      %445 = vmatprep.subr.mxu0 0.0
      %446 = vmatpush1.msra.mxu0 0.0
      %447 = vmatprep.subr.mxu0 0.0
      %448 = vmatpush1.msra.mxu0 0.0
      %449 = vmatprep.subr.mxu0 0.0
      %450 = vmatpush1.msra.mxu0 0.0
      %451 = vmatprep.subr.mxu0 0.0
      %452 = vmatpush1.msra.mxu0 0.0
      %453 = vmatprep.subr.mxu0 0.0
      %454 = vmatpush1.msra.mxu0 0.0
      %455 = vmatprep.subr.mxu0 0.0
      %456 = vmatpush1.msra.mxu0 0.0
      %457 = vmatprep.subr.mxu0 0.0
      %458 = vmatpush1.msra.mxu0 0.0
      %459 = vmatprep.subr.mxu0 0.0
      %460 = vmatpush1.msra.mxu0 0.0
      %461 = vmatprep.subr.mxu0 0.0
      %462 = vmatpush1.msra.mxu0 0.0
      %463 = vmatprep.subr.mxu0 0.0
      %464 = vmatpush1.msra.mxu0 0.0
      %465 = vmatprep.subr.mxu0 0.0
      %466 = vmatpush1.msra.mxu0 0.0
      %467 = vmatprep.subr.mxu0 0.0
      %468 = vmatpush1.msra.mxu0 0.0
      %469 = vmatprep.subr.mxu0 0.0
      %470 = vmatpush1.msra.mxu0 0.0
      %471 = vmatprep.subr.mxu0 0.0
      %472 = vmatpush1.msra.mxu0 0.0
      %473 = vmatprep.subr.mxu0 0.0
      %474 = vmatpush1.msra.mxu0 0.0
      %475 = vmatprep.subr.mxu0 0.0
      %476 = vmatpush1.msra.mxu0 0.0
      %477 = vmatprep.subr.mxu0 0.0
      %478 = vmatpush1.msra.mxu0 0.0
      %479 = vmatprep.mubr.f32.mxu0 0.0
      %480 = vmatmul.mubr.f32.gmra.mrb[0].mxu0 %v316
      %v481 = vpop.f32.mrb[0].mxu0
      %v482 = vadd.f32 %v312, %v481
      %v483 = vpop.f32.mrb[0].mxu0
      %484 = vmatprep.mubr.f32.mxu0 0.0
      %485 = vmatmul.mubr.f32.gmra.mrb[0].mxu0 %v319
      %v486 = vpop.f32.mrb[0].mxu0
      %v487 = vadd.f32 %v312, %v486
      %v488 = vpop.f32.mrb[0].mxu0
      %489 = vmatprep.mubr.f32.mxu0 0.0
      %490 = vmatmul.mubr.f32.gmra.mrb[0].mxu0 %v322
      %v491 = vpop.f32.mrb[0].mxu0
      %v492 = vadd.f32 %v312, %v491
      %v493 = vpop.f32.mrb[0].mxu0
      %494 = vmatprep.mubr.f32.mxu0 0.0
      %495 = vmatmul.mubr.f32.gmra.mrb[0].mxu0 %v325
      %v496 = vpop.f32.mrb[0].mxu0
      %v497 = vadd.f32 %v312, %v496
      %v498 = vpop.f32.mrb[0].mxu0
      %499 = vmatprep.mubr.f32.mxu0 0.0
      %500 = vmatmul.mubr.f32.gmra.mrb[0].mxu0 %v328
      %v501 = vpop.f32.mrb[0].mxu0
      %v502 = vadd.f32 %v312, %v501
      %v503 = vpop.f32.mrb[0].mxu0
      %504 = vmatprep.mubr.f32.mxu0 0.0
      %505 = vmatmul.mubr.f32.gmra.mrb[0].mxu0 %v331
      %v506 = vpop.f32.mrb[0].mxu0
      %v507 = vadd.f32 %v312, %v506
      %v508 = vpop.f32.mrb[0].mxu0
      %509 = vmatprep.mubr.f32.mxu0 0.0
      %510 = vmatmul.mubr.f32.gmra.mrb[0].mxu0 %v334
      %v511 = vpop.f32.mrb[0].mxu0
      %v512 = vadd.f32 %v312, %v511
      %v513 = vpop.f32.mrb[0].mxu0
      %514 = vmatprep.mubr.f32.mxu0 0.0
      %515 = vmatmul.mubr.f32.gmra.mrb[0].mxu0 %v337
      %v516 = vpop.f32.mrb[0].mxu0
      %v517 = vadd.f32 %v312, %v516
      %v518 = vpop.f32.mrb[0].mxu0
      %519 = vmatprep.mubr.f32.mxu0 0.0
      %520 = vmatmul.mubr.f32.gmra.mrb[0].mxu0 %v340
      %v521 = vpop.f32.mrb[0].mxu0
      %v522 = vadd.f32 %v312, %v521
      %v523 = vpop.f32.mrb[0].mxu0
      %524 = vmatprep.mubr.f32.mxu0 0.0
      %525 = vmatmul.mubr.f32.gmra.mrb[0].mxu0 %v343
      %v526 = vpop.f32.mrb[0].mxu0
      %v527 = vadd.f32 %v312, %v526
      %v528 = vpop.f32.mrb[0].mxu0
      %529 = vmatprep.mubr.f32.mxu0 0.0
      %530 = vmatmul.mubr.f32.gmra.mrb[0].mxu0 %v346
      %v531 = vpop.f32.mrb[0].mxu0
      %v532 = vadd.f32 %v312, %v531
      %v533 = vpop.f32.mrb[0].mxu0
      %534 = vmatprep.mubr.f32.mxu0 0.0
      %535 = vmatmul.mubr.f32.gmra.mrb[0].mxu0 %v349
      %v536 = vpop.f32.mrb[0].mxu0
      %v537 = vadd.f32 %v312, %v536
      %v538 = vpop.f32.mrb[0].mxu0
      %539 = vmatprep.mubr.f32.mxu0 0.0
      %540 = vmatmul.mubr.f32.gmra.mrb[0].mxu0 %v352
      %v541 = vpop.f32.mrb[0].mxu0
      %v542 = vadd.f32 %v312, %v541
      %v543 = vpop.f32.mrb[0].mxu0
      %544 = vmatprep.mubr.f32.mxu0 0.0
      %545 = vmatmul.mubr.f32.gmra.mrb[0].mxu0 %v355
      %v546 = vpop.f32.mrb[0].mxu0
      %v547 = vadd.f32 %v312, %v546
      %v548 = vpop.f32.mrb[0].mxu0
      %549 = vmatprep.mubr.f32.mxu0 0.0
      %550 = vmatmul.mubr.f32.gmra.mrb[0].mxu0 %v358
      %v551 = vpop.f32.mrb[0].mxu0
      %v552 = vadd.f32 %v312, %v551
      %v553 = vpop.f32.mrb[0].mxu0
      %554 = vmatprep.mubr.f32.mxu0 0.0
      %555 = vmatmul.mubr.f32.gmra.mrb[0].mxu0 %v361
      %v556 = vpop.f32.mrb[0].mxu0
      %v557 = vadd.f32 %v312, %v556
      %v558 = vpop.f32.mrb[0].mxu0
      %559 = vmatprep.mubr.f32.mxu0 0.0
      %560 = vmatmul.mubr.f32.gmra.mrb[0].mxu0 %v364
      %v561 = vpop.f32.mrb[0].mxu0
      %v562 = vadd.f32 %v312, %v561
      %v563 = vpop.f32.mrb[0].mxu0
      %564 = vmatprep.mubr.f32.mxu0 0.0
      %565 = vmatmul.mubr.f32.gmra.mrb[0].mxu0 %v367
      %v566 = vpop.f32.mrb[0].mxu0
      %v567 = vadd.f32 %v312, %v566
      %v568 = vpop.f32.mrb[0].mxu0
      %569 = vmatprep.mubr.f32.mxu0 0.0
      %570 = vmatmul.mubr.f32.gmra.mrb[0].mxu0 %v370
      %v571 = vpop.f32.mrb[0].mxu0
      %v572 = vadd.f32 %v312, %v571
      %v573 = vpop.f32.mrb[0].mxu0
      %574 = vmatprep.mubr.f32.mxu0 0.0
      %575 = vmatmul.mubr.f32.gmra.mrb[0].mxu0 %v373
      %v576 = vpop.f32.mrb[0].mxu0
      %v577 = vadd.f32 %v312, %v576
      %v578 = vpop.f32.mrb[0].mxu0
      %579 = vmatprep.mubr.f32.mxu0 0.0
      %580 = vmatmul.mubr.f32.gmra.mrb[0].mxu0 %v376
      %v581 = vpop.f32.mrb[0].mxu0
      %v582 = vadd.f32 %v312, %v581
      %v583 = vpop.f32.mrb[0].mxu0
      %584 = vmatprep.mubr.f32.mxu0 0.0
      %585 = vmatmul.mubr.f32.gmra.mrb[0].mxu0 %v379
      %v586 = vpop.f32.mrb[0].mxu0
      %v587 = vadd.f32 %v312, %v586
      %v588 = vpop.f32.mrb[0].mxu0
      %589 = vmatprep.mubr.f32.mxu0 0.0
      %590 = vmatmul.mubr.f32.gmra.mrb[0].mxu0 %v382
      %v591 = vpop.f32.mrb[0].mxu0
      %v592 = vadd.f32 %v312, %v591
      %v593 = vpop.f32.mrb[0].mxu0
      %594 = vmatprep.mubr.f32.mxu0 0.0
      %595 = vmatmul.mubr.f32.gmra.mrb[0].mxu0 %v385
      %v596 = vpop.f32.mrb[0].mxu0
      %v597 = vadd.f32 %v312, %v596
      %v598 = vpop.f32.mrb[0].mxu0
      %599 = vmatprep.mubr.f32.mxu0 0.0
      %600 = vmatmul.mubr.f32.gmra.mrb[0].mxu0 %v388
      %v601 = vpop.f32.mrb[0].mxu0
      %v602 = vadd.f32 %v312, %v601
      %v603 = vpop.f32.mrb[0].mxu0
      %604 = vmatprep.mubr.f32.mxu0 0.0
      %605 = vmatmul.mubr.f32.gmra.mrb[0].mxu0 %v391
      %v606 = vpop.f32.mrb[0].mxu0
      %v607 = vadd.f32 %v312, %v606
      %v608 = vpop.f32.mrb[0].mxu0
      %609 = vmatprep.mubr.f32.mxu0 0.0
      %610 = vmatmul.mubr.f32.gmra.mrb[0].mxu0 %v394
      %v611 = vpop.f32.mrb[0].mxu0
      %v612 = vadd.f32 %v312, %v611
      %v613 = vpop.f32.mrb[0].mxu0
      %614 = vmatprep.mubr.f32.mxu0 0.0
      %615 = vmatmul.mubr.f32.gmra.mrb[0].mxu0 %v397
      %v616 = vpop.f32.mrb[0].mxu0
      %v617 = vadd.f32 %v312, %v616
      %v618 = vpop.f32.mrb[0].mxu0
      %619 = vmatprep.mubr.f32.mxu0 0.0
      %620 = vmatmul.mubr.f32.gmra.mrb[0].mxu0 %v400
      %v621 = vpop.f32.mrb[0].mxu0
      %v622 = vadd.f32 %v312, %v621
      %v623 = vpop.f32.mrb[0].mxu0
      %624 = vmatprep.mubr.f32.mxu0 0.0
      %625 = vmatmul.mubr.f32.gmra.mrb[0].mxu0 %v403
      %v626 = vpop.f32.mrb[0].mxu0
      %v627 = vadd.f32 %v312, %v626
      %v628 = vpop.f32.mrb[0].mxu0
      %629 = vmatprep.mubr.f32.mxu0 0.0
      %630 = vmatmul.mubr.f32.gmra.mrb[0].mxu0 %v406
      %v631 = vpop.f32.mrb[0].mxu0
      %v632 = vadd.f32 %v312, %v631
      %v633 = vpop.f32.mrb[0].mxu0
      %634 = vmatprep.mubr.f32.mxu0 0.0
      %635 = vmatmul.mubr.f32.gmra.mrb[0].mxu0 %v409
      %v636 = vpop.f32.mrb[0].mxu0
      %v637 = vadd.f32 %v312, %v636
      %v638 = vpop.f32.mrb[0].mxu0
      %639 = vdwg.mxu0
      %v640 = vmax.f32 %v482, 0.0
      %v641 = vmax.f32 %v487, 0.0
      %v642 = vmax.f32 %v492, 0.0
      %v643 = vmax.f32 %v497, 0.0
      %v644 = vmax.f32 %v502, 0.0
      %v645 = vmax.f32 %v507, 0.0
      %v646 = vmax.f32 %v512, 0.0
      %v647 = vmax.f32 %v517, 0.0
      %v648 = vmax.f32 %v522, 0.0
      %v649 = vmax.f32 %v527, 0.0
      %v650 = vmax.f32 %v532, 0.0
      %v651 = vmax.f32 %v537, 0.0
      %v652 = vmax.f32 %v542, 0.0
      %v653 = vmax.f32 %v547, 0.0
      %v654 = vmax.f32 %v552, 0.0
      %v655 = vmax.f32 %v557, 0.0
      %v656 = vmax.f32 %v562, 0.0
      %v657 = vmax.f32 %v567, 0.0
      %v658 = vmax.f32 %v572, 0.0
      %v659 = vmax.f32 %v577, 0.0
      %v660 = vmax.f32 %v582, 0.0
      %v661 = vmax.f32 %v587, 0.0
      %v662 = vmax.f32 %v592, 0.0
      %v663 = vmax.f32 %v597, 0.0
      %v664 = vmax.f32 %v602, 0.0
      %v665 = vmax.f32 %v607, 0.0
      %v666 = vmax.f32 %v612, 0.0
      %v667 = vmax.f32 %v617, 0.0
      %v668 = vmax.f32 %v622, 0.0
      %v669 = vmax.f32 %v627, 0.0
      %v670 = vmax.f32 %v632, 0.0
      %v671 = vmax.f32 %v637, 0.0
      %v672 = vld [vmem:[%s3] sm:$0x3]
      %673 = vst.msk [vmem:[%s240 + $0x2] sm:$0xff] %vm225, %v640
      %674 = vst.msk [vmem:[%s240 + $0xa] sm:$0xff] %vm225, %v641
      %675 = vst.msk [vmem:[%s240 + $0x1a] sm:$0xff] %vm225, %v642
      %676 = vst.msk [vmem:[%s240 + $0x22] sm:$0xff] %vm225, %v643
      %677 = vst.msk [vmem:[%s240 + $0x32] sm:$0xff] %vm225, %v644
      %678 = vst.msk [vmem:[%s240 + $0x3a] sm:$0xff] %vm225, %v645
      %679 = vst.msk [vmem:[%s240 + $0x4a] sm:$0xff] %vm225, %v646
      %680 = vst.msk [vmem:[%s240 + $0x52] sm:$0xff] %vm225, %v647
      %681 = vst.msk [vmem:[%s240 + $0x62] sm:$0xff] %vm225, %v648
      %682 = vst.msk [vmem:[%s240 + $0x6a] sm:$0xff] %vm225, %v649
      %683 = vst.msk [vmem:[%s240 + $0x7a] sm:$0xff] %vm225, %v650
      %684 = vst.msk [vmem:[%s240 + $0x82] sm:$0xff] %vm225, %v651
      %685 = vst.msk [vmem:[%s240 + $0x92] sm:$0xff] %vm225, %v652
      %686 = vst.msk [vmem:[%s240 + $0x9a] sm:$0xff] %vm225, %v653
      %687 = vst.msk [vmem:[%s240 + $0xaa] sm:$0xff] %vm225, %v654
      %688 = vst.msk [vmem:[%s240 + $0xb2] sm:$0xff] %vm225, %v655
      %689 = vst.msk [vmem:[%s240 + $0xc2] sm:$0xff] %vm225, %v656
      %690 = vst.msk [vmem:[%s240 + $0xca] sm:$0xff] %vm225, %v657
      %691 = vst.msk [vmem:[%s240 + $0xda] sm:$0xff] %vm225, %v658
      %692 = vst.msk [vmem:[%s240 + $0xe2] sm:$0xff] %vm225, %v659
      %693 = vst.msk [vmem:[%s240 + $0xf2] sm:$0xff] %vm225, %v660
      %694 = vst.msk [vmem:[%s240 + $0xfa] sm:$0xff] %vm225, %v661
      %695 = vst.msk [vmem:[%s240 + $0x10a] sm:$0xff] %vm225, %v662
      %696 = vst.msk [vmem:[%s240 + $0x112] sm:$0xff] %vm225, %v663
      %697 = vst.msk [vmem:[%s240 + $0x122] sm:$0xff] %vm225, %v664
      %698 = vst.msk [vmem:[%s240 + $0x12a] sm:$0xff] %vm225, %v665
      %699 = vst.msk [vmem:[%s240 + $0x13a] sm:$0xff] %vm225, %v666
      %700 = vst.msk [vmem:[%s240 + $0x142] sm:$0xff] %vm225, %v667
      %701 = vst.msk [vmem:[%s240 + $0x152] sm:$0xff] %vm225, %v668
      %702 = vst.msk [vmem:[%s240 + $0x15a] sm:$0xff] %vm225, %v669
      %703 = vst.msk [vmem:[%s240 + $0x16a] sm:$0xff] %vm225, %v670
      %704 = vst.msk [vmem:[%s240 + $0x172] sm:$0xff] %vm225, %v671
      %v705 = vld [vmem:[%s240] sm:$0xff]
      %v706 = vld [vmem:[%s240 + $0x8] sm:$0xff]
      %v707 = vld [vmem:[%s240 + $0x18] sm:$0xff]
      %v708 = vld [vmem:[%s240 + $0x20] sm:$0xff]
      %v709 = vld [vmem:[%s240 + $0x30] sm:$0xff]
      %v710 = vld [vmem:[%s240 + $0x38] sm:$0xff]
      %v711 = vld [vmem:[%s240 + $0x48] sm:$0xff]
      %v712 = vld [vmem:[%s240 + $0x50] sm:$0xff]
      %v713 = vld [vmem:[%s240 + $0x60] sm:$0xff]
      %v714 = vld [vmem:[%s240 + $0x68] sm:$0xff]
      %v715 = vld [vmem:[%s240 + $0x78] sm:$0xff]
      %v716 = vld [vmem:[%s240 + $0x80] sm:$0xff]
      %v717 = vld [vmem:[%s240 + $0x90] sm:$0xff]
      %v718 = vld [vmem:[%s240 + $0x98] sm:$0xff]
      %v719 = vld [vmem:[%s240 + $0xa8] sm:$0xff]
      %v720 = vld [vmem:[%s240 + $0xb0] sm:$0xff]
      %v721 = vld [vmem:[%s240 + $0xc0] sm:$0xff]
      %v722 = vld [vmem:[%s240 + $0xc8] sm:$0xff]
      %v723 = vld [vmem:[%s240 + $0xd8] sm:$0xff]
      %v724 = vld [vmem:[%s240 + $0xe0] sm:$0xff]
      %v725 = vld [vmem:[%s240 + $0xf0] sm:$0xff]
      %v726 = vld [vmem:[%s240 + $0xf8] sm:$0xff]
      %v727 = vld [vmem:[%s240 + $0x108] sm:$0xff]
      %v728 = vld [vmem:[%s240 + $0x110] sm:$0xff]
      %v729 = vld [vmem:[%s240 + $0x120] sm:$0xff]
      %v730 = vld [vmem:[%s240 + $0x128] sm:$0xff]
      %v731 = vld [vmem:[%s240 + $0x138] sm:$0xff]
      %v732 = vld [vmem:[%s240 + $0x140] sm:$0xff]
      %v733 = vld [vmem:[%s240 + $0x150] sm:$0xff]
      %v734 = vld [vmem:[%s240 + $0x158] sm:$0xff]
      %v735 = vld [vmem:[%s240 + $0x168] sm:$0xff]
      %v736 = vld [vmem:[%s240 + $0x170] sm:$0xff]
      %v737 = vmax.f32 %v640, %v705
      %v738 = vmax.f32 %v641, %v706
      %v739 = vmax.f32 %v642, %v707
      %v740 = vmax.f32 %v643, %v708
      %v741 = vmax.f32 %v644, %v709
      %v742 = vmax.f32 %v645, %v710
      %v743 = vmax.f32 %v646, %v711
      %v744 = vmax.f32 %v647, %v712
      %v745 = vmax.f32 %v648, %v713
      %v746 = vmax.f32 %v649, %v714
      %v747 = vmax.f32 %v650, %v715
      %v748 = vmax.f32 %v651, %v716
      %v749 = vmax.f32 %v652, %v717
      %v750 = vmax.f32 %v653, %v718
      %v751 = vmax.f32 %v654, %v719
      %v752 = vmax.f32 %v655, %v720
      %v753 = vmax.f32 %v656, %v721
      %v754 = vmax.f32 %v657, %v722
      %v755 = vmax.f32 %v658, %v723
      %v756 = vmax.f32 %v659, %v724
      %v757 = vmax.f32 %v660, %v725
      %v758 = vmax.f32 %v661, %v726
      %v759 = vmax.f32 %v662, %v727
      %v760 = vmax.f32 %v663, %v728
      %v761 = vmax.f32 %v664, %v729
      %v762 = vmax.f32 %v665, %v730
      %v763 = vmax.f32 %v666, %v731
      %v764 = vmax.f32 %v667, %v732
      %v765 = vmax.f32 %v668, %v733
      %v766 = vmax.f32 %v669, %v734
      %v767 = vmax.f32 %v670, %v735
      %v768 = vmax.f32 %v671, %v736
      %v769 = vld [vmem:[%s240 + $0x1] sm:$0xff]
      %v770 = vld [vmem:[%s240 + $0x9] sm:$0xff]
      %v771 = vld [vmem:[%s240 + $0x19] sm:$0xff]
      %v772 = vld [vmem:[%s240 + $0x21] sm:$0xff]
      %v773 = vld [vmem:[%s240 + $0x31] sm:$0xff]
      %v774 = vld [vmem:[%s240 + $0x39] sm:$0xff]
      %v775 = vld [vmem:[%s240 + $0x49] sm:$0xff]
      %v776 = vld [vmem:[%s240 + $0x51] sm:$0xff]
      %v777 = vld [vmem:[%s240 + $0x61] sm:$0xff]
      %v778 = vld [vmem:[%s240 + $0x69] sm:$0xff]
      %v779 = vld [vmem:[%s240 + $0x79] sm:$0xff]
      %v780 = vld [vmem:[%s240 + $0x81] sm:$0xff]
      %v781 = vld [vmem:[%s240 + $0x91] sm:$0xff]
      %v782 = vld [vmem:[%s240 + $0x99] sm:$0xff]
      %v783 = vld [vmem:[%s240 + $0xa9] sm:$0xff]
      %v784 = vld [vmem:[%s240 + $0xb1] sm:$0xff]
      %v785 = vld [vmem:[%s240 + $0xc1] sm:$0xff]
      %v786 = vld [vmem:[%s240 + $0xc9] sm:$0xff]
      %v787 = vld [vmem:[%s240 + $0xd9] sm:$0xff]
      %v788 = vld [vmem:[%s240 + $0xe1] sm:$0xff]
      %v789 = vld [vmem:[%s240 + $0xf1] sm:$0xff]
      %v790 = vld [vmem:[%s240 + $0xf9] sm:$0xff]
      %v791 = vld [vmem:[%s240 + $0x109] sm:$0xff]
      %v792 = vld [vmem:[%s240 + $0x111] sm:$0xff]
      %v793 = vld [vmem:[%s240 + $0x121] sm:$0xff]
      %v794 = vld [vmem:[%s240 + $0x129] sm:$0xff]
      %v795 = vld [vmem:[%s240 + $0x139] sm:$0xff]
      %v796 = vld [vmem:[%s240 + $0x141] sm:$0xff]
      %v797 = vld [vmem:[%s240 + $0x151] sm:$0xff]
      %v798 = vld [vmem:[%s240 + $0x159] sm:$0xff]
      %v799 = vld [vmem:[%s240 + $0x169] sm:$0xff]
      %v800 = vld [vmem:[%s240 + $0x171] sm:$0xff]
      %v801 = vmax.f32 %v737, %v769
      %v802 = vmax.f32 %v738, %v770
      %v803 = vmax.f32 %v739, %v771
      %v804 = vmax.f32 %v740, %v772
      %v805 = vmax.f32 %v741, %v773
      %v806 = vmax.f32 %v742, %v774
      %v807 = vmax.f32 %v743, %v775
      %v808 = vmax.f32 %v744, %v776
      %v809 = vmax.f32 %v745, %v777
      %v810 = vmax.f32 %v746, %v778
      %v811 = vmax.f32 %v747, %v779
      %v812 = vmax.f32 %v748, %v780
      %v813 = vmax.f32 %v749, %v781
      %v814 = vmax.f32 %v750, %v782
      %v815 = vmax.f32 %v751, %v783
      %v816 = vmax.f32 %v752, %v784
      %v817 = vmax.f32 %v753, %v785
      %v818 = vmax.f32 %v754, %v786
      %v819 = vmax.f32 %v755, %v787
      %v820 = vmax.f32 %v756, %v788
      %v821 = vmax.f32 %v757, %v789
      %v822 = vmax.f32 %v758, %v790
      %v823 = vmax.f32 %v759, %v791
      %v824 = vmax.f32 %v760, %v792
      %v825 = vmax.f32 %v761, %v793
      %v826 = vmax.f32 %v762, %v794
      %v827 = vmax.f32 %v763, %v795
      %v828 = vmax.f32 %v764, %v796
      %v829 = vmax.f32 %v765, %v797
      %v830 = vmax.f32 %v766, %v798
      %v831 = vmax.f32 %v767, %v799
      %v832 = vmax.f32 %v768, %v800
      %v833 = vld [vmem:[%s240 + $0x3] sm:$0xff]
      %v834 = vld [vmem:[%s240 + $0xb] sm:$0xff]
      %v835 = vld [vmem:[%s240 + $0x1b] sm:$0xff]
      %v836 = vld [vmem:[%s240 + $0x23] sm:$0xff]
      %v837 = vld [vmem:[%s240 + $0x33] sm:$0xff]
      %v838 = vld [vmem:[%s240 + $0x3b] sm:$0xff]
      %v839 = vld [vmem:[%s240 + $0x4b] sm:$0xff]
      %v840 = vld [vmem:[%s240 + $0x53] sm:$0xff]
      %v841 = vld [vmem:[%s240 + $0x63] sm:$0xff]
      %v842 = vld [vmem:[%s240 + $0x6b] sm:$0xff]
      %v843 = vld [vmem:[%s240 + $0x7b] sm:$0xff]
      %v844 = vld [vmem:[%s240 + $0x83] sm:$0xff]
      %v845 = vld [vmem:[%s240 + $0x93] sm:$0xff]
      %v846 = vld [vmem:[%s240 + $0x9b] sm:$0xff]
      %v847 = vld [vmem:[%s240 + $0xab] sm:$0xff]
      %v848 = vld [vmem:[%s240 + $0xb3] sm:$0xff]
      %v849 = vld [vmem:[%s240 + $0xc3] sm:$0xff]
      %v850 = vld [vmem:[%s240 + $0xcb] sm:$0xff]
      %v851 = vld [vmem:[%s240 + $0xdb] sm:$0xff]
      %v852 = vld [vmem:[%s240 + $0xe3] sm:$0xff]
      %v853 = vld [vmem:[%s240 + $0xf3] sm:$0xff]
      %v854 = vld [vmem:[%s240 + $0xfb] sm:$0xff]
      %v855 = vld [vmem:[%s240 + $0x10b] sm:$0xff]
      %v856 = vld [vmem:[%s240 + $0x113] sm:$0xff]
      %v857 = vld [vmem:[%s240 + $0x123] sm:$0xff]
      %v858 = vld [vmem:[%s240 + $0x12b] sm:$0xff]
      %v859 = vld [vmem:[%s240 + $0x13b] sm:$0xff]
      %v860 = vld [vmem:[%s240 + $0x143] sm:$0xff]
      %v861 = vld [vmem:[%s240 + $0x153] sm:$0xff]
      %v862 = vld [vmem:[%s240 + $0x15b] sm:$0xff]
      %v863 = vld [vmem:[%s240 + $0x16b] sm:$0xff]
      %v864 = vld [vmem:[%s240 + $0x173] sm:$0xff]
      %v865 = vmax.f32 %v801, %v833
      %v866 = vmax.f32 %v802, %v834
      %v867 = vmax.f32 %v803, %v835
      %v868 = vmax.f32 %v804, %v836
      %v869 = vmax.f32 %v805, %v837
      %v870 = vmax.f32 %v806, %v838
      %v871 = vmax.f32 %v807, %v839
      %v872 = vmax.f32 %v808, %v840
      %v873 = vmax.f32 %v809, %v841
      %v874 = vmax.f32 %v810, %v842
      %v875 = vmax.f32 %v811, %v843
      %v876 = vmax.f32 %v812, %v844
      %v877 = vmax.f32 %v813, %v845
      %v878 = vmax.f32 %v814, %v846
      %v879 = vmax.f32 %v815, %v847
      %v880 = vmax.f32 %v816, %v848
      %v881 = vmax.f32 %v817, %v849
      %v882 = vmax.f32 %v818, %v850
      %v883 = vmax.f32 %v819, %v851
      %v884 = vmax.f32 %v820, %v852
      %v885 = vmax.f32 %v821, %v853
      %v886 = vmax.f32 %v822, %v854
      %v887 = vmax.f32 %v823, %v855
      %v888 = vmax.f32 %v824, %v856
      %v889 = vmax.f32 %v825, %v857
      %v890 = vmax.f32 %v826, %v858
      %v891 = vmax.f32 %v827, %v859
      %v892 = vmax.f32 %v828, %v860
      %v893 = vmax.f32 %v829, %v861
      %v894 = vmax.f32 %v830, %v862
      %v895 = vmax.f32 %v831, %v863
      %v896 = vmax.f32 %v832, %v864
      %v897 = vld [vmem:[%s240 + $0x4] sm:$0xff]
      %v898 = vld [vmem:[%s240 + $0xc] sm:$0xff]
      %v899 = vld [vmem:[%s240 + $0x1c] sm:$0xff]
      %v900 = vld [vmem:[%s240 + $0x24] sm:$0xff]
      %v901 = vld [vmem:[%s240 + $0x34] sm:$0xff]
      %v902 = vld [vmem:[%s240 + $0x3c] sm:$0xff]
      %v903 = vld [vmem:[%s240 + $0x4c] sm:$0xff]
      %v904 = vld [vmem:[%s240 + $0x54] sm:$0xff]
      %v905 = vld [vmem:[%s240 + $0x64] sm:$0xff]
      %v906 = vld [vmem:[%s240 + $0x6c] sm:$0xff]
      %v907 = vld [vmem:[%s240 + $0x7c] sm:$0xff]
      %v908 = vld [vmem:[%s240 + $0x84] sm:$0xff]
      %v909 = vld [vmem:[%s240 + $0x94] sm:$0xff]
      %v910 = vld [vmem:[%s240 + $0x9c] sm:$0xff]
      %v911 = vld [vmem:[%s240 + $0xac] sm:$0xff]
      %v912 = vld [vmem:[%s240 + $0xb4] sm:$0xff]
      %v913 = vld [vmem:[%s240 + $0xc4] sm:$0xff]
      %v914 = vld [vmem:[%s240 + $0xcc] sm:$0xff]
      %v915 = vld [vmem:[%s240 + $0xdc] sm:$0xff]
      %v916 = vld [vmem:[%s240 + $0xe4] sm:$0xff]
      %v917 = vld [vmem:[%s240 + $0xf4] sm:$0xff]
      %v918 = vld [vmem:[%s240 + $0xfc] sm:$0xff]
      %v919 = vld [vmem:[%s240 + $0x10c] sm:$0xff]
      %v920 = vld [vmem:[%s240 + $0x114] sm:$0xff]
      %v921 = vld [vmem:[%s240 + $0x124] sm:$0xff]
      %v922 = vld [vmem:[%s240 + $0x12c] sm:$0xff]
      %v923 = vld [vmem:[%s240 + $0x13c] sm:$0xff]
      %v924 = vld [vmem:[%s240 + $0x144] sm:$0xff]
      %v925 = vld [vmem:[%s240 + $0x154] sm:$0xff]
      %v926 = vld [vmem:[%s240 + $0x15c] sm:$0xff]
      %v927 = vld [vmem:[%s240 + $0x16c] sm:$0xff]
      %v928 = vld [vmem:[%s240 + $0x174] sm:$0xff]
      %v929 = vmax.f32 %v865, %v897
      %v930 = vmax.f32 %v866, %v898
      %v931 = vmax.f32 %v867, %v899
      %v932 = vmax.f32 %v868, %v900
      %v933 = vmax.f32 %v869, %v901
      %v934 = vmax.f32 %v870, %v902
      %v935 = vmax.f32 %v871, %v903
      %v936 = vmax.f32 %v872, %v904
      %v937 = vmax.f32 %v873, %v905
      %v938 = vmax.f32 %v874, %v906
      %v939 = vmax.f32 %v875, %v907
      %v940 = vmax.f32 %v876, %v908
      %v941 = vmax.f32 %v877, %v909
      %v942 = vmax.f32 %v878, %v910
      %v943 = vmax.f32 %v879, %v911
      %v944 = vmax.f32 %v880, %v912
      %v945 = vmax.f32 %v881, %v913
      %v946 = vmax.f32 %v882, %v914
      %v947 = vmax.f32 %v883, %v915
      %v948 = vmax.f32 %v884, %v916
      %v949 = vmax.f32 %v885, %v917
      %v950 = vmax.f32 %v886, %v918
      %v951 = vmax.f32 %v887, %v919
      %v952 = vmax.f32 %v888, %v920
      %v953 = vmax.f32 %v889, %v921
      %v954 = vmax.f32 %v890, %v922
      %v955 = vmax.f32 %v891, %v923
      %v956 = vmax.f32 %v892, %v924
      %v957 = vmax.f32 %v893, %v925
      %v958 = vmax.f32 %v894, %v926
      %v959 = vmax.f32 %v895, %v927
      %v960 = vmax.f32 %v896, %v928
      %961 = vst.msk [vmem:[%s240 + $0x2] sm:$0xff] %vm225, %v929
      %962 = vst.msk [vmem:[%s240 + $0xa] sm:$0xff] %vm225, %v930
      %963 = vst.msk [vmem:[%s240 + $0x1a] sm:$0xff] %vm225, %v931
      %964 = vst.msk [vmem:[%s240 + $0x22] sm:$0xff] %vm225, %v932
      %965 = vst.msk [vmem:[%s240 + $0x32] sm:$0xff] %vm225, %v933
      %966 = vst.msk [vmem:[%s240 + $0x3a] sm:$0xff] %vm225, %v934
      %967 = vst.msk [vmem:[%s240 + $0x4a] sm:$0xff] %vm225, %v935
      %968 = vst.msk [vmem:[%s240 + $0x52] sm:$0xff] %vm225, %v936
      %969 = vst.msk [vmem:[%s240 + $0x62] sm:$0xff] %vm225, %v937
      %970 = vst.msk [vmem:[%s240 + $0x6a] sm:$0xff] %vm225, %v938
      %971 = vst.msk [vmem:[%s240 + $0x7a] sm:$0xff] %vm225, %v939
      %972 = vst.msk [vmem:[%s240 + $0x82] sm:$0xff] %vm225, %v940
      %973 = vst.msk [vmem:[%s240 + $0x92] sm:$0xff] %vm225, %v941
      %974 = vst.msk [vmem:[%s240 + $0x9a] sm:$0xff] %vm225, %v942
      %975 = vst.msk [vmem:[%s240 + $0xaa] sm:$0xff] %vm225, %v943
      %976 = vst.msk [vmem:[%s240 + $0xb2] sm:$0xff] %vm225, %v944
      %977 = vst.msk [vmem:[%s240 + $0xc2] sm:$0xff] %vm225, %v945
      %978 = vst.msk [vmem:[%s240 + $0xca] sm:$0xff] %vm225, %v946
      %979 = vst.msk [vmem:[%s240 + $0xda] sm:$0xff] %vm225, %v947
      %980 = vst.msk [vmem:[%s240 + $0xe2] sm:$0xff] %vm225, %v948
      %981 = vst.msk [vmem:[%s240 + $0xf2] sm:$0xff] %vm225, %v949
      %982 = vst.msk [vmem:[%s240 + $0xfa] sm:$0xff] %vm225, %v950
      %983 = vst.msk [vmem:[%s240 + $0x10a] sm:$0xff] %vm225, %v951
      %984 = vst.msk [vmem:[%s240 + $0x112] sm:$0xff] %vm225, %v952
      %985 = vst.msk [vmem:[%s240 + $0x122] sm:$0xff] %vm225, %v953
      %986 = vst.msk [vmem:[%s240 + $0x12a] sm:$0xff] %vm225, %v954
      %987 = vst.msk [vmem:[%s240 + $0x13a] sm:$0xff] %vm225, %v955
      %988 = vst.msk [vmem:[%s240 + $0x142] sm:$0xff] %vm225, %v956
      %989 = vst.msk [vmem:[%s240 + $0x152] sm:$0xff] %vm225, %v957
      %990 = vst.msk [vmem:[%s240 + $0x15a] sm:$0xff] %vm225, %v958
      %991 = vst.msk [vmem:[%s240 + $0x16a] sm:$0xff] %vm225, %v959
      %992 = vst.msk [vmem:[%s240 + $0x172] sm:$0xff] %vm225, %v960
      %v993 = vld [vmem:[#allocation2 + $0x2] sm:$0xff]
      %v994 = vld [vmem:[#allocation2 + $0xa] sm:$0xff]
      %v995 = vld [vmem:[#allocation2 + $0x1a] sm:$0xff]
      %v996 = vld [vmem:[#allocation2 + $0x22] sm:$0xff]
      %v997 = vld [vmem:[#allocation2 + $0x32] sm:$0xff]
      %v998 = vld [vmem:[#allocation2 + $0x3a] sm:$0xff]
      %v999 = vld [vmem:[#allocation2 + $0x4a] sm:$0xff]
      %v1000 = vld [vmem:[#allocation2 + $0x52] sm:$0xff]
      %v1001 = vld [vmem:[#allocation2 + $0x62] sm:$0xff]
      %v1002 = vld [vmem:[#allocation2 + $0x6a] sm:$0xff]
      %v1003 = vld [vmem:[#allocation2 + $0x7a] sm:$0xff]
      %v1004 = vld [vmem:[#allocation2 + $0x82] sm:$0xff]
      %v1005 = vld [vmem:[#allocation2 + $0x92] sm:$0xff]
      %v1006 = vld [vmem:[#allocation2 + $0x9a] sm:$0xff]
      %v1007 = vld [vmem:[#allocation2 + $0xaa] sm:$0xff]
      %v1008 = vld [vmem:[#allocation2 + $0xb2] sm:$0xff]
      %v1009 = vld [vmem:[#allocation2 + $0xc2] sm:$0xff]
      %v1010 = vld [vmem:[#allocation2 + $0xca] sm:$0xff]
      %v1011 = vld [vmem:[#allocation2 + $0xda] sm:$0xff]
      %v1012 = vld [vmem:[#allocation2 + $0xe2] sm:$0xff]
      %v1013 = vld [vmem:[#allocation2 + $0xf2] sm:$0xff]
      %v1014 = vld [vmem:[#allocation2 + $0xfa] sm:$0xff]
      %v1015 = vld [vmem:[#allocation2 + $0x10a] sm:$0xff]
      %v1016 = vld [vmem:[#allocation2 + $0x112] sm:$0xff]
      %v1017 = vld [vmem:[#allocation2 + $0x122] sm:$0xff]
      %v1018 = vld [vmem:[#allocation2 + $0x12a] sm:$0xff]
      %v1019 = vld [vmem:[#allocation2 + $0x13a] sm:$0xff]
      %v1020 = vld [vmem:[#allocation2 + $0x142] sm:$0xff]
      %v1021 = vld [vmem:[#allocation2 + $0x152] sm:$0xff]
      %v1022 = vld [vmem:[#allocation2 + $0x15a] sm:$0xff]
      %v1023 = vld [vmem:[#allocation2 + $0x16a] sm:$0xff]
      %v1024 = vld [vmem:[#allocation2 + $0x172] sm:$0xff]
      %v1025 = vmax.f32 %v929, %v993
      %v1026 = vmax.f32 %v930, %v994
      %v1027 = vmax.f32 %v931, %v995
      %v1028 = vmax.f32 %v932, %v996
      %v1029 = vmax.f32 %v933, %v997
      %v1030 = vmax.f32 %v934, %v998
      %v1031 = vmax.f32 %v935, %v999
      %v1032 = vmax.f32 %v936, %v1000
      %v1033 = vmax.f32 %v937, %v1001
      %v1034 = vmax.f32 %v938, %v1002
      %v1035 = vmax.f32 %v939, %v1003
      %v1036 = vmax.f32 %v940, %v1004
      %v1037 = vmax.f32 %v941, %v1005
      %v1038 = vmax.f32 %v942, %v1006
      %v1039 = vmax.f32 %v943, %v1007
      %v1040 = vmax.f32 %v944, %v1008
      %v1041 = vmax.f32 %v945, %v1009
      %v1042 = vmax.f32 %v946, %v1010
      %v1043 = vmax.f32 %v947, %v1011
      %v1044 = vmax.f32 %v948, %v1012
      %v1045 = vmax.f32 %v949, %v1013
      %v1046 = vmax.f32 %v950, %v1014
      %v1047 = vmax.f32 %v951, %v1015
      %v1048 = vmax.f32 %v952, %v1016
      %v1049 = vmax.f32 %v953, %v1017
      %v1050 = vmax.f32 %v954, %v1018
      %v1051 = vmax.f32 %v955, %v1019
      %v1052 = vmax.f32 %v956, %v1020
      %v1053 = vmax.f32 %v957, %v1021
      %v1054 = vmax.f32 %v958, %v1022
      %v1055 = vmax.f32 %v959, %v1023
      %v1056 = vmax.f32 %v960, %v1024
      %s1057 = scalar_lea.vmem [#allocation2], 24
      %v1058 = vld [vmem:[%s1057 + $0x2] sm:$0xff]
      %v1059 = vld [vmem:[%s1057 + $0xa] sm:$0xff]
      %v1060 = vld [vmem:[%s1057 + $0x1a] sm:$0xff]
      %v1061 = vld [vmem:[%s1057 + $0x22] sm:$0xff]
      %v1062 = vld [vmem:[%s1057 + $0x32] sm:$0xff]
      %v1063 = vld [vmem:[%s1057 + $0x3a] sm:$0xff]
      %v1064 = vld [vmem:[%s1057 + $0x4a] sm:$0xff]
      %v1065 = vld [vmem:[%s1057 + $0x52] sm:$0xff]
      %v1066 = vld [vmem:[%s1057 + $0x62] sm:$0xff]
      %v1067 = vld [vmem:[%s1057 + $0x6a] sm:$0xff]
      %v1068 = vld [vmem:[%s1057 + $0x7a] sm:$0xff]
      %v1069 = vld [vmem:[%s1057 + $0x82] sm:$0xff]
      %v1070 = vld [vmem:[%s1057 + $0x92] sm:$0xff]
      %v1071 = vld [vmem:[%s1057 + $0x9a] sm:$0xff]
      %v1072 = vld [vmem:[%s1057 + $0xaa] sm:$0xff]
      %v1073 = vld [vmem:[%s1057 + $0xb2] sm:$0xff]
      %v1074 = vld [vmem:[%s1057 + $0xc2] sm:$0xff]
      %v1075 = vld [vmem:[%s1057 + $0xca] sm:$0xff]
      %v1076 = vld [vmem:[%s1057 + $0xda] sm:$0xff]
      %v1077 = vld [vmem:[%s1057 + $0xe2] sm:$0xff]
      %v1078 = vld [vmem:[%s1057 + $0xf2] sm:$0xff]
      %v1079 = vld [vmem:[%s1057 + $0xfa] sm:$0xff]
      %v1080 = vld [vmem:[%s1057 + $0x10a] sm:$0xff]
      %v1081 = vld [vmem:[%s1057 + $0x112] sm:$0xff]
      %v1082 = vld [vmem:[%s1057 + $0x122] sm:$0xff]
      %v1083 = vld [vmem:[%s1057 + $0x12a] sm:$0xff]
      %v1084 = vld [vmem:[%s1057 + $0x13a] sm:$0xff]
      %v1085 = vld [vmem:[%s1057 + $0x142] sm:$0xff]
      %v1086 = vld [vmem:[%s1057 + $0x152] sm:$0xff]
      %v1087 = vld [vmem:[%s1057 + $0x15a] sm:$0xff]
      %v1088 = vld [vmem:[%s1057 + $0x16a] sm:$0xff]
      %v1089 = vld [vmem:[%s1057 + $0x172] sm:$0xff]
      %v1090 = vmax.f32 %v1025, %v1058
      %v1091 = vmax.f32 %v1026, %v1059
      %v1092 = vmax.f32 %v1027, %v1060
      %v1093 = vmax.f32 %v1028, %v1061
      %v1094 = vmax.f32 %v1029, %v1062
      %v1095 = vmax.f32 %v1030, %v1063
      %v1096 = vmax.f32 %v1031, %v1064
      %v1097 = vmax.f32 %v1032, %v1065
      %v1098 = vmax.f32 %v1033, %v1066
      %v1099 = vmax.f32 %v1034, %v1067
      %v1100 = vmax.f32 %v1035, %v1068
      %v1101 = vmax.f32 %v1036, %v1069
      %v1102 = vmax.f32 %v1037, %v1070
      %v1103 = vmax.f32 %v1038, %v1071
      %v1104 = vmax.f32 %v1039, %v1072
      %v1105 = vmax.f32 %v1040, %v1073
      %v1106 = vmax.f32 %v1041, %v1074
      %v1107 = vmax.f32 %v1042, %v1075
      %v1108 = vmax.f32 %v1043, %v1076
      %v1109 = vmax.f32 %v1044, %v1077
      %v1110 = vmax.f32 %v1045, %v1078
      %v1111 = vmax.f32 %v1046, %v1079
      %v1112 = vmax.f32 %v1047, %v1080
      %v1113 = vmax.f32 %v1048, %v1081
      %v1114 = vmax.f32 %v1049, %v1082
      %v1115 = vmax.f32 %v1050, %v1083
      %v1116 = vmax.f32 %v1051, %v1084
      %v1117 = vmax.f32 %v1052, %v1085
      %v1118 = vmax.f32 %v1053, %v1086
      %v1119 = vmax.f32 %v1054, %v1087
      %v1120 = vmax.f32 %v1055, %v1088
      %v1121 = vmax.f32 %v1056, %v1089
      %s1122 = scalar_lea.vmem [#allocation2], 72
      %v1123 = vld [vmem:[%s1122 + $0x2] sm:$0xff]
      %v1124 = vld [vmem:[%s1122 + $0xa] sm:$0xff]
      %v1125 = vld [vmem:[%s1122 + $0x1a] sm:$0xff]
      %v1126 = vld [vmem:[%s1122 + $0x22] sm:$0xff]
      %v1127 = vld [vmem:[%s1122 + $0x32] sm:$0xff]
      %v1128 = vld [vmem:[%s1122 + $0x3a] sm:$0xff]
      %v1129 = vld [vmem:[%s1122 + $0x4a] sm:$0xff]
      %v1130 = vld [vmem:[%s1122 + $0x52] sm:$0xff]
      %v1131 = vld [vmem:[%s1122 + $0x62] sm:$0xff]
      %v1132 = vld [vmem:[%s1122 + $0x6a] sm:$0xff]
      %v1133 = vld [vmem:[%s1122 + $0x7a] sm:$0xff]
      %v1134 = vld [vmem:[%s1122 + $0x82] sm:$0xff]
      %v1135 = vld [vmem:[%s1122 + $0x92] sm:$0xff]
      %v1136 = vld [vmem:[%s1122 + $0x9a] sm:$0xff]
      %v1137 = vld [vmem:[%s1122 + $0xaa] sm:$0xff]
      %v1138 = vld [vmem:[%s1122 + $0xb2] sm:$0xff]
      %v1139 = vld [vmem:[%s1122 + $0xc2] sm:$0xff]
      %v1140 = vld [vmem:[%s1122 + $0xca] sm:$0xff]
      %v1141 = vld [vmem:[%s1122 + $0xda] sm:$0xff]
      %v1142 = vld [vmem:[%s1122 + $0xe2] sm:$0xff]
      %v1143 = vld [vmem:[%s1122 + $0xf2] sm:$0xff]
      %v1144 = vld [vmem:[%s1122 + $0xfa] sm:$0xff]
      %v1145 = vld [vmem:[%s1122 + $0x10a] sm:$0xff]
      %v1146 = vld [vmem:[%s1122 + $0x112] sm:$0xff]
      %v1147 = vld [vmem:[%s1122 + $0x122] sm:$0xff]
      %v1148 = vld [vmem:[%s1122 + $0x12a] sm:$0xff]
      %v1149 = vld [vmem:[%s1122 + $0x13a] sm:$0xff]
      %v1150 = vld [vmem:[%s1122 + $0x142] sm:$0xff]
      %v1151 = vld [vmem:[%s1122 + $0x152] sm:$0xff]
      %v1152 = vld [vmem:[%s1122 + $0x15a] sm:$0xff]
      %v1153 = vld [vmem:[%s1122 + $0x16a] sm:$0xff]
      %v1154 = vld [vmem:[%s1122 + $0x172] sm:$0xff]
      %v1155 = vmax.f32 %v1090, %v1123
      %v1156 = vmax.f32 %v1091, %v1124
      %v1157 = vmax.f32 %v1092, %v1125
      %v1158 = vmax.f32 %v1093, %v1126
      %v1159 = vmax.f32 %v1094, %v1127
      %v1160 = vmax.f32 %v1095, %v1128
      %v1161 = vmax.f32 %v1096, %v1129
      %v1162 = vmax.f32 %v1097, %v1130
      %v1163 = vmax.f32 %v1098, %v1131
      %v1164 = vmax.f32 %v1099, %v1132
      %v1165 = vmax.f32 %v1100, %v1133
      %v1166 = vmax.f32 %v1101, %v1134
      %v1167 = vmax.f32 %v1102, %v1135
      %v1168 = vmax.f32 %v1103, %v1136
      %v1169 = vmax.f32 %v1104, %v1137
      %v1170 = vmax.f32 %v1105, %v1138
      %v1171 = vmax.f32 %v1106, %v1139
      %v1172 = vmax.f32 %v1107, %v1140
      %v1173 = vmax.f32 %v1108, %v1141
      %v1174 = vmax.f32 %v1109, %v1142
      %v1175 = vmax.f32 %v1110, %v1143
      %v1176 = vmax.f32 %v1111, %v1144
      %v1177 = vmax.f32 %v1112, %v1145
      %v1178 = vmax.f32 %v1113, %v1146
      %v1179 = vmax.f32 %v1114, %v1147
      %v1180 = vmax.f32 %v1115, %v1148
      %v1181 = vmax.f32 %v1116, %v1149
      %v1182 = vmax.f32 %v1117, %v1150
      %v1183 = vmax.f32 %v1118, %v1151
      %v1184 = vmax.f32 %v1119, %v1152
      %v1185 = vmax.f32 %v1120, %v1153
      %v1186 = vmax.f32 %v1121, %v1154
      %s1187 = scalar_lea.vmem [#allocation2], 96
      %v1188 = vld [vmem:[%s1187 + $0x2] sm:$0xff]
      %v1189 = vld [vmem:[%s1187 + $0xa] sm:$0xff]
      %v1190 = vld [vmem:[%s1187 + $0x1a] sm:$0xff]
      %v1191 = vld [vmem:[%s1187 + $0x22] sm:$0xff]
      %v1192 = vld [vmem:[%s1187 + $0x32] sm:$0xff]
      %v1193 = vld [vmem:[%s1187 + $0x3a] sm:$0xff]
      %v1194 = vld [vmem:[%s1187 + $0x4a] sm:$0xff]
      %v1195 = vld [vmem:[%s1187 + $0x52] sm:$0xff]
      %v1196 = vld [vmem:[%s1187 + $0x62] sm:$0xff]
      %v1197 = vld [vmem:[%s1187 + $0x6a] sm:$0xff]
      %v1198 = vld [vmem:[%s1187 + $0x7a] sm:$0xff]
      %v1199 = vld [vmem:[%s1187 + $0x82] sm:$0xff]
      %v1200 = vld [vmem:[%s1187 + $0x92] sm:$0xff]
      %v1201 = vld [vmem:[%s1187 + $0x9a] sm:$0xff]
      %v1202 = vld [vmem:[%s1187 + $0xaa] sm:$0xff]
      %v1203 = vld [vmem:[%s1187 + $0xb2] sm:$0xff]
      %v1204 = vld [vmem:[%s1187 + $0xc2] sm:$0xff]
      %v1205 = vld [vmem:[%s1187 + $0xca] sm:$0xff]
      %v1206 = vld [vmem:[%s1187 + $0xda] sm:$0xff]
      %v1207 = vld [vmem:[%s1187 + $0xe2] sm:$0xff]
      %v1208 = vld [vmem:[%s1187 + $0xf2] sm:$0xff]
      %v1209 = vld [vmem:[%s1187 + $0xfa] sm:$0xff]
      %v1210 = vld [vmem:[%s1187 + $0x10a] sm:$0xff]
      %v1211 = vld [vmem:[%s1187 + $0x112] sm:$0xff]
      %v1212 = vld [vmem:[%s1187 + $0x122] sm:$0xff]
      %v1213 = vld [vmem:[%s1187 + $0x12a] sm:$0xff]
      %v1214 = vld [vmem:[%s1187 + $0x13a] sm:$0xff]
      %v1215 = vld [vmem:[%s1187 + $0x142] sm:$0xff]
      %v1216 = vld [vmem:[%s1187 + $0x152] sm:$0xff]
      %v1217 = vld [vmem:[%s1187 + $0x15a] sm:$0xff]
      %v1218 = vld [vmem:[%s1187 + $0x16a] sm:$0xff]
      %v1219 = vld [vmem:[%s1187 + $0x172] sm:$0xff]
      %v1220 = vmax.f32 %v1155, %v1188
      %v1221 = vmax.f32 %v1156, %v1189
      %v1222 = vmax.f32 %v1157, %v1190
      %v1223 = vmax.f32 %v1158, %v1191
      %v1224 = vmax.f32 %v1159, %v1192
      %v1225 = vmax.f32 %v1160, %v1193
      %v1226 = vmax.f32 %v1161, %v1194
      %v1227 = vmax.f32 %v1162, %v1195
      %v1228 = vmax.f32 %v1163, %v1196
      %v1229 = vmax.f32 %v1164, %v1197
      %v1230 = vmax.f32 %v1165, %v1198
      %v1231 = vmax.f32 %v1166, %v1199
      %v1232 = vmax.f32 %v1167, %v1200
      %v1233 = vmax.f32 %v1168, %v1201
      %v1234 = vmax.f32 %v1169, %v1202
      %v1235 = vmax.f32 %v1170, %v1203
      %v1236 = vmax.f32 %v1171, %v1204
      %v1237 = vmax.f32 %v1172, %v1205
      %v1238 = vmax.f32 %v1173, %v1206
      %v1239 = vmax.f32 %v1174, %v1207
      %v1240 = vmax.f32 %v1175, %v1208
      %v1241 = vmax.f32 %v1176, %v1209
      %v1242 = vmax.f32 %v1177, %v1210
      %v1243 = vmax.f32 %v1178, %v1211
      %v1244 = vmax.f32 %v1179, %v1212
      %v1245 = vmax.f32 %v1180, %v1213
      %v1246 = vmax.f32 %v1181, %v1214
      %v1247 = vmax.f32 %v1182, %v1215
      %v1248 = vmax.f32 %v1183, %v1216
      %v1249 = vmax.f32 %v1184, %v1217
      %v1250 = vmax.f32 %v1185, %v1218
      %v1251 = vmax.f32 %v1186, %v1219
      %v1252 = vld [vmem:[%s3 + $0x2] sm:$0x3]
      %v1254 = vsel %vm225, %v1220, 0
      %v1257 = vsel %vm225, %v1221, 0
      %v1260 = vsel %vm225, %v1222, 0
      %v1263 = vsel %vm225, %v1223, 0
      %v1266 = vsel %vm225, %v1224, 0
      %v1269 = vsel %vm225, %v1225, 0
      %v1272 = vsel %vm225, %v1226, 0
      %v1275 = vsel %vm225, %v1227, 0
      %v1278 = vsel %vm225, %v1228, 0
      %v1281 = vsel %vm225, %v1229, 0
      %v1284 = vsel %vm225, %v1230, 0
      %v1287 = vsel %vm225, %v1231, 0
      %v1290 = vsel %vm225, %v1232, 0
      %v1293 = vsel %vm225, %v1233, 0
      %v1296 = vsel %vm225, %v1234, 0
      %v1299 = vsel %vm225, %v1235, 0
      %v1302 = vsel %vm225, %v1236, 0
      %v1305 = vsel %vm225, %v1237, 0
      %v1308 = vsel %vm225, %v1238, 0
      %v1311 = vsel %vm225, %v1239, 0
      %v1314 = vsel %vm225, %v1240, 0
      %v1317 = vsel %vm225, %v1241, 0
      %v1320 = vsel %vm225, %v1242, 0
      %v1323 = vsel %vm225, %v1243, 0
      %v1326 = vsel %vm225, %v1244, 0
      %v1329 = vsel %vm225, %v1245, 0
      %v1332 = vsel %vm225, %v1246, 0
      %v1335 = vsel %vm225, %v1247, 0
      %v1338 = vsel %vm225, %v1248, 0
      %v1341 = vsel %vm225, %v1249, 0
      %v1344 = vsel %vm225, %v1250, 0
      %v1347 = vsel %vm225, %v1251, 0
      %vm1349 = vcmask 1041408
      %v1351 = vsel %vm1349, %v1252, 0
      %1353 = vmatprep.subr.mxu0 0.0
      %1354 = vmatpush1.msra.mxu0 %v1351
      %1355 = vmatprep.subr.mxu0 0.0
      %1356 = vmatpush1.msra.mxu0 0.0
      %1357 = vmatprep.subr.mxu0 0.0
      %1358 = vmatpush1.msra.mxu0 0.0
      %1359 = vmatprep.subr.mxu0 0.0
      %1360 = vmatpush1.msra.mxu0 0.0
      %1361 = vmatprep.subr.mxu0 0.0
      %1362 = vmatpush1.msra.mxu0 0.0
      %1363 = vmatprep.subr.mxu0 0.0
      %1364 = vmatpush1.msra.mxu0 0.0
      %1365 = vmatprep.subr.mxu0 0.0
      %1366 = vmatpush1.msra.mxu0 0.0
      %1367 = vmatprep.subr.mxu0 0.0
      %1368 = vmatpush1.msra.mxu0 0.0
      %1369 = vmatprep.subr.mxu0 0.0
      %1370 = vmatpush1.msra.mxu0 0.0
      %1371 = vmatprep.subr.mxu0 0.0
      %1372 = vmatpush1.msra.mxu0 0.0
      %1373 = vmatprep.subr.mxu0 0.0
      %1374 = vmatpush1.msra.mxu0 0.0
      %1375 = vmatprep.subr.mxu0 0.0
      %1376 = vmatpush1.msra.mxu0 0.0
      %1377 = vmatprep.subr.mxu0 0.0
      %1378 = vmatpush1.msra.mxu0 0.0
      %1379 = vmatprep.subr.mxu0 0.0
      %1380 = vmatpush1.msra.mxu0 0.0
      %1381 = vmatprep.subr.mxu0 0.0
      %1382 = vmatpush1.msra.mxu0 0.0
      %1383 = vmatprep.subr.mxu0 0.0
      %1384 = vmatpush1.msra.mxu0 0.0
      %1385 = vmatprep.subr.mxu0 0.0
      %1386 = vmatpush1.msra.mxu0 0.0
      %1387 = vmatprep.subr.mxu0 0.0
      %1388 = vmatpush1.msra.mxu0 0.0
      %1389 = vmatprep.subr.mxu0 0.0
      %1390 = vmatpush1.msra.mxu0 0.0
      %1391 = vmatprep.subr.mxu0 0.0
      %1392 = vmatpush1.msra.mxu0 0.0
      %1393 = vmatprep.subr.mxu0 0.0
      %1394 = vmatpush1.msra.mxu0 0.0
      %1395 = vmatprep.subr.mxu0 0.0
      %1396 = vmatpush1.msra.mxu0 0.0
      %1397 = vmatprep.subr.mxu0 0.0
      %1398 = vmatpush1.msra.mxu0 0.0
      %1399 = vmatprep.subr.mxu0 0.0
      %1400 = vmatpush1.msra.mxu0 0.0
      %1401 = vmatprep.subr.mxu0 0.0
      %1402 = vmatpush1.msra.mxu0 0.0
      %1403 = vmatprep.subr.mxu0 0.0
      %1404 = vmatpush1.msra.mxu0 0.0
      %1405 = vmatprep.subr.mxu0 0.0
      %1406 = vmatpush1.msra.mxu0 0.0
      %1407 = vmatprep.subr.mxu0 0.0
      %1408 = vmatpush1.msra.mxu0 0.0
      %1409 = vmatprep.subr.mxu0 0.0
      %1410 = vmatpush1.msra.mxu0 0.0
      %1411 = vmatprep.subr.mxu0 0.0
      %1412 = vmatpush1.msra.mxu0 0.0
      %1413 = vmatprep.subr.mxu0 0.0
      %1414 = vmatpush1.msra.mxu0 0.0
      %1415 = vmatprep.subr.mxu0 0.0
      %1416 = vmatpush1.msra.mxu0 0.0
      %1417 = vmatprep.mubr.f32.mxu0 0.0
      %1418 = vmatmul.mubr.f32.gmra.mrb[0].mxu0 %v1254
      %v1419 = vpop.f32.mrb[0].mxu0
      %v1420 = vadd.f32 0.0, %v1419
      %v1421 = vpop.f32.mrb[0].mxu0
      %1422 = vmatprep.mubr.f32.mxu0 0.0
      %1423 = vmatmul.mubr.f32.gmra.mrb[0].mxu0 %v1257
      %v1424 = vpop.f32.mrb[0].mxu0
      %v1425 = vadd.f32 0.0, %v1424
      %v1426 = vpop.f32.mrb[0].mxu0
      %1427 = vmatprep.mubr.f32.mxu0 0.0
      %1428 = vmatmul.mubr.f32.gmra.mrb[0].mxu0 %v1260
      %v1429 = vpop.f32.mrb[0].mxu0
      %v1430 = vadd.f32 0.0, %v1429
      %v1431 = vpop.f32.mrb[0].mxu0
      %1432 = vmatprep.mubr.f32.mxu0 0.0
      %1433 = vmatmul.mubr.f32.gmra.mrb[0].mxu0 %v1263
      %v1434 = vpop.f32.mrb[0].mxu0
      %v1435 = vadd.f32 0.0, %v1434
      %v1436 = vpop.f32.mrb[0].mxu0
      %1437 = vmatprep.mubr.f32.mxu0 0.0
      %1438 = vmatmul.mubr.f32.gmra.mrb[0].mxu0 %v1266
      %v1439 = vpop.f32.mrb[0].mxu0
      %v1440 = vadd.f32 0.0, %v1439
      %v1441 = vpop.f32.mrb[0].mxu0
      %1442 = vmatprep.mubr.f32.mxu0 0.0
      %1443 = vmatmul.mubr.f32.gmra.mrb[0].mxu0 %v1269
      %v1444 = vpop.f32.mrb[0].mxu0
      %v1445 = vadd.f32 0.0, %v1444
      %v1446 = vpop.f32.mrb[0].mxu0
      %1447 = vmatprep.mubr.f32.mxu0 0.0
      %1448 = vmatmul.mubr.f32.gmra.mrb[0].mxu0 %v1272
      %v1449 = vpop.f32.mrb[0].mxu0
      %v1450 = vadd.f32 0.0, %v1449
      %v1451 = vpop.f32.mrb[0].mxu0
      %1452 = vmatprep.mubr.f32.mxu0 0.0
      %1453 = vmatmul.mubr.f32.gmra.mrb[0].mxu0 %v1275
      %v1454 = vpop.f32.mrb[0].mxu0
      %v1455 = vadd.f32 0.0, %v1454
      %v1456 = vpop.f32.mrb[0].mxu0
      %1457 = vmatprep.mubr.f32.mxu0 0.0
      %1458 = vmatmul.mubr.f32.gmra.mrb[0].mxu0 %v1278
      %v1459 = vpop.f32.mrb[0].mxu0
      %v1460 = vadd.f32 0.0, %v1459
      %v1461 = vpop.f32.mrb[0].mxu0
      %1462 = vmatprep.mubr.f32.mxu0 0.0
      %1463 = vmatmul.mubr.f32.gmra.mrb[0].mxu0 %v1281
      %v1464 = vpop.f32.mrb[0].mxu0
      %v1465 = vadd.f32 0.0, %v1464
      %v1466 = vpop.f32.mrb[0].mxu0
      %1467 = vmatprep.mubr.f32.mxu0 0.0
      %1468 = vmatmul.mubr.f32.gmra.mrb[0].mxu0 %v1284
      %v1469 = vpop.f32.mrb[0].mxu0
      %v1470 = vadd.f32 0.0, %v1469
      %v1471 = vpop.f32.mrb[0].mxu0
      %1472 = vmatprep.mubr.f32.mxu0 0.0
      %1473 = vmatmul.mubr.f32.gmra.mrb[0].mxu0 %v1287
      %v1474 = vpop.f32.mrb[0].mxu0
      %v1475 = vadd.f32 0.0, %v1474
      %v1476 = vpop.f32.mrb[0].mxu0
      %1477 = vmatprep.mubr.f32.mxu0 0.0
      %1478 = vmatmul.mubr.f32.gmra.mrb[0].mxu0 %v1290
      %v1479 = vpop.f32.mrb[0].mxu0
      %v1480 = vadd.f32 0.0, %v1479
      %v1481 = vpop.f32.mrb[0].mxu0
      %1482 = vmatprep.mubr.f32.mxu0 0.0
      %1483 = vmatmul.mubr.f32.gmra.mrb[0].mxu0 %v1293
      %v1484 = vpop.f32.mrb[0].mxu0
      %v1485 = vadd.f32 0.0, %v1484
      %v1486 = vpop.f32.mrb[0].mxu0
      %1487 = vmatprep.mubr.f32.mxu0 0.0
      %1488 = vmatmul.mubr.f32.gmra.mrb[0].mxu0 %v1296
      %v1489 = vpop.f32.mrb[0].mxu0
      %v1490 = vadd.f32 0.0, %v1489
      %v1491 = vpop.f32.mrb[0].mxu0
      %1492 = vmatprep.mubr.f32.mxu0 0.0
      %1493 = vmatmul.mubr.f32.gmra.mrb[0].mxu0 %v1299
      %v1494 = vpop.f32.mrb[0].mxu0
      %v1495 = vadd.f32 0.0, %v1494
      %v1496 = vpop.f32.mrb[0].mxu0
      %1497 = vmatprep.mubr.f32.mxu0 0.0
      %1498 = vmatmul.mubr.f32.gmra.mrb[0].mxu0 %v1302
      %v1499 = vpop.f32.mrb[0].mxu0
      %v1500 = vadd.f32 0.0, %v1499
      %v1501 = vpop.f32.mrb[0].mxu0
      %1502 = vmatprep.mubr.f32.mxu0 0.0
      %1503 = vmatmul.mubr.f32.gmra.mrb[0].mxu0 %v1305
      %v1504 = vpop.f32.mrb[0].mxu0
      %v1505 = vadd.f32 0.0, %v1504
      %v1506 = vpop.f32.mrb[0].mxu0
      %1507 = vmatprep.mubr.f32.mxu0 0.0
      %1508 = vmatmul.mubr.f32.gmra.mrb[0].mxu0 %v1308
      %v1509 = vpop.f32.mrb[0].mxu0
      %v1510 = vadd.f32 0.0, %v1509
      %v1511 = vpop.f32.mrb[0].mxu0
      %1512 = vmatprep.mubr.f32.mxu0 0.0
      %1513 = vmatmul.mubr.f32.gmra.mrb[0].mxu0 %v1311
      %v1514 = vpop.f32.mrb[0].mxu0
      %v1515 = vadd.f32 0.0, %v1514
      %v1516 = vpop.f32.mrb[0].mxu0
      %1517 = vmatprep.mubr.f32.mxu0 0.0
      %1518 = vmatmul.mubr.f32.gmra.mrb[0].mxu0 %v1314
      %v1519 = vpop.f32.mrb[0].mxu0
      %v1520 = vadd.f32 0.0, %v1519
      %v1521 = vpop.f32.mrb[0].mxu0
      %1522 = vmatprep.mubr.f32.mxu0 0.0
      %1523 = vmatmul.mubr.f32.gmra.mrb[0].mxu0 %v1317
      %v1524 = vpop.f32.mrb[0].mxu0
      %v1525 = vadd.f32 0.0, %v1524
      %v1526 = vpop.f32.mrb[0].mxu0
      %1527 = vmatprep.mubr.f32.mxu0 0.0
      %1528 = vmatmul.mubr.f32.gmra.mrb[0].mxu0 %v1320
      %v1529 = vpop.f32.mrb[0].mxu0
      %v1530 = vadd.f32 0.0, %v1529
      %v1531 = vpop.f32.mrb[0].mxu0
      %1532 = vmatprep.mubr.f32.mxu0 0.0
      %1533 = vmatmul.mubr.f32.gmra.mrb[0].mxu0 %v1323
      %v1534 = vpop.f32.mrb[0].mxu0
      %v1535 = vadd.f32 0.0, %v1534
      %v1536 = vpop.f32.mrb[0].mxu0
      %1537 = vmatprep.mubr.f32.mxu0 0.0
      %1538 = vmatmul.mubr.f32.gmra.mrb[0].mxu0 %v1326
      %v1539 = vpop.f32.mrb[0].mxu0
      %v1540 = vadd.f32 0.0, %v1539
      %v1541 = vpop.f32.mrb[0].mxu0
      %1542 = vmatprep.mubr.f32.mxu0 0.0
      %1543 = vmatmul.mubr.f32.gmra.mrb[0].mxu0 %v1329
      %v1544 = vpop.f32.mrb[0].mxu0
      %v1545 = vadd.f32 0.0, %v1544
      %v1546 = vpop.f32.mrb[0].mxu0
      %1547 = vmatprep.mubr.f32.mxu0 0.0
      %1548 = vmatmul.mubr.f32.gmra.mrb[0].mxu0 %v1332
      %v1549 = vpop.f32.mrb[0].mxu0
      %v1550 = vadd.f32 0.0, %v1549
      %v1551 = vpop.f32.mrb[0].mxu0
      %1552 = vmatprep.mubr.f32.mxu0 0.0
      %1553 = vmatmul.mubr.f32.gmra.mrb[0].mxu0 %v1335
      %v1554 = vpop.f32.mrb[0].mxu0
      %v1555 = vadd.f32 0.0, %v1554
      %v1556 = vpop.f32.mrb[0].mxu0
      %1557 = vmatprep.mubr.f32.mxu0 0.0
      %1558 = vmatmul.mubr.f32.gmra.mrb[0].mxu0 %v1338
      %v1559 = vpop.f32.mrb[0].mxu0
      %v1560 = vadd.f32 0.0, %v1559
      %v1561 = vpop.f32.mrb[0].mxu0
      %1562 = vmatprep.mubr.f32.mxu0 0.0
      %1563 = vmatmul.mubr.f32.gmra.mrb[0].mxu0 %v1341
      %v1564 = vpop.f32.mrb[0].mxu0
      %v1565 = vadd.f32 0.0, %v1564
      %v1566 = vpop.f32.mrb[0].mxu0
      %1567 = vmatprep.mubr.f32.mxu0 0.0
      %1568 = vmatmul.mubr.f32.gmra.mrb[0].mxu0 %v1344
      %v1569 = vpop.f32.mrb[0].mxu0
      %v1570 = vadd.f32 0.0, %v1569
      %v1571 = vpop.f32.mrb[0].mxu0
      %1572 = vmatprep.mubr.f32.mxu0 0.0
      %1573 = vmatmul.mubr.f32.gmra.mrb[0].mxu0 %v1347
      %v1574 = vpop.f32.mrb[0].mxu0
      %v1575 = vadd.f32 0.0, %v1574
      %v1576 = vpop.f32.mrb[0].mxu0
      %1577 = vdwg.mxu0
      %v1579 = vsel %vm225, %v640, 0
      %v1582 = vsel %vm225, %v641, 0
      %v1585 = vsel %vm225, %v642, 0
      %v1588 = vsel %vm225, %v643, 0
      %v1591 = vsel %vm225, %v644, 0
      %v1594 = vsel %vm225, %v645, 0
      %v1597 = vsel %vm225, %v646, 0
      %v1600 = vsel %vm225, %v647, 0
      %v1603 = vsel %vm225, %v648, 0
      %v1606 = vsel %vm225, %v649, 0
      %v1609 = vsel %vm225, %v650, 0
      %v1612 = vsel %vm225, %v651, 0
      %v1615 = vsel %vm225, %v652, 0
      %v1618 = vsel %vm225, %v653, 0
      %v1621 = vsel %vm225, %v654, 0
      %v1624 = vsel %vm225, %v655, 0
      %v1627 = vsel %vm225, %v656, 0
      %v1630 = vsel %vm225, %v657, 0
      %v1633 = vsel %vm225, %v658, 0
      %v1636 = vsel %vm225, %v659, 0
      %v1639 = vsel %vm225, %v660, 0
      %v1642 = vsel %vm225, %v661, 0
      %v1645 = vsel %vm225, %v662, 0
      %v1648 = vsel %vm225, %v663, 0
      %v1651 = vsel %vm225, %v664, 0
      %v1654 = vsel %vm225, %v665, 0
      %v1657 = vsel %vm225, %v666, 0
      %v1660 = vsel %vm225, %v667, 0
      %v1663 = vsel %vm225, %v668, 0
      %v1666 = vsel %vm225, %v669, 0
      %v1669 = vsel %vm225, %v670, 0
      %v1672 = vsel %vm225, %v671, 0
      %v1675 = vsel %vm1349, %v672, 0
      %1677 = vmatprep.subr.mxu0 0.0
      %1678 = vmatpush1.msra.mxu0 %v1675
      %1679 = vmatprep.subr.mxu0 0.0
      %1680 = vmatpush1.msra.mxu0 0.0
      %1681 = vmatprep.subr.mxu0 0.0
      %1682 = vmatpush1.msra.mxu0 0.0
      %1683 = vmatprep.subr.mxu0 0.0
      %1684 = vmatpush1.msra.mxu0 0.0
      %1685 = vmatprep.subr.mxu0 0.0
      %1686 = vmatpush1.msra.mxu0 0.0
      %1687 = vmatprep.subr.mxu0 0.0
      %1688 = vmatpush1.msra.mxu0 0.0
      %1689 = vmatprep.subr.mxu0 0.0
      %1690 = vmatpush1.msra.mxu0 0.0
      %1691 = vmatprep.subr.mxu0 0.0
      %1692 = vmatpush1.msra.mxu0 0.0
      %1693 = vmatprep.subr.mxu0 0.0
      %1694 = vmatpush1.msra.mxu0 0.0
      %1695 = vmatprep.subr.mxu0 0.0
      %1696 = vmatpush1.msra.mxu0 0.0
      %1697 = vmatprep.subr.mxu0 0.0
      %1698 = vmatpush1.msra.mxu0 0.0
      %1699 = vmatprep.subr.mxu0 0.0
      %1700 = vmatpush1.msra.mxu0 0.0
      %1701 = vmatprep.subr.mxu0 0.0
      %1702 = vmatpush1.msra.mxu0 0.0
      %1703 = vmatprep.subr.mxu0 0.0
      %1704 = vmatpush1.msra.mxu0 0.0
      %1705 = vmatprep.subr.mxu0 0.0
      %1706 = vmatpush1.msra.mxu0 0.0
      %1707 = vmatprep.subr.mxu0 0.0
      %1708 = vmatpush1.msra.mxu0 0.0
      %1709 = vmatprep.subr.mxu0 0.0
      %1710 = vmatpush1.msra.mxu0 0.0
      %1711 = vmatprep.subr.mxu0 0.0
      %1712 = vmatpush1.msra.mxu0 0.0
      %1713 = vmatprep.subr.mxu0 0.0
      %1714 = vmatpush1.msra.mxu0 0.0
      %1715 = vmatprep.subr.mxu0 0.0
      %1716 = vmatpush1.msra.mxu0 0.0
      %1717 = vmatprep.subr.mxu0 0.0
      %1718 = vmatpush1.msra.mxu0 0.0
      %1719 = vmatprep.subr.mxu0 0.0
      %1720 = vmatpush1.msra.mxu0 0.0
      %1721 = vmatprep.subr.mxu0 0.0
      %1722 = vmatpush1.msra.mxu0 0.0
      %1723 = vmatprep.subr.mxu0 0.0
      %1724 = vmatpush1.msra.mxu0 0.0
      %1725 = vmatprep.subr.mxu0 0.0
      %1726 = vmatpush1.msra.mxu0 0.0
      %1727 = vmatprep.subr.mxu0 0.0
      %1728 = vmatpush1.msra.mxu0 0.0
      %1729 = vmatprep.subr.mxu0 0.0
      %1730 = vmatpush1.msra.mxu0 0.0
      %1731 = vmatprep.subr.mxu0 0.0
      %1732 = vmatpush1.msra.mxu0 0.0
      %1733 = vmatprep.subr.mxu0 0.0
      %1734 = vmatpush1.msra.mxu0 0.0
      %1735 = vmatprep.subr.mxu0 0.0
      %1736 = vmatpush1.msra.mxu0 0.0
      %1737 = vmatprep.subr.mxu0 0.0
      %1738 = vmatpush1.msra.mxu0 0.0
      %1739 = vmatprep.subr.mxu0 0.0
      %1740 = vmatpush1.msra.mxu0 0.0
      %1741 = vmatprep.mubr.f32.mxu0 0.0
      %1742 = vmatmul.mubr.f32.gmra.mrb[0].mxu0 %v1579
      %v1743 = vpop.f32.mrb[0].mxu0
      %v1744 = vadd.f32 %v1420, %v1743
      %v1745 = vpop.f32.mrb[0].mxu0
      %1746 = vmatprep.mubr.f32.mxu0 0.0
      %1747 = vmatmul.mubr.f32.gmra.mrb[0].mxu0 %v1582
      %v1748 = vpop.f32.mrb[0].mxu0
      %v1749 = vadd.f32 %v1425, %v1748
      %v1750 = vpop.f32.mrb[0].mxu0
      %1751 = vmatprep.mubr.f32.mxu0 0.0
      %1752 = vmatmul.mubr.f32.gmra.mrb[0].mxu0 %v1585
      %v1753 = vpop.f32.mrb[0].mxu0
      %v1754 = vadd.f32 %v1430, %v1753
      %v1755 = vpop.f32.mrb[0].mxu0
      %1756 = vmatprep.mubr.f32.mxu0 0.0
      %1757 = vmatmul.mubr.f32.gmra.mrb[0].mxu0 %v1588
      %v1758 = vpop.f32.mrb[0].mxu0
      %v1759 = vadd.f32 %v1435, %v1758
      %v1760 = vpop.f32.mrb[0].mxu0
      %1761 = vmatprep.mubr.f32.mxu0 0.0
      %1762 = vmatmul.mubr.f32.gmra.mrb[0].mxu0 %v1591
      %v1763 = vpop.f32.mrb[0].mxu0
      %v1764 = vadd.f32 %v1440, %v1763
      %v1765 = vpop.f32.mrb[0].mxu0
      %1766 = vmatprep.mubr.f32.mxu0 0.0
      %1767 = vmatmul.mubr.f32.gmra.mrb[0].mxu0 %v1594
      %v1768 = vpop.f32.mrb[0].mxu0
      %v1769 = vadd.f32 %v1445, %v1768
      %v1770 = vpop.f32.mrb[0].mxu0
      %1771 = vmatprep.mubr.f32.mxu0 0.0
      %1772 = vmatmul.mubr.f32.gmra.mrb[0].mxu0 %v1597
      %v1773 = vpop.f32.mrb[0].mxu0
      %v1774 = vadd.f32 %v1450, %v1773
      %v1775 = vpop.f32.mrb[0].mxu0
      %1776 = vmatprep.mubr.f32.mxu0 0.0
      %1777 = vmatmul.mubr.f32.gmra.mrb[0].mxu0 %v1600
      %v1778 = vpop.f32.mrb[0].mxu0
      %v1779 = vadd.f32 %v1455, %v1778
      %v1780 = vpop.f32.mrb[0].mxu0
      %1781 = vmatprep.mubr.f32.mxu0 0.0
      %1782 = vmatmul.mubr.f32.gmra.mrb[0].mxu0 %v1603
      %v1783 = vpop.f32.mrb[0].mxu0
      %v1784 = vadd.f32 %v1460, %v1783
      %v1785 = vpop.f32.mrb[0].mxu0
      %1786 = vmatprep.mubr.f32.mxu0 0.0
      %1787 = vmatmul.mubr.f32.gmra.mrb[0].mxu0 %v1606
      %v1788 = vpop.f32.mrb[0].mxu0
      %v1789 = vadd.f32 %v1465, %v1788
      %v1790 = vpop.f32.mrb[0].mxu0
      %1791 = vmatprep.mubr.f32.mxu0 0.0
      %1792 = vmatmul.mubr.f32.gmra.mrb[0].mxu0 %v1609
      %v1793 = vpop.f32.mrb[0].mxu0
      %v1794 = vadd.f32 %v1470, %v1793
      %v1795 = vpop.f32.mrb[0].mxu0
      %1796 = vmatprep.mubr.f32.mxu0 0.0
      %1797 = vmatmul.mubr.f32.gmra.mrb[0].mxu0 %v1612
      %v1798 = vpop.f32.mrb[0].mxu0
      %v1799 = vadd.f32 %v1475, %v1798
      %v1800 = vpop.f32.mrb[0].mxu0
      %1801 = vmatprep.mubr.f32.mxu0 0.0
      %1802 = vmatmul.mubr.f32.gmra.mrb[0].mxu0 %v1615
      %v1803 = vpop.f32.mrb[0].mxu0
      %v1804 = vadd.f32 %v1480, %v1803
      %v1805 = vpop.f32.mrb[0].mxu0
      %1806 = vmatprep.mubr.f32.mxu0 0.0
      %1807 = vmatmul.mubr.f32.gmra.mrb[0].mxu0 %v1618
      %v1808 = vpop.f32.mrb[0].mxu0
      %v1809 = vadd.f32 %v1485, %v1808
      %v1810 = vpop.f32.mrb[0].mxu0
      %1811 = vmatprep.mubr.f32.mxu0 0.0
      %1812 = vmatmul.mubr.f32.gmra.mrb[0].mxu0 %v1621
      %v1813 = vpop.f32.mrb[0].mxu0
      %v1814 = vadd.f32 %v1490, %v1813
      %v1815 = vpop.f32.mrb[0].mxu0
      %1816 = vmatprep.mubr.f32.mxu0 0.0
      %1817 = vmatmul.mubr.f32.gmra.mrb[0].mxu0 %v1624
      %v1818 = vpop.f32.mrb[0].mxu0
      %v1819 = vadd.f32 %v1495, %v1818
      %v1820 = vpop.f32.mrb[0].mxu0
      %1821 = vmatprep.mubr.f32.mxu0 0.0
      %1822 = vmatmul.mubr.f32.gmra.mrb[0].mxu0 %v1627
      %v1823 = vpop.f32.mrb[0].mxu0
      %v1824 = vadd.f32 %v1500, %v1823
      %v1825 = vpop.f32.mrb[0].mxu0
      %1826 = vmatprep.mubr.f32.mxu0 0.0
      %1827 = vmatmul.mubr.f32.gmra.mrb[0].mxu0 %v1630
      %v1828 = vpop.f32.mrb[0].mxu0
      %v1829 = vadd.f32 %v1505, %v1828
      %v1830 = vpop.f32.mrb[0].mxu0
      %1831 = vmatprep.mubr.f32.mxu0 0.0
      %1832 = vmatmul.mubr.f32.gmra.mrb[0].mxu0 %v1633
      %v1833 = vpop.f32.mrb[0].mxu0
      %v1834 = vadd.f32 %v1510, %v1833
      %v1835 = vpop.f32.mrb[0].mxu0
      %1836 = vmatprep.mubr.f32.mxu0 0.0
      %1837 = vmatmul.mubr.f32.gmra.mrb[0].mxu0 %v1636
      %v1838 = vpop.f32.mrb[0].mxu0
      %v1839 = vadd.f32 %v1515, %v1838
      %v1840 = vpop.f32.mrb[0].mxu0
      %1841 = vmatprep.mubr.f32.mxu0 0.0
      %1842 = vmatmul.mubr.f32.gmra.mrb[0].mxu0 %v1639
      %v1843 = vpop.f32.mrb[0].mxu0
      %v1844 = vadd.f32 %v1520, %v1843
      %v1845 = vpop.f32.mrb[0].mxu0
      %1846 = vmatprep.mubr.f32.mxu0 0.0
      %1847 = vmatmul.mubr.f32.gmra.mrb[0].mxu0 %v1642
      %v1848 = vpop.f32.mrb[0].mxu0
      %v1849 = vadd.f32 %v1525, %v1848
      %v1850 = vpop.f32.mrb[0].mxu0
      %1851 = vmatprep.mubr.f32.mxu0 0.0
      %1852 = vmatmul.mubr.f32.gmra.mrb[0].mxu0 %v1645
      %v1853 = vpop.f32.mrb[0].mxu0
      %v1854 = vadd.f32 %v1530, %v1853
      %v1855 = vpop.f32.mrb[0].mxu0
      %1856 = vmatprep.mubr.f32.mxu0 0.0
      %1857 = vmatmul.mubr.f32.gmra.mrb[0].mxu0 %v1648
      %v1858 = vpop.f32.mrb[0].mxu0
      %v1859 = vadd.f32 %v1535, %v1858
      %v1860 = vpop.f32.mrb[0].mxu0
      %1861 = vmatprep.mubr.f32.mxu0 0.0
      %1862 = vmatmul.mubr.f32.gmra.mrb[0].mxu0 %v1651
      %v1863 = vpop.f32.mrb[0].mxu0
      %v1864 = vadd.f32 %v1540, %v1863
      %v1865 = vpop.f32.mrb[0].mxu0
      %1866 = vmatprep.mubr.f32.mxu0 0.0
      %1867 = vmatmul.mubr.f32.gmra.mrb[0].mxu0 %v1654
      %v1868 = vpop.f32.mrb[0].mxu0
      %v1869 = vadd.f32 %v1545, %v1868
      %v1870 = vpop.f32.mrb[0].mxu0
      %1871 = vmatprep.mubr.f32.mxu0 0.0
      %1872 = vmatmul.mubr.f32.gmra.mrb[0].mxu0 %v1657
      %v1873 = vpop.f32.mrb[0].mxu0
      %v1874 = vadd.f32 %v1550, %v1873
      %v1875 = vpop.f32.mrb[0].mxu0
      %1876 = vmatprep.mubr.f32.mxu0 0.0
      %1877 = vmatmul.mubr.f32.gmra.mrb[0].mxu0 %v1660
      %v1878 = vpop.f32.mrb[0].mxu0
      %v1879 = vadd.f32 %v1555, %v1878
      %v1880 = vpop.f32.mrb[0].mxu0
      %1881 = vmatprep.mubr.f32.mxu0 0.0
      %1882 = vmatmul.mubr.f32.gmra.mrb[0].mxu0 %v1663
      %v1883 = vpop.f32.mrb[0].mxu0
      %v1884 = vadd.f32 %v1560, %v1883
      %v1885 = vpop.f32.mrb[0].mxu0
      %1886 = vmatprep.mubr.f32.mxu0 0.0
      %1887 = vmatmul.mubr.f32.gmra.mrb[0].mxu0 %v1666
      %v1888 = vpop.f32.mrb[0].mxu0
      %v1889 = vadd.f32 %v1565, %v1888
      %v1890 = vpop.f32.mrb[0].mxu0
      %1891 = vmatprep.mubr.f32.mxu0 0.0
      %1892 = vmatmul.mubr.f32.gmra.mrb[0].mxu0 %v1669
      %v1893 = vpop.f32.mrb[0].mxu0
      %v1894 = vadd.f32 %v1570, %v1893
      %v1895 = vpop.f32.mrb[0].mxu0
      %1896 = vmatprep.mubr.f32.mxu0 0.0
      %1897 = vmatmul.mubr.f32.gmra.mrb[0].mxu0 %v1672
      %v1898 = vpop.f32.mrb[0].mxu0
      %v1899 = vadd.f32 %v1575, %v1898
      %v1900 = vpop.f32.mrb[0].mxu0
      %1901 = vdwg.mxu0
      %1902 = vst.msk [vmem:[%s240 + $0x2] sm:$0xff] %vm225, %v1220
      %1903 = vst.msk [vmem:[%s240 + $0xa] sm:$0xff] %vm225, %v1221
      %1904 = vst.msk [vmem:[%s240 + $0x1a] sm:$0xff] %vm225, %v1222
      %1905 = vst.msk [vmem:[%s240 + $0x22] sm:$0xff] %vm225, %v1223
      %1906 = vst.msk [vmem:[%s240 + $0x32] sm:$0xff] %vm225, %v1224
      %1907 = vst.msk [vmem:[%s240 + $0x3a] sm:$0xff] %vm225, %v1225
      %1908 = vst.msk [vmem:[%s240 + $0x4a] sm:$0xff] %vm225, %v1226
      %1909 = vst.msk [vmem:[%s240 + $0x52] sm:$0xff] %vm225, %v1227
      %1910 = vst.msk [vmem:[%s240 + $0x62] sm:$0xff] %vm225, %v1228
      %1911 = vst.msk [vmem:[%s240 + $0x6a] sm:$0xff] %vm225, %v1229
      %1912 = vst.msk [vmem:[%s240 + $0x7a] sm:$0xff] %vm225, %v1230
      %1913 = vst.msk [vmem:[%s240 + $0x82] sm:$0xff] %vm225, %v1231
      %1914 = vst.msk [vmem:[%s240 + $0x92] sm:$0xff] %vm225, %v1232
      %1915 = vst.msk [vmem:[%s240 + $0x9a] sm:$0xff] %vm225, %v1233
      %1916 = vst.msk [vmem:[%s240 + $0xaa] sm:$0xff] %vm225, %v1234
      %1917 = vst.msk [vmem:[%s240 + $0xb2] sm:$0xff] %vm225, %v1235
      %1918 = vst.msk [vmem:[%s240 + $0xc2] sm:$0xff] %vm225, %v1236
      %1919 = vst.msk [vmem:[%s240 + $0xca] sm:$0xff] %vm225, %v1237
      %1920 = vst.msk [vmem:[%s240 + $0xda] sm:$0xff] %vm225, %v1238
      %1921 = vst.msk [vmem:[%s240 + $0xe2] sm:$0xff] %vm225, %v1239
      %1922 = vst.msk [vmem:[%s240 + $0xf2] sm:$0xff] %vm225, %v1240
      %1923 = vst.msk [vmem:[%s240 + $0xfa] sm:$0xff] %vm225, %v1241
      %1924 = vst.msk [vmem:[%s240 + $0x10a] sm:$0xff] %vm225, %v1242
      %1925 = vst.msk [vmem:[%s240 + $0x112] sm:$0xff] %vm225, %v1243
      %1926 = vst.msk [vmem:[%s240 + $0x122] sm:$0xff] %vm225, %v1244
      %1927 = vst.msk [vmem:[%s240 + $0x12a] sm:$0xff] %vm225, %v1245
      %1928 = vst.msk [vmem:[%s240 + $0x13a] sm:$0xff] %vm225, %v1246
      %1929 = vst.msk [vmem:[%s240 + $0x142] sm:$0xff] %vm225, %v1247
      %1930 = vst.msk [vmem:[%s240 + $0x152] sm:$0xff] %vm225, %v1248
      %1931 = vst.msk [vmem:[%s240 + $0x15a] sm:$0xff] %vm225, %v1249
      %1932 = vst.msk [vmem:[%s240 + $0x16a] sm:$0xff] %vm225, %v1250
      %1933 = vst.msk [vmem:[%s240 + $0x172] sm:$0xff] %vm225, %v1251
      %v1934 = vld [vmem:[%s240] sm:$0xff]
      %v1935 = vld [vmem:[%s240 + $0x8] sm:$0xff]
      %v1936 = vld [vmem:[%s240 + $0x18] sm:$0xff]
      %v1937 = vld [vmem:[%s240 + $0x20] sm:$0xff]
      %v1938 = vld [vmem:[%s240 + $0x30] sm:$0xff]
      %v1939 = vld [vmem:[%s240 + $0x38] sm:$0xff]
      %v1940 = vld [vmem:[%s240 + $0x48] sm:$0xff]
      %v1941 = vld [vmem:[%s240 + $0x50] sm:$0xff]
      %v1942 = vld [vmem:[%s240 + $0x60] sm:$0xff]
      %v1943 = vld [vmem:[%s240 + $0x68] sm:$0xff]
      %v1944 = vld [vmem:[%s240 + $0x78] sm:$0xff]
      %v1945 = vld [vmem:[%s240 + $0x80] sm:$0xff]
      %v1946 = vld [vmem:[%s240 + $0x90] sm:$0xff]
      %v1947 = vld [vmem:[%s240 + $0x98] sm:$0xff]
      %v1948 = vld [vmem:[%s240 + $0xa8] sm:$0xff]
      %v1949 = vld [vmem:[%s240 + $0xb0] sm:$0xff]
      %v1950 = vld [vmem:[%s240 + $0xc0] sm:$0xff]
      %v1951 = vld [vmem:[%s240 + $0xc8] sm:$0xff]
      %v1952 = vld [vmem:[%s240 + $0xd8] sm:$0xff]
      %v1953 = vld [vmem:[%s240 + $0xe0] sm:$0xff]
      %v1954 = vld [vmem:[%s240 + $0xf0] sm:$0xff]
      %v1955 = vld [vmem:[%s240 + $0xf8] sm:$0xff]
      %v1956 = vld [vmem:[%s240 + $0x108] sm:$0xff]
      %v1957 = vld [vmem:[%s240 + $0x110] sm:$0xff]
      %v1958 = vld [vmem:[%s240 + $0x120] sm:$0xff]
      %v1959 = vld [vmem:[%s240 + $0x128] sm:$0xff]
      %v1960 = vld [vmem:[%s240 + $0x138] sm:$0xff]
      %v1961 = vld [vmem:[%s240 + $0x140] sm:$0xff]
      %v1962 = vld [vmem:[%s240 + $0x150] sm:$0xff]
      %v1963 = vld [vmem:[%s240 + $0x158] sm:$0xff]
      %v1964 = vld [vmem:[%s240 + $0x168] sm:$0xff]
      %v1965 = vld [vmem:[%s240 + $0x170] sm:$0xff]
      %v1966 = vmax.f32 %v1220, %v1934
      %v1967 = vmax.f32 %v1221, %v1935
      %v1968 = vmax.f32 %v1222, %v1936
      %v1969 = vmax.f32 %v1223, %v1937
      %v1970 = vmax.f32 %v1224, %v1938
      %v1971 = vmax.f32 %v1225, %v1939
      %v1972 = vmax.f32 %v1226, %v1940
      %v1973 = vmax.f32 %v1227, %v1941
      %v1974 = vmax.f32 %v1228, %v1942
      %v1975 = vmax.f32 %v1229, %v1943
      %v1976 = vmax.f32 %v1230, %v1944
      %v1977 = vmax.f32 %v1231, %v1945
      %v1978 = vmax.f32 %v1232, %v1946
      %v1979 = vmax.f32 %v1233, %v1947
      %v1980 = vmax.f32 %v1234, %v1948
      %v1981 = vmax.f32 %v1235, %v1949
      %v1982 = vmax.f32 %v1236, %v1950
      %v1983 = vmax.f32 %v1237, %v1951
      %v1984 = vmax.f32 %v1238, %v1952
      %v1985 = vmax.f32 %v1239, %v1953
      %v1986 = vmax.f32 %v1240, %v1954
      %v1987 = vmax.f32 %v1241, %v1955
      %v1988 = vmax.f32 %v1242, %v1956
      %v1989 = vmax.f32 %v1243, %v1957
      %v1990 = vmax.f32 %v1244, %v1958
      %v1991 = vmax.f32 %v1245, %v1959
      %v1992 = vmax.f32 %v1246, %v1960
      %v1993 = vmax.f32 %v1247, %v1961
      %v1994 = vmax.f32 %v1248, %v1962
      %v1995 = vmax.f32 %v1249, %v1963
      %v1996 = vmax.f32 %v1250, %v1964
      %v1997 = vmax.f32 %v1251, %v1965
      %v1998 = vld [vmem:[%s240 + $0x1] sm:$0xff]
      %v1999 = vld [vmem:[%s240 + $0x9] sm:$0xff]
      %v2000 = vld [vmem:[%s240 + $0x19] sm:$0xff]
      %v2001 = vld [vmem:[%s240 + $0x21] sm:$0xff]
      %v2002 = vld [vmem:[%s240 + $0x31] sm:$0xff]
      %v2003 = vld [vmem:[%s240 + $0x39] sm:$0xff]
      %v2004 = vld [vmem:[%s240 + $0x49] sm:$0xff]
      %v2005 = vld [vmem:[%s240 + $0x51] sm:$0xff]
      %v2006 = vld [vmem:[%s240 + $0x61] sm:$0xff]
      %v2007 = vld [vmem:[%s240 + $0x69] sm:$0xff]
      %v2008 = vld [vmem:[%s240 + $0x79] sm:$0xff]
      %v2009 = vld [vmem:[%s240 + $0x81] sm:$0xff]
      %v2010 = vld [vmem:[%s240 + $0x91] sm:$0xff]
      %v2011 = vld [vmem:[%s240 + $0x99] sm:$0xff]
      %v2012 = vld [vmem:[%s240 + $0xa9] sm:$0xff]
      %v2013 = vld [vmem:[%s240 + $0xb1] sm:$0xff]
      %v2014 = vld [vmem:[%s240 + $0xc1] sm:$0xff]
      %v2015 = vld [vmem:[%s240 + $0xc9] sm:$0xff]
      %v2016 = vld [vmem:[%s240 + $0xd9] sm:$0xff]
      %v2017 = vld [vmem:[%s240 + $0xe1] sm:$0xff]
      %v2018 = vld [vmem:[%s240 + $0xf1] sm:$0xff]
      %v2019 = vld [vmem:[%s240 + $0xf9] sm:$0xff]
      %v2020 = vld [vmem:[%s240 + $0x109] sm:$0xff]
      %v2021 = vld [vmem:[%s240 + $0x111] sm:$0xff]
      %v2022 = vld [vmem:[%s240 + $0x121] sm:$0xff]
      %v2023 = vld [vmem:[%s240 + $0x129] sm:$0xff]
      %v2024 = vld [vmem:[%s240 + $0x139] sm:$0xff]
      %v2025 = vld [vmem:[%s240 + $0x141] sm:$0xff]
      %v2026 = vld [vmem:[%s240 + $0x151] sm:$0xff]
      %v2027 = vld [vmem:[%s240 + $0x159] sm:$0xff]
      %v2028 = vld [vmem:[%s240 + $0x169] sm:$0xff]
      %v2029 = vld [vmem:[%s240 + $0x171] sm:$0xff]
      %v2030 = vmax.f32 %v1966, %v1998
      %v2031 = vmax.f32 %v1967, %v1999
      %v2032 = vmax.f32 %v1968, %v2000
      %v2033 = vmax.f32 %v1969, %v2001
      %v2034 = vmax.f32 %v1970, %v2002
      %v2035 = vmax.f32 %v1971, %v2003
      %v2036 = vmax.f32 %v1972, %v2004
      %v2037 = vmax.f32 %v1973, %v2005
      %v2038 = vmax.f32 %v1974, %v2006
      %v2039 = vmax.f32 %v1975, %v2007
      %v2040 = vmax.f32 %v1976, %v2008
      %v2041 = vmax.f32 %v1977, %v2009
      %v2042 = vmax.f32 %v1978, %v2010
      %v2043 = vmax.f32 %v1979, %v2011
      %v2044 = vmax.f32 %v1980, %v2012
      %v2045 = vmax.f32 %v1981, %v2013
      %v2046 = vmax.f32 %v1982, %v2014
      %v2047 = vmax.f32 %v1983, %v2015
      %v2048 = vmax.f32 %v1984, %v2016
      %v2049 = vmax.f32 %v1985, %v2017
      %v2050 = vmax.f32 %v1986, %v2018
      %v2051 = vmax.f32 %v1987, %v2019
      %v2052 = vmax.f32 %v1988, %v2020
      %v2053 = vmax.f32 %v1989, %v2021
      %v2054 = vmax.f32 %v1990, %v2022
      %v2055 = vmax.f32 %v1991, %v2023
      %v2056 = vmax.f32 %v1992, %v2024
      %v2057 = vmax.f32 %v1993, %v2025
      %v2058 = vmax.f32 %v1994, %v2026
      %v2059 = vmax.f32 %v1995, %v2027
      %v2060 = vmax.f32 %v1996, %v2028
      %v2061 = vmax.f32 %v1997, %v2029
      %v2062 = vld [vmem:[%s240 + $0x3] sm:$0xff]
      %v2063 = vld [vmem:[%s240 + $0xb] sm:$0xff]
      %v2064 = vld [vmem:[%s240 + $0x1b] sm:$0xff]
      %v2065 = vld [vmem:[%s240 + $0x23] sm:$0xff]
      %v2066 = vld [vmem:[%s240 + $0x33] sm:$0xff]
      %v2067 = vld [vmem:[%s240 + $0x3b] sm:$0xff]
      %v2068 = vld [vmem:[%s240 + $0x4b] sm:$0xff]
      %v2069 = vld [vmem:[%s240 + $0x53] sm:$0xff]
      %v2070 = vld [vmem:[%s240 + $0x63] sm:$0xff]
      %v2071 = vld [vmem:[%s240 + $0x6b] sm:$0xff]
      %v2072 = vld [vmem:[%s240 + $0x7b] sm:$0xff]
      %v2073 = vld [vmem:[%s240 + $0x83] sm:$0xff]
      %v2074 = vld [vmem:[%s240 + $0x93] sm:$0xff]
      %v2075 = vld [vmem:[%s240 + $0x9b] sm:$0xff]
      %v2076 = vld [vmem:[%s240 + $0xab] sm:$0xff]
      %v2077 = vld [vmem:[%s240 + $0xb3] sm:$0xff]
      %v2078 = vld [vmem:[%s240 + $0xc3] sm:$0xff]
      %v2079 = vld [vmem:[%s240 + $0xcb] sm:$0xff]
      %v2080 = vld [vmem:[%s240 + $0xdb] sm:$0xff]
      %v2081 = vld [vmem:[%s240 + $0xe3] sm:$0xff]
      %v2082 = vld [vmem:[%s240 + $0xf3] sm:$0xff]
      %v2083 = vld [vmem:[%s240 + $0xfb] sm:$0xff]
      %v2084 = vld [vmem:[%s240 + $0x10b] sm:$0xff]
      %v2085 = vld [vmem:[%s240 + $0x113] sm:$0xff]
      %v2086 = vld [vmem:[%s240 + $0x123] sm:$0xff]
      %v2087 = vld [vmem:[%s240 + $0x12b] sm:$0xff]
      %v2088 = vld [vmem:[%s240 + $0x13b] sm:$0xff]
      %v2089 = vld [vmem:[%s240 + $0x143] sm:$0xff]
      %v2090 = vld [vmem:[%s240 + $0x153] sm:$0xff]
      %v2091 = vld [vmem:[%s240 + $0x15b] sm:$0xff]
      %v2092 = vld [vmem:[%s240 + $0x16b] sm:$0xff]
      %v2093 = vld [vmem:[%s240 + $0x173] sm:$0xff]
      %v2094 = vmax.f32 %v2030, %v2062
      %v2095 = vmax.f32 %v2031, %v2063
      %v2096 = vmax.f32 %v2032, %v2064
      %v2097 = vmax.f32 %v2033, %v2065
      %v2098 = vmax.f32 %v2034, %v2066
      %v2099 = vmax.f32 %v2035, %v2067
      %v2100 = vmax.f32 %v2036, %v2068
      %v2101 = vmax.f32 %v2037, %v2069
      %v2102 = vmax.f32 %v2038, %v2070
      %v2103 = vmax.f32 %v2039, %v2071
      %v2104 = vmax.f32 %v2040, %v2072
      %v2105 = vmax.f32 %v2041, %v2073
      %v2106 = vmax.f32 %v2042, %v2074
      %v2107 = vmax.f32 %v2043, %v2075
      %v2108 = vmax.f32 %v2044, %v2076
      %v2109 = vmax.f32 %v2045, %v2077
      %v2110 = vmax.f32 %v2046, %v2078
      %v2111 = vmax.f32 %v2047, %v2079
      %v2112 = vmax.f32 %v2048, %v2080
      %v2113 = vmax.f32 %v2049, %v2081
      %v2114 = vmax.f32 %v2050, %v2082
      %v2115 = vmax.f32 %v2051, %v2083
      %v2116 = vmax.f32 %v2052, %v2084
      %v2117 = vmax.f32 %v2053, %v2085
      %v2118 = vmax.f32 %v2054, %v2086
      %v2119 = vmax.f32 %v2055, %v2087
      %v2120 = vmax.f32 %v2056, %v2088
      %v2121 = vmax.f32 %v2057, %v2089
      %v2122 = vmax.f32 %v2058, %v2090
      %v2123 = vmax.f32 %v2059, %v2091
      %v2124 = vmax.f32 %v2060, %v2092
      %v2125 = vmax.f32 %v2061, %v2093
      %v2126 = vld [vmem:[%s240 + $0x4] sm:$0xff]
      %v2127 = vld [vmem:[%s240 + $0xc] sm:$0xff]
      %v2128 = vld [vmem:[%s240 + $0x1c] sm:$0xff]
      %v2129 = vld [vmem:[%s240 + $0x24] sm:$0xff]
      %v2130 = vld [vmem:[%s240 + $0x34] sm:$0xff]
      %v2131 = vld [vmem:[%s240 + $0x3c] sm:$0xff]
      %v2132 = vld [vmem:[%s240 + $0x4c] sm:$0xff]
      %v2133 = vld [vmem:[%s240 + $0x54] sm:$0xff]
      %v2134 = vld [vmem:[%s240 + $0x64] sm:$0xff]
      %v2135 = vld [vmem:[%s240 + $0x6c] sm:$0xff]
      %v2136 = vld [vmem:[%s240 + $0x7c] sm:$0xff]
      %v2137 = vld [vmem:[%s240 + $0x84] sm:$0xff]
      %v2138 = vld [vmem:[%s240 + $0x94] sm:$0xff]
      %v2139 = vld [vmem:[%s240 + $0x9c] sm:$0xff]
      %v2140 = vld [vmem:[%s240 + $0xac] sm:$0xff]
      %v2141 = vld [vmem:[%s240 + $0xb4] sm:$0xff]
      %v2142 = vld [vmem:[%s240 + $0xc4] sm:$0xff]
      %v2143 = vld [vmem:[%s240 + $0xcc] sm:$0xff]
      %v2144 = vld [vmem:[%s240 + $0xdc] sm:$0xff]
      %v2145 = vld [vmem:[%s240 + $0xe4] sm:$0xff]
      %v2146 = vld [vmem:[%s240 + $0xf4] sm:$0xff]
      %v2147 = vld [vmem:[%s240 + $0xfc] sm:$0xff]
      %v2148 = vld [vmem:[%s240 + $0x10c] sm:$0xff]
      %v2149 = vld [vmem:[%s240 + $0x114] sm:$0xff]
      %v2150 = vld [vmem:[%s240 + $0x124] sm:$0xff]
      %v2151 = vld [vmem:[%s240 + $0x12c] sm:$0xff]
      %v2152 = vld [vmem:[%s240 + $0x13c] sm:$0xff]
      %v2153 = vld [vmem:[%s240 + $0x144] sm:$0xff]
      %v2154 = vld [vmem:[%s240 + $0x154] sm:$0xff]
      %v2155 = vld [vmem:[%s240 + $0x15c] sm:$0xff]
      %v2156 = vld [vmem:[%s240 + $0x16c] sm:$0xff]
      %v2157 = vld [vmem:[%s240 + $0x174] sm:$0xff]
      %v2158 = vmax.f32 %v2094, %v2126
      %v2159 = vmax.f32 %v2095, %v2127
      %v2160 = vmax.f32 %v2096, %v2128
      %v2161 = vmax.f32 %v2097, %v2129
      %v2162 = vmax.f32 %v2098, %v2130
      %v2163 = vmax.f32 %v2099, %v2131
      %v2164 = vmax.f32 %v2100, %v2132
      %v2165 = vmax.f32 %v2101, %v2133
      %v2166 = vmax.f32 %v2102, %v2134
      %v2167 = vmax.f32 %v2103, %v2135
      %v2168 = vmax.f32 %v2104, %v2136
      %v2169 = vmax.f32 %v2105, %v2137
      %v2170 = vmax.f32 %v2106, %v2138
      %v2171 = vmax.f32 %v2107, %v2139
      %v2172 = vmax.f32 %v2108, %v2140
      %v2173 = vmax.f32 %v2109, %v2141
      %v2174 = vmax.f32 %v2110, %v2142
      %v2175 = vmax.f32 %v2111, %v2143
      %v2176 = vmax.f32 %v2112, %v2144
      %v2177 = vmax.f32 %v2113, %v2145
      %v2178 = vmax.f32 %v2114, %v2146
      %v2179 = vmax.f32 %v2115, %v2147
      %v2180 = vmax.f32 %v2116, %v2148
      %v2181 = vmax.f32 %v2117, %v2149
      %v2182 = vmax.f32 %v2118, %v2150
      %v2183 = vmax.f32 %v2119, %v2151
      %v2184 = vmax.f32 %v2120, %v2152
      %v2185 = vmax.f32 %v2121, %v2153
      %v2186 = vmax.f32 %v2122, %v2154
      %v2187 = vmax.f32 %v2123, %v2155
      %v2188 = vmax.f32 %v2124, %v2156
      %v2189 = vmax.f32 %v2125, %v2157
      %2190 = vst.msk [vmem:[%s240 + $0x2] sm:$0xff] %vm225, %v2158
      %2191 = vst.msk [vmem:[%s240 + $0xa] sm:$0xff] %vm225, %v2159
      %2192 = vst.msk [vmem:[%s240 + $0x1a] sm:$0xff] %vm225, %v2160
      %2193 = vst.msk [vmem:[%s240 + $0x22] sm:$0xff] %vm225, %v2161
      %2194 = vst.msk [vmem:[%s240 + $0x32] sm:$0xff] %vm225, %v2162
      %2195 = vst.msk [vmem:[%s240 + $0x3a] sm:$0xff] %vm225, %v2163
      %2196 = vst.msk [vmem:[%s240 + $0x4a] sm:$0xff] %vm225, %v2164
      %2197 = vst.msk [vmem:[%s240 + $0x52] sm:$0xff] %vm225, %v2165
      %2198 = vst.msk [vmem:[%s240 + $0x62] sm:$0xff] %vm225, %v2166
      %2199 = vst.msk [vmem:[%s240 + $0x6a] sm:$0xff] %vm225, %v2167
      %2200 = vst.msk [vmem:[%s240 + $0x7a] sm:$0xff] %vm225, %v2168
      %2201 = vst.msk [vmem:[%s240 + $0x82] sm:$0xff] %vm225, %v2169
      %2202 = vst.msk [vmem:[%s240 + $0x92] sm:$0xff] %vm225, %v2170
      %2203 = vst.msk [vmem:[%s240 + $0x9a] sm:$0xff] %vm225, %v2171
      %2204 = vst.msk [vmem:[%s240 + $0xaa] sm:$0xff] %vm225, %v2172
      %2205 = vst.msk [vmem:[%s240 + $0xb2] sm:$0xff] %vm225, %v2173
      %2206 = vst.msk [vmem:[%s240 + $0xc2] sm:$0xff] %vm225, %v2174
      %2207 = vst.msk [vmem:[%s240 + $0xca] sm:$0xff] %vm225, %v2175
      %2208 = vst.msk [vmem:[%s240 + $0xda] sm:$0xff] %vm225, %v2176
      %2209 = vst.msk [vmem:[%s240 + $0xe2] sm:$0xff] %vm225, %v2177
      %2210 = vst.msk [vmem:[%s240 + $0xf2] sm:$0xff] %vm225, %v2178
      %2211 = vst.msk [vmem:[%s240 + $0xfa] sm:$0xff] %vm225, %v2179
      %2212 = vst.msk [vmem:[%s240 + $0x10a] sm:$0xff] %vm225, %v2180
      %2213 = vst.msk [vmem:[%s240 + $0x112] sm:$0xff] %vm225, %v2181
      %2214 = vst.msk [vmem:[%s240 + $0x122] sm:$0xff] %vm225, %v2182
      %2215 = vst.msk [vmem:[%s240 + $0x12a] sm:$0xff] %vm225, %v2183
      %2216 = vst.msk [vmem:[%s240 + $0x13a] sm:$0xff] %vm225, %v2184
      %2217 = vst.msk [vmem:[%s240 + $0x142] sm:$0xff] %vm225, %v2185
      %2218 = vst.msk [vmem:[%s240 + $0x152] sm:$0xff] %vm225, %v2186
      %2219 = vst.msk [vmem:[%s240 + $0x15a] sm:$0xff] %vm225, %v2187
      %2220 = vst.msk [vmem:[%s240 + $0x16a] sm:$0xff] %vm225, %v2188
      %2221 = vst.msk [vmem:[%s240 + $0x172] sm:$0xff] %vm225, %v2189
      %v2222 = vld [vmem:[#allocation2 + $0x2] sm:$0xff]
      %v2223 = vld [vmem:[#allocation2 + $0xa] sm:$0xff]
      %v2224 = vld [vmem:[#allocation2 + $0x1a] sm:$0xff]
      %v2225 = vld [vmem:[#allocation2 + $0x22] sm:$0xff]
      %v2226 = vld [vmem:[#allocation2 + $0x32] sm:$0xff]
      %v2227 = vld [vmem:[#allocation2 + $0x3a] sm:$0xff]
      %v2228 = vld [vmem:[#allocation2 + $0x4a] sm:$0xff]
      %v2229 = vld [vmem:[#allocation2 + $0x52] sm:$0xff]
      %v2230 = vld [vmem:[#allocation2 + $0x62] sm:$0xff]
      %v2231 = vld [vmem:[#allocation2 + $0x6a] sm:$0xff]
      %v2232 = vld [vmem:[#allocation2 + $0x7a] sm:$0xff]
      %v2233 = vld [vmem:[#allocation2 + $0x82] sm:$0xff]
      %v2234 = vld [vmem:[#allocation2 + $0x92] sm:$0xff]
      %v2235 = vld [vmem:[#allocation2 + $0x9a] sm:$0xff]
      %v2236 = vld [vmem:[#allocation2 + $0xaa] sm:$0xff]
      %v2237 = vld [vmem:[#allocation2 + $0xb2] sm:$0xff]
      %v2238 = vld [vmem:[#allocation2 + $0xc2] sm:$0xff]
      %v2239 = vld [vmem:[#allocation2 + $0xca] sm:$0xff]
      %v2240 = vld [vmem:[#allocation2 + $0xda] sm:$0xff]
      %v2241 = vld [vmem:[#allocation2 + $0xe2] sm:$0xff]
      %v2242 = vld [vmem:[#allocation2 + $0xf2] sm:$0xff]
      %v2243 = vld [vmem:[#allocation2 + $0xfa] sm:$0xff]
      %v2244 = vld [vmem:[#allocation2 + $0x10a] sm:$0xff]
      %v2245 = vld [vmem:[#allocation2 + $0x112] sm:$0xff]
      %v2246 = vld [vmem:[#allocation2 + $0x122] sm:$0xff]
      %v2247 = vld [vmem:[#allocation2 + $0x12a] sm:$0xff]
      %v2248 = vld [vmem:[#allocation2 + $0x13a] sm:$0xff]
      %v2249 = vld [vmem:[#allocation2 + $0x142] sm:$0xff]
      %v2250 = vld [vmem:[#allocation2 + $0x152] sm:$0xff]
      %v2251 = vld [vmem:[#allocation2 + $0x15a] sm:$0xff]
      %v2252 = vld [vmem:[#allocation2 + $0x16a] sm:$0xff]
      %v2253 = vld [vmem:[#allocation2 + $0x172] sm:$0xff]
      %v2254 = vmax.f32 %v2158, %v2222
      %v2255 = vmax.f32 %v2159, %v2223
      %v2256 = vmax.f32 %v2160, %v2224
      %v2257 = vmax.f32 %v2161, %v2225
      %v2258 = vmax.f32 %v2162, %v2226
      %v2259 = vmax.f32 %v2163, %v2227
      %v2260 = vmax.f32 %v2164, %v2228
      %v2261 = vmax.f32 %v2165, %v2229
      %v2262 = vmax.f32 %v2166, %v2230
      %v2263 = vmax.f32 %v2167, %v2231
      %v2264 = vmax.f32 %v2168, %v2232
      %v2265 = vmax.f32 %v2169, %v2233
      %v2266 = vmax.f32 %v2170, %v2234
      %v2267 = vmax.f32 %v2171, %v2235
      %v2268 = vmax.f32 %v2172, %v2236
      %v2269 = vmax.f32 %v2173, %v2237
      %v2270 = vmax.f32 %v2174, %v2238
      %v2271 = vmax.f32 %v2175, %v2239
      %v2272 = vmax.f32 %v2176, %v2240
      %v2273 = vmax.f32 %v2177, %v2241
      %v2274 = vmax.f32 %v2178, %v2242
      %v2275 = vmax.f32 %v2179, %v2243
      %v2276 = vmax.f32 %v2180, %v2244
      %v2277 = vmax.f32 %v2181, %v2245
      %v2278 = vmax.f32 %v2182, %v2246
      %v2279 = vmax.f32 %v2183, %v2247
      %v2280 = vmax.f32 %v2184, %v2248
      %v2281 = vmax.f32 %v2185, %v2249
      %v2282 = vmax.f32 %v2186, %v2250
      %v2283 = vmax.f32 %v2187, %v2251
      %v2284 = vmax.f32 %v2188, %v2252
      %v2285 = vmax.f32 %v2189, %v2253
      %v2286 = vld [vmem:[%s1057 + $0x2] sm:$0xff]
      %v2287 = vld [vmem:[%s1057 + $0xa] sm:$0xff]
      %v2288 = vld [vmem:[%s1057 + $0x1a] sm:$0xff]
      %v2289 = vld [vmem:[%s1057 + $0x22] sm:$0xff]
      %v2290 = vld [vmem:[%s1057 + $0x32] sm:$0xff]
      %v2291 = vld [vmem:[%s1057 + $0x3a] sm:$0xff]
      %v2292 = vld [vmem:[%s1057 + $0x4a] sm:$0xff]
      %v2293 = vld [vmem:[%s1057 + $0x52] sm:$0xff]
      %v2294 = vld [vmem:[%s1057 + $0x62] sm:$0xff]
      %v2295 = vld [vmem:[%s1057 + $0x6a] sm:$0xff]
      %v2296 = vld [vmem:[%s1057 + $0x7a] sm:$0xff]
      %v2297 = vld [vmem:[%s1057 + $0x82] sm:$0xff]
      %v2298 = vld [vmem:[%s1057 + $0x92] sm:$0xff]
      %v2299 = vld [vmem:[%s1057 + $0x9a] sm:$0xff]
      %v2300 = vld [vmem:[%s1057 + $0xaa] sm:$0xff]
      %v2301 = vld [vmem:[%s1057 + $0xb2] sm:$0xff]
      %v2302 = vld [vmem:[%s1057 + $0xc2] sm:$0xff]
      %v2303 = vld [vmem:[%s1057 + $0xca] sm:$0xff]
      %v2304 = vld [vmem:[%s1057 + $0xda] sm:$0xff]
      %v2305 = vld [vmem:[%s1057 + $0xe2] sm:$0xff]
      %v2306 = vld [vmem:[%s1057 + $0xf2] sm:$0xff]
      %v2307 = vld [vmem:[%s1057 + $0xfa] sm:$0xff]
      %v2308 = vld [vmem:[%s1057 + $0x10a] sm:$0xff]
      %v2309 = vld [vmem:[%s1057 + $0x112] sm:$0xff]
      %v2310 = vld [vmem:[%s1057 + $0x122] sm:$0xff]
      %v2311 = vld [vmem:[%s1057 + $0x12a] sm:$0xff]
      %v2312 = vld [vmem:[%s1057 + $0x13a] sm:$0xff]
      %v2313 = vld [vmem:[%s1057 + $0x142] sm:$0xff]
      %v2314 = vld [vmem:[%s1057 + $0x152] sm:$0xff]
      %v2315 = vld [vmem:[%s1057 + $0x15a] sm:$0xff]
      %v2316 = vld [vmem:[%s1057 + $0x16a] sm:$0xff]
      %v2317 = vld [vmem:[%s1057 + $0x172] sm:$0xff]
      %v2318 = vmax.f32 %v2254, %v2286
      %v2319 = vmax.f32 %v2255, %v2287
      %v2320 = vmax.f32 %v2256, %v2288
      %v2321 = vmax.f32 %v2257, %v2289
      %v2322 = vmax.f32 %v2258, %v2290
      %v2323 = vmax.f32 %v2259, %v2291
      %v2324 = vmax.f32 %v2260, %v2292
      %v2325 = vmax.f32 %v2261, %v2293
      %v2326 = vmax.f32 %v2262, %v2294
      %v2327 = vmax.f32 %v2263, %v2295
      %v2328 = vmax.f32 %v2264, %v2296
      %v2329 = vmax.f32 %v2265, %v2297
      %v2330 = vmax.f32 %v2266, %v2298
      %v2331 = vmax.f32 %v2267, %v2299
      %v2332 = vmax.f32 %v2268, %v2300
      %v2333 = vmax.f32 %v2269, %v2301
      %v2334 = vmax.f32 %v2270, %v2302
      %v2335 = vmax.f32 %v2271, %v2303
      %v2336 = vmax.f32 %v2272, %v2304
      %v2337 = vmax.f32 %v2273, %v2305
      %v2338 = vmax.f32 %v2274, %v2306
      %v2339 = vmax.f32 %v2275, %v2307
      %v2340 = vmax.f32 %v2276, %v2308
      %v2341 = vmax.f32 %v2277, %v2309
      %v2342 = vmax.f32 %v2278, %v2310
      %v2343 = vmax.f32 %v2279, %v2311
      %v2344 = vmax.f32 %v2280, %v2312
      %v2345 = vmax.f32 %v2281, %v2313
      %v2346 = vmax.f32 %v2282, %v2314
      %v2347 = vmax.f32 %v2283, %v2315
      %v2348 = vmax.f32 %v2284, %v2316
      %v2349 = vmax.f32 %v2285, %v2317
      %v2350 = vld [vmem:[%s1122 + $0x2] sm:$0xff]
      %v2351 = vld [vmem:[%s1122 + $0xa] sm:$0xff]
      %v2352 = vld [vmem:[%s1122 + $0x1a] sm:$0xff]
      %v2353 = vld [vmem:[%s1122 + $0x22] sm:$0xff]
      %v2354 = vld [vmem:[%s1122 + $0x32] sm:$0xff]
      %v2355 = vld [vmem:[%s1122 + $0x3a] sm:$0xff]
      %v2356 = vld [vmem:[%s1122 + $0x4a] sm:$0xff]
      %v2357 = vld [vmem:[%s1122 + $0x52] sm:$0xff]
      %v2358 = vld [vmem:[%s1122 + $0x62] sm:$0xff]
      %v2359 = vld [vmem:[%s1122 + $0x6a] sm:$0xff]
      %v2360 = vld [vmem:[%s1122 + $0x7a] sm:$0xff]
      %v2361 = vld [vmem:[%s1122 + $0x82] sm:$0xff]
      %v2362 = vld [vmem:[%s1122 + $0x92] sm:$0xff]
      %v2363 = vld [vmem:[%s1122 + $0x9a] sm:$0xff]
      %v2364 = vld [vmem:[%s1122 + $0xaa] sm:$0xff]
      %v2365 = vld [vmem:[%s1122 + $0xb2] sm:$0xff]
      %v2366 = vld [vmem:[%s1122 + $0xc2] sm:$0xff]
      %v2367 = vld [vmem:[%s1122 + $0xca] sm:$0xff]
      %v2368 = vld [vmem:[%s1122 + $0xda] sm:$0xff]
      %v2369 = vld [vmem:[%s1122 + $0xe2] sm:$0xff]
      %v2370 = vld [vmem:[%s1122 + $0xf2] sm:$0xff]
      %v2371 = vld [vmem:[%s1122 + $0xfa] sm:$0xff]
      %v2372 = vld [vmem:[%s1122 + $0x10a] sm:$0xff]
      %v2373 = vld [vmem:[%s1122 + $0x112] sm:$0xff]
      %v2374 = vld [vmem:[%s1122 + $0x122] sm:$0xff]
      %v2375 = vld [vmem:[%s1122 + $0x12a] sm:$0xff]
      %v2376 = vld [vmem:[%s1122 + $0x13a] sm:$0xff]
      %v2377 = vld [vmem:[%s1122 + $0x142] sm:$0xff]
      %v2378 = vld [vmem:[%s1122 + $0x152] sm:$0xff]
      %v2379 = vld [vmem:[%s1122 + $0x15a] sm:$0xff]
      %v2380 = vld [vmem:[%s1122 + $0x16a] sm:$0xff]
      %v2381 = vld [vmem:[%s1122 + $0x172] sm:$0xff]
      %v2382 = vmax.f32 %v2318, %v2350
      %v2383 = vmax.f32 %v2319, %v2351
      %v2384 = vmax.f32 %v2320, %v2352
      %v2385 = vmax.f32 %v2321, %v2353
      %v2386 = vmax.f32 %v2322, %v2354
      %v2387 = vmax.f32 %v2323, %v2355
      %v2388 = vmax.f32 %v2324, %v2356
      %v2389 = vmax.f32 %v2325, %v2357
      %v2390 = vmax.f32 %v2326, %v2358
      %v2391 = vmax.f32 %v2327, %v2359
      %v2392 = vmax.f32 %v2328, %v2360
      %v2393 = vmax.f32 %v2329, %v2361
      %v2394 = vmax.f32 %v2330, %v2362
      %v2395 = vmax.f32 %v2331, %v2363
      %v2396 = vmax.f32 %v2332, %v2364
      %v2397 = vmax.f32 %v2333, %v2365
      %v2398 = vmax.f32 %v2334, %v2366
      %v2399 = vmax.f32 %v2335, %v2367
      %v2400 = vmax.f32 %v2336, %v2368
      %v2401 = vmax.f32 %v2337, %v2369
      %v2402 = vmax.f32 %v2338, %v2370
      %v2403 = vmax.f32 %v2339, %v2371
      %v2404 = vmax.f32 %v2340, %v2372
      %v2405 = vmax.f32 %v2341, %v2373
      %v2406 = vmax.f32 %v2342, %v2374
      %v2407 = vmax.f32 %v2343, %v2375
      %v2408 = vmax.f32 %v2344, %v2376
      %v2409 = vmax.f32 %v2345, %v2377
      %v2410 = vmax.f32 %v2346, %v2378
      %v2411 = vmax.f32 %v2347, %v2379
      %v2412 = vmax.f32 %v2348, %v2380
      %v2413 = vmax.f32 %v2349, %v2381
      %v2414 = vld [vmem:[%s1187 + $0x2] sm:$0xff]
      %v2415 = vld [vmem:[%s1187 + $0xa] sm:$0xff]
      %v2416 = vld [vmem:[%s1187 + $0x1a] sm:$0xff]
      %v2417 = vld [vmem:[%s1187 + $0x22] sm:$0xff]
      %v2418 = vld [vmem:[%s1187 + $0x32] sm:$0xff]
      %v2419 = vld [vmem:[%s1187 + $0x3a] sm:$0xff]
      %v2420 = vld [vmem:[%s1187 + $0x4a] sm:$0xff]
      %v2421 = vld [vmem:[%s1187 + $0x52] sm:$0xff]
      %v2422 = vld [vmem:[%s1187 + $0x62] sm:$0xff]
      %v2423 = vld [vmem:[%s1187 + $0x6a] sm:$0xff]
      %v2424 = vld [vmem:[%s1187 + $0x7a] sm:$0xff]
      %v2425 = vld [vmem:[%s1187 + $0x82] sm:$0xff]
      %v2426 = vld [vmem:[%s1187 + $0x92] sm:$0xff]
      %v2427 = vld [vmem:[%s1187 + $0x9a] sm:$0xff]
      %v2428 = vld [vmem:[%s1187 + $0xaa] sm:$0xff]
      %v2429 = vld [vmem:[%s1187 + $0xb2] sm:$0xff]
      %v2430 = vld [vmem:[%s1187 + $0xc2] sm:$0xff]
      %v2431 = vld [vmem:[%s1187 + $0xca] sm:$0xff]
      %v2432 = vld [vmem:[%s1187 + $0xda] sm:$0xff]
      %v2433 = vld [vmem:[%s1187 + $0xe2] sm:$0xff]
      %v2434 = vld [vmem:[%s1187 + $0xf2] sm:$0xff]
      %v2435 = vld [vmem:[%s1187 + $0xfa] sm:$0xff]
      %v2436 = vld [vmem:[%s1187 + $0x10a] sm:$0xff]
      %v2437 = vld [vmem:[%s1187 + $0x112] sm:$0xff]
      %v2438 = vld [vmem:[%s1187 + $0x122] sm:$0xff]
      %v2439 = vld [vmem:[%s1187 + $0x12a] sm:$0xff]
      %v2440 = vld [vmem:[%s1187 + $0x13a] sm:$0xff]
      %v2441 = vld [vmem:[%s1187 + $0x142] sm:$0xff]
      %v2442 = vld [vmem:[%s1187 + $0x152] sm:$0xff]
      %v2443 = vld [vmem:[%s1187 + $0x15a] sm:$0xff]
      %v2444 = vld [vmem:[%s1187 + $0x16a] sm:$0xff]
      %v2445 = vld [vmem:[%s1187 + $0x172] sm:$0xff]
      %v2446 = vmax.f32 %v2382, %v2414
      %v2447 = vmax.f32 %v2383, %v2415
      %v2448 = vmax.f32 %v2384, %v2416
      %v2449 = vmax.f32 %v2385, %v2417
      %v2450 = vmax.f32 %v2386, %v2418
      %v2451 = vmax.f32 %v2387, %v2419
      %v2452 = vmax.f32 %v2388, %v2420
      %v2453 = vmax.f32 %v2389, %v2421
      %v2454 = vmax.f32 %v2390, %v2422
      %v2455 = vmax.f32 %v2391, %v2423
      %v2456 = vmax.f32 %v2392, %v2424
      %v2457 = vmax.f32 %v2393, %v2425
      %v2458 = vmax.f32 %v2394, %v2426
      %v2459 = vmax.f32 %v2395, %v2427
      %v2460 = vmax.f32 %v2396, %v2428
      %v2461 = vmax.f32 %v2397, %v2429
      %v2462 = vmax.f32 %v2398, %v2430
      %v2463 = vmax.f32 %v2399, %v2431
      %v2464 = vmax.f32 %v2400, %v2432
      %v2465 = vmax.f32 %v2401, %v2433
      %v2466 = vmax.f32 %v2402, %v2434
      %v2467 = vmax.f32 %v2403, %v2435
      %v2468 = vmax.f32 %v2404, %v2436
      %v2469 = vmax.f32 %v2405, %v2437
      %v2470 = vmax.f32 %v2406, %v2438
      %v2471 = vmax.f32 %v2407, %v2439
      %v2472 = vmax.f32 %v2408, %v2440
      %v2473 = vmax.f32 %v2409, %v2441
      %v2474 = vmax.f32 %v2410, %v2442
      %v2475 = vmax.f32 %v2411, %v2443
      %v2476 = vmax.f32 %v2412, %v2444
      %v2477 = vmax.f32 %v2413, %v2445
      %v2478 = vld [vmem:[%s3 + $0x4] sm:$0x3]
      %v2480 = vsel %vm225, %v2446, 0
      %v2483 = vsel %vm225, %v2447, 0
      %v2486 = vsel %vm225, %v2448, 0
      %v2489 = vsel %vm225, %v2449, 0
      %v2492 = vsel %vm225, %v2450, 0
      %v2495 = vsel %vm225, %v2451, 0
      %v2498 = vsel %vm225, %v2452, 0
      %v2501 = vsel %vm225, %v2453, 0
      %v2504 = vsel %vm225, %v2454, 0
      %v2507 = vsel %vm225, %v2455, 0
      %v2510 = vsel %vm225, %v2456, 0
      %v2513 = vsel %vm225, %v2457, 0
      %v2516 = vsel %vm225, %v2458, 0
      %v2519 = vsel %vm225, %v2459, 0
      %v2522 = vsel %vm225, %v2460, 0
      %v2525 = vsel %vm225, %v2461, 0
      %v2528 = vsel %vm225, %v2462, 0
      %v2531 = vsel %vm225, %v2463, 0
      %v2534 = vsel %vm225, %v2464, 0
      %v2537 = vsel %vm225, %v2465, 0
      %v2540 = vsel %vm225, %v2466, 0
      %v2543 = vsel %vm225, %v2467, 0
      %v2546 = vsel %vm225, %v2468, 0
      %v2549 = vsel %vm225, %v2469, 0
      %v2552 = vsel %vm225, %v2470, 0
      %v2555 = vsel %vm225, %v2471, 0
      %v2558 = vsel %vm225, %v2472, 0
      %v2561 = vsel %vm225, %v2473, 0
      %v2564 = vsel %vm225, %v2474, 0
      %v2567 = vsel %vm225, %v2475, 0
      %v2570 = vsel %vm225, %v2476, 0
      %v2573 = vsel %vm225, %v2477, 0
      %v2576 = vsel %vm1349, %v2478, 0
      %2578 = vmatprep.subr.mxu0 0.0
      %2579 = vmatpush1.msra.mxu0 %v2576
      %2580 = vmatprep.subr.mxu0 0.0
      %2581 = vmatpush1.msra.mxu0 0.0
      %2582 = vmatprep.subr.mxu0 0.0
      %2583 = vmatpush1.msra.mxu0 0.0
      %2584 = vmatprep.subr.mxu0 0.0
      %2585 = vmatpush1.msra.mxu0 0.0
      %2586 = vmatprep.subr.mxu0 0.0
      %2587 = vmatpush1.msra.mxu0 0.0
      %2588 = vmatprep.subr.mxu0 0.0
      %2589 = vmatpush1.msra.mxu0 0.0
      %2590 = vmatprep.subr.mxu0 0.0
      %2591 = vmatpush1.msra.mxu0 0.0
      %2592 = vmatprep.subr.mxu0 0.0
      %2593 = vmatpush1.msra.mxu0 0.0
      %2594 = vmatprep.subr.mxu0 0.0
      %2595 = vmatpush1.msra.mxu0 0.0
      %2596 = vmatprep.subr.mxu0 0.0
      %2597 = vmatpush1.msra.mxu0 0.0
      %2598 = vmatprep.subr.mxu0 0.0
      %2599 = vmatpush1.msra.mxu0 0.0
      %2600 = vmatprep.subr.mxu0 0.0
      %2601 = vmatpush1.msra.mxu0 0.0
      %2602 = vmatprep.subr.mxu0 0.0
      %2603 = vmatpush1.msra.mxu0 0.0
      %2604 = vmatprep.subr.mxu0 0.0
      %2605 = vmatpush1.msra.mxu0 0.0
      %2606 = vmatprep.subr.mxu0 0.0
      %2607 = vmatpush1.msra.mxu0 0.0
      %2608 = vmatprep.subr.mxu0 0.0
      %2609 = vmatpush1.msra.mxu0 0.0
      %2610 = vmatprep.subr.mxu0 0.0
      %2611 = vmatpush1.msra.mxu0 0.0
      %2612 = vmatprep.subr.mxu0 0.0
      %2613 = vmatpush1.msra.mxu0 0.0
      %2614 = vmatprep.subr.mxu0 0.0
      %2615 = vmatpush1.msra.mxu0 0.0
      %2616 = vmatprep.subr.mxu0 0.0
      %2617 = vmatpush1.msra.mxu0 0.0
      %2618 = vmatprep.subr.mxu0 0.0
      %2619 = vmatpush1.msra.mxu0 0.0
      %2620 = vmatprep.subr.mxu0 0.0
      %2621 = vmatpush1.msra.mxu0 0.0
      %2622 = vmatprep.subr.mxu0 0.0
      %2623 = vmatpush1.msra.mxu0 0.0
      %2624 = vmatprep.subr.mxu0 0.0
      %2625 = vmatpush1.msra.mxu0 0.0
      %2626 = vmatprep.subr.mxu0 0.0
      %2627 = vmatpush1.msra.mxu0 0.0
      %2628 = vmatprep.subr.mxu0 0.0
      %2629 = vmatpush1.msra.mxu0 0.0
      %2630 = vmatprep.subr.mxu0 0.0
      %2631 = vmatpush1.msra.mxu0 0.0
      %2632 = vmatprep.subr.mxu0 0.0
      %2633 = vmatpush1.msra.mxu0 0.0
      %2634 = vmatprep.subr.mxu0 0.0
      %2635 = vmatpush1.msra.mxu0 0.0
      %2636 = vmatprep.subr.mxu0 0.0
      %2637 = vmatpush1.msra.mxu0 0.0
      %2638 = vmatprep.subr.mxu0 0.0
      %2639 = vmatpush1.msra.mxu0 0.0
      %2640 = vmatprep.subr.mxu0 0.0
      %2641 = vmatpush1.msra.mxu0 0.0
      %2642 = vmatprep.mubr.f32.mxu0 0.0
      %2643 = vmatmul.mubr.f32.gmra.mrb[0].mxu0 %v2480
      %v2644 = vpop.f32.mrb[0].mxu0
      %v2645 = vadd.f32 0.0, %v2644
      %v2646 = vpop.f32.mrb[0].mxu0
      %2647 = vmatprep.mubr.f32.mxu0 0.0
      %2648 = vmatmul.mubr.f32.gmra.mrb[0].mxu0 %v2483
      %v2649 = vpop.f32.mrb[0].mxu0
      %v2650 = vadd.f32 0.0, %v2649
      %v2651 = vpop.f32.mrb[0].mxu0
      %2652 = vmatprep.mubr.f32.mxu0 0.0
      %2653 = vmatmul.mubr.f32.gmra.mrb[0].mxu0 %v2486
      %v2654 = vpop.f32.mrb[0].mxu0
      %v2655 = vadd.f32 0.0, %v2654
      %v2656 = vpop.f32.mrb[0].mxu0
      %2657 = vmatprep.mubr.f32.mxu0 0.0
      %2658 = vmatmul.mubr.f32.gmra.mrb[0].mxu0 %v2489
      %v2659 = vpop.f32.mrb[0].mxu0
      %v2660 = vadd.f32 0.0, %v2659
      %v2661 = vpop.f32.mrb[0].mxu0
      %2662 = vmatprep.mubr.f32.mxu0 0.0
      %2663 = vmatmul.mubr.f32.gmra.mrb[0].mxu0 %v2492
      %v2664 = vpop.f32.mrb[0].mxu0
      %v2665 = vadd.f32 0.0, %v2664
      %v2666 = vpop.f32.mrb[0].mxu0
      %2667 = vmatprep.mubr.f32.mxu0 0.0
      %2668 = vmatmul.mubr.f32.gmra.mrb[0].mxu0 %v2495
      %v2669 = vpop.f32.mrb[0].mxu0
      %v2670 = vadd.f32 0.0, %v2669
      %v2671 = vpop.f32.mrb[0].mxu0
      %2672 = vmatprep.mubr.f32.mxu0 0.0
      %2673 = vmatmul.mubr.f32.gmra.mrb[0].mxu0 %v2498
      %v2674 = vpop.f32.mrb[0].mxu0
      %v2675 = vadd.f32 0.0, %v2674
      %v2676 = vpop.f32.mrb[0].mxu0
      %2677 = vmatprep.mubr.f32.mxu0 0.0
      %2678 = vmatmul.mubr.f32.gmra.mrb[0].mxu0 %v2501
      %v2679 = vpop.f32.mrb[0].mxu0
      %v2680 = vadd.f32 0.0, %v2679
      %v2681 = vpop.f32.mrb[0].mxu0
      %2682 = vmatprep.mubr.f32.mxu0 0.0
      %2683 = vmatmul.mubr.f32.gmra.mrb[0].mxu0 %v2504
      %v2684 = vpop.f32.mrb[0].mxu0
      %v2685 = vadd.f32 0.0, %v2684
      %v2686 = vpop.f32.mrb[0].mxu0
      %2687 = vmatprep.mubr.f32.mxu0 0.0
      %2688 = vmatmul.mubr.f32.gmra.mrb[0].mxu0 %v2507
      %v2689 = vpop.f32.mrb[0].mxu0
      %v2690 = vadd.f32 0.0, %v2689
      %v2691 = vpop.f32.mrb[0].mxu0
      %2692 = vmatprep.mubr.f32.mxu0 0.0
      %2693 = vmatmul.mubr.f32.gmra.mrb[0].mxu0 %v2510
      %v2694 = vpop.f32.mrb[0].mxu0
      %v2695 = vadd.f32 0.0, %v2694
      %v2696 = vpop.f32.mrb[0].mxu0
      %2697 = vmatprep.mubr.f32.mxu0 0.0
      %2698 = vmatmul.mubr.f32.gmra.mrb[0].mxu0 %v2513
      %v2699 = vpop.f32.mrb[0].mxu0
      %v2700 = vadd.f32 0.0, %v2699
      %v2701 = vpop.f32.mrb[0].mxu0
      %2702 = vmatprep.mubr.f32.mxu0 0.0
      %2703 = vmatmul.mubr.f32.gmra.mrb[0].mxu0 %v2516
      %v2704 = vpop.f32.mrb[0].mxu0
      %v2705 = vadd.f32 0.0, %v2704
      %v2706 = vpop.f32.mrb[0].mxu0
      %2707 = vmatprep.mubr.f32.mxu0 0.0
      %2708 = vmatmul.mubr.f32.gmra.mrb[0].mxu0 %v2519
      %v2709 = vpop.f32.mrb[0].mxu0
      %v2710 = vadd.f32 0.0, %v2709
      %v2711 = vpop.f32.mrb[0].mxu0
      %2712 = vmatprep.mubr.f32.mxu0 0.0
      %2713 = vmatmul.mubr.f32.gmra.mrb[0].mxu0 %v2522
      %v2714 = vpop.f32.mrb[0].mxu0
      %v2715 = vadd.f32 0.0, %v2714
      %v2716 = vpop.f32.mrb[0].mxu0
      %2717 = vmatprep.mubr.f32.mxu0 0.0
      %2718 = vmatmul.mubr.f32.gmra.mrb[0].mxu0 %v2525
      %v2719 = vpop.f32.mrb[0].mxu0
      %v2720 = vadd.f32 0.0, %v2719
      %v2721 = vpop.f32.mrb[0].mxu0
      %2722 = vmatprep.mubr.f32.mxu0 0.0
      %2723 = vmatmul.mubr.f32.gmra.mrb[0].mxu0 %v2528
      %v2724 = vpop.f32.mrb[0].mxu0
      %v2725 = vadd.f32 0.0, %v2724
      %v2726 = vpop.f32.mrb[0].mxu0
      %2727 = vmatprep.mubr.f32.mxu0 0.0
      %2728 = vmatmul.mubr.f32.gmra.mrb[0].mxu0 %v2531
      %v2729 = vpop.f32.mrb[0].mxu0
      %v2730 = vadd.f32 0.0, %v2729
      %v2731 = vpop.f32.mrb[0].mxu0
      %2732 = vmatprep.mubr.f32.mxu0 0.0
      %2733 = vmatmul.mubr.f32.gmra.mrb[0].mxu0 %v2534
      %v2734 = vpop.f32.mrb[0].mxu0
      %v2735 = vadd.f32 0.0, %v2734
      %v2736 = vpop.f32.mrb[0].mxu0
      %2737 = vmatprep.mubr.f32.mxu0 0.0
      %2738 = vmatmul.mubr.f32.gmra.mrb[0].mxu0 %v2537
      %v2739 = vpop.f32.mrb[0].mxu0
      %v2740 = vadd.f32 0.0, %v2739
      %v2741 = vpop.f32.mrb[0].mxu0
      %2742 = vmatprep.mubr.f32.mxu0 0.0
      %2743 = vmatmul.mubr.f32.gmra.mrb[0].mxu0 %v2540
      %v2744 = vpop.f32.mrb[0].mxu0
      %v2745 = vadd.f32 0.0, %v2744
      %v2746 = vpop.f32.mrb[0].mxu0
      %2747 = vmatprep.mubr.f32.mxu0 0.0
      %2748 = vmatmul.mubr.f32.gmra.mrb[0].mxu0 %v2543
      %v2749 = vpop.f32.mrb[0].mxu0
      %v2750 = vadd.f32 0.0, %v2749
      %v2751 = vpop.f32.mrb[0].mxu0
      %2752 = vmatprep.mubr.f32.mxu0 0.0
      %2753 = vmatmul.mubr.f32.gmra.mrb[0].mxu0 %v2546
      %v2754 = vpop.f32.mrb[0].mxu0
      %v2755 = vadd.f32 0.0, %v2754
      %v2756 = vpop.f32.mrb[0].mxu0
      %2757 = vmatprep.mubr.f32.mxu0 0.0
      %2758 = vmatmul.mubr.f32.gmra.mrb[0].mxu0 %v2549
      %v2759 = vpop.f32.mrb[0].mxu0
      %v2760 = vadd.f32 0.0, %v2759
      %v2761 = vpop.f32.mrb[0].mxu0
      %2762 = vmatprep.mubr.f32.mxu0 0.0
      %2763 = vmatmul.mubr.f32.gmra.mrb[0].mxu0 %v2552
      %v2764 = vpop.f32.mrb[0].mxu0
      %v2765 = vadd.f32 0.0, %v2764
      %v2766 = vpop.f32.mrb[0].mxu0
      %2767 = vmatprep.mubr.f32.mxu0 0.0
      %2768 = vmatmul.mubr.f32.gmra.mrb[0].mxu0 %v2555
      %v2769 = vpop.f32.mrb[0].mxu0
      %v2770 = vadd.f32 0.0, %v2769
      %v2771 = vpop.f32.mrb[0].mxu0
      %2772 = vmatprep.mubr.f32.mxu0 0.0
      %2773 = vmatmul.mubr.f32.gmra.mrb[0].mxu0 %v2558
      %v2774 = vpop.f32.mrb[0].mxu0
      %v2775 = vadd.f32 0.0, %v2774
      %v2776 = vpop.f32.mrb[0].mxu0
      %2777 = vmatprep.mubr.f32.mxu0 0.0
      %2778 = vmatmul.mubr.f32.gmra.mrb[0].mxu0 %v2561
      %v2779 = vpop.f32.mrb[0].mxu0
      %v2780 = vadd.f32 0.0, %v2779
      %v2781 = vpop.f32.mrb[0].mxu0
      %2782 = vmatprep.mubr.f32.mxu0 0.0
      %2783 = vmatmul.mubr.f32.gmra.mrb[0].mxu0 %v2564
      %v2784 = vpop.f32.mrb[0].mxu0
      %v2785 = vadd.f32 0.0, %v2784
      %v2786 = vpop.f32.mrb[0].mxu0
      %2787 = vmatprep.mubr.f32.mxu0 0.0
      %2788 = vmatmul.mubr.f32.gmra.mrb[0].mxu0 %v2567
      %v2789 = vpop.f32.mrb[0].mxu0
      %v2790 = vadd.f32 0.0, %v2789
      %v2791 = vpop.f32.mrb[0].mxu0
      %2792 = vmatprep.mubr.f32.mxu0 0.0
      %2793 = vmatmul.mubr.f32.gmra.mrb[0].mxu0 %v2570
      %v2794 = vpop.f32.mrb[0].mxu0
      %v2795 = vadd.f32 0.0, %v2794
      %v2796 = vpop.f32.mrb[0].mxu0
      %2797 = vmatprep.mubr.f32.mxu0 0.0
      %2798 = vmatmul.mubr.f32.gmra.mrb[0].mxu0 %v2573
      %v2799 = vpop.f32.mrb[0].mxu0
      %v2800 = vadd.f32 0.0, %v2799
      %v2801 = vpop.f32.mrb[0].mxu0
      %2802 = vdwg.mxu0
      %v2803 = vadd.f32 %v1744, %v2645
      %v2804 = vadd.f32 %v1749, %v2650
      %v2805 = vadd.f32 %v1754, %v2655
      %v2806 = vadd.f32 %v1759, %v2660
      %v2807 = vadd.f32 %v1764, %v2665
      %v2808 = vadd.f32 %v1769, %v2670
      %v2809 = vadd.f32 %v1774, %v2675
      %v2810 = vadd.f32 %v1779, %v2680
      %v2811 = vadd.f32 %v1784, %v2685
      %v2812 = vadd.f32 %v1789, %v2690
      %v2813 = vadd.f32 %v1794, %v2695
      %v2814 = vadd.f32 %v1799, %v2700
      %v2815 = vadd.f32 %v1804, %v2705
      %v2816 = vadd.f32 %v1809, %v2710
      %v2817 = vadd.f32 %v1814, %v2715
      %v2818 = vadd.f32 %v1819, %v2720
      %v2819 = vadd.f32 %v1824, %v2725
      %v2820 = vadd.f32 %v1829, %v2730
      %v2821 = vadd.f32 %v1834, %v2735
      %v2822 = vadd.f32 %v1839, %v2740
      %v2823 = vadd.f32 %v1844, %v2745
      %v2824 = vadd.f32 %v1849, %v2750
      %v2825 = vadd.f32 %v1854, %v2755
      %v2826 = vadd.f32 %v1859, %v2760
      %v2827 = vadd.f32 %v1864, %v2765
      %v2828 = vadd.f32 %v1869, %v2770
      %v2829 = vadd.f32 %v1874, %v2775
      %v2830 = vadd.f32 %v1879, %v2780
      %v2831 = vadd.f32 %v1884, %v2785
      %v2832 = vadd.f32 %v1889, %v2790
      %v2833 = vadd.f32 %v1894, %v2795
      %v2834 = vadd.f32 %v1899, %v2800
      %2835 = vst.msk [vmem:[%s240 + $0x2] sm:$0xff] %vm225, %v2446
      %2836 = vst.msk [vmem:[%s240 + $0xa] sm:$0xff] %vm225, %v2447
      %2837 = vst.msk [vmem:[%s240 + $0x1a] sm:$0xff] %vm225, %v2448
      %2838 = vst.msk [vmem:[%s240 + $0x22] sm:$0xff] %vm225, %v2449
      %2839 = vst.msk [vmem:[%s240 + $0x32] sm:$0xff] %vm225, %v2450
      %2840 = vst.msk [vmem:[%s240 + $0x3a] sm:$0xff] %vm225, %v2451
      %2841 = vst.msk [vmem:[%s240 + $0x4a] sm:$0xff] %vm225, %v2452
      %2842 = vst.msk [vmem:[%s240 + $0x52] sm:$0xff] %vm225, %v2453
      %2843 = vst.msk [vmem:[%s240 + $0x62] sm:$0xff] %vm225, %v2454
      %2844 = vst.msk [vmem:[%s240 + $0x6a] sm:$0xff] %vm225, %v2455
      %2845 = vst.msk [vmem:[%s240 + $0x7a] sm:$0xff] %vm225, %v2456
      %2846 = vst.msk [vmem:[%s240 + $0x82] sm:$0xff] %vm225, %v2457
      %2847 = vst.msk [vmem:[%s240 + $0x92] sm:$0xff] %vm225, %v2458
      %2848 = vst.msk [vmem:[%s240 + $0x9a] sm:$0xff] %vm225, %v2459
      %2849 = vst.msk [vmem:[%s240 + $0xaa] sm:$0xff] %vm225, %v2460
      %2850 = vst.msk [vmem:[%s240 + $0xb2] sm:$0xff] %vm225, %v2461
      %2851 = vst.msk [vmem:[%s240 + $0xc2] sm:$0xff] %vm225, %v2462
      %2852 = vst.msk [vmem:[%s240 + $0xca] sm:$0xff] %vm225, %v2463
      %2853 = vst.msk [vmem:[%s240 + $0xda] sm:$0xff] %vm225, %v2464
      %2854 = vst.msk [vmem:[%s240 + $0xe2] sm:$0xff] %vm225, %v2465
      %2855 = vst.msk [vmem:[%s240 + $0xf2] sm:$0xff] %vm225, %v2466
      %2856 = vst.msk [vmem:[%s240 + $0xfa] sm:$0xff] %vm225, %v2467
      %2857 = vst.msk [vmem:[%s240 + $0x10a] sm:$0xff] %vm225, %v2468
      %2858 = vst.msk [vmem:[%s240 + $0x112] sm:$0xff] %vm225, %v2469
      %2859 = vst.msk [vmem:[%s240 + $0x122] sm:$0xff] %vm225, %v2470
      %2860 = vst.msk [vmem:[%s240 + $0x12a] sm:$0xff] %vm225, %v2471
      %2861 = vst.msk [vmem:[%s240 + $0x13a] sm:$0xff] %vm225, %v2472
      %2862 = vst.msk [vmem:[%s240 + $0x142] sm:$0xff] %vm225, %v2473
      %2863 = vst.msk [vmem:[%s240 + $0x152] sm:$0xff] %vm225, %v2474
      %2864 = vst.msk [vmem:[%s240 + $0x15a] sm:$0xff] %vm225, %v2475
      %2865 = vst.msk [vmem:[%s240 + $0x16a] sm:$0xff] %vm225, %v2476
      %2866 = vst.msk [vmem:[%s240 + $0x172] sm:$0xff] %vm225, %v2477
      %v2867 = vld [vmem:[%s240] sm:$0xff]
      %v2868 = vld [vmem:[%s240 + $0x8] sm:$0xff]
      %v2869 = vld [vmem:[%s240 + $0x18] sm:$0xff]
      %v2870 = vld [vmem:[%s240 + $0x20] sm:$0xff]
      %v2871 = vld [vmem:[%s240 + $0x30] sm:$0xff]
      %v2872 = vld [vmem:[%s240 + $0x38] sm:$0xff]
      %v2873 = vld [vmem:[%s240 + $0x48] sm:$0xff]
      %v2874 = vld [vmem:[%s240 + $0x50] sm:$0xff]
      %v2875 = vld [vmem:[%s240 + $0x60] sm:$0xff]
      %v2876 = vld [vmem:[%s240 + $0x68] sm:$0xff]
      %v2877 = vld [vmem:[%s240 + $0x78] sm:$0xff]
      %v2878 = vld [vmem:[%s240 + $0x80] sm:$0xff]
      %v2879 = vld [vmem:[%s240 + $0x90] sm:$0xff]
      %v2880 = vld [vmem:[%s240 + $0x98] sm:$0xff]
      %v2881 = vld [vmem:[%s240 + $0xa8] sm:$0xff]
      %v2882 = vld [vmem:[%s240 + $0xb0] sm:$0xff]
      %v2883 = vld [vmem:[%s240 + $0xc0] sm:$0xff]
      %v2884 = vld [vmem:[%s240 + $0xc8] sm:$0xff]
      %v2885 = vld [vmem:[%s240 + $0xd8] sm:$0xff]
      %v2886 = vld [vmem:[%s240 + $0xe0] sm:$0xff]
      %v2887 = vld [vmem:[%s240 + $0xf0] sm:$0xff]
      %v2888 = vld [vmem:[%s240 + $0xf8] sm:$0xff]
      %v2889 = vld [vmem:[%s240 + $0x108] sm:$0xff]
      %v2890 = vld [vmem:[%s240 + $0x110] sm:$0xff]
      %v2891 = vld [vmem:[%s240 + $0x120] sm:$0xff]
      %v2892 = vld [vmem:[%s240 + $0x128] sm:$0xff]
      %v2893 = vld [vmem:[%s240 + $0x138] sm:$0xff]
      %v2894 = vld [vmem:[%s240 + $0x140] sm:$0xff]
      %v2895 = vld [vmem:[%s240 + $0x150] sm:$0xff]
      %v2896 = vld [vmem:[%s240 + $0x158] sm:$0xff]
      %v2897 = vld [vmem:[%s240 + $0x168] sm:$0xff]
      %v2898 = vld [vmem:[%s240 + $0x170] sm:$0xff]
      %v2899 = vmax.f32 %v2446, %v2867
      %v2900 = vmax.f32 %v2447, %v2868
      %v2901 = vmax.f32 %v2448, %v2869
      %v2902 = vmax.f32 %v2449, %v2870
      %v2903 = vmax.f32 %v2450, %v2871
      %v2904 = vmax.f32 %v2451, %v2872
      %v2905 = vmax.f32 %v2452, %v2873
      %v2906 = vmax.f32 %v2453, %v2874
      %v2907 = vmax.f32 %v2454, %v2875
      %v2908 = vmax.f32 %v2455, %v2876
      %v2909 = vmax.f32 %v2456, %v2877
      %v2910 = vmax.f32 %v2457, %v2878
      %v2911 = vmax.f32 %v2458, %v2879
      %v2912 = vmax.f32 %v2459, %v2880
      %v2913 = vmax.f32 %v2460, %v2881
      %v2914 = vmax.f32 %v2461, %v2882
      %v2915 = vmax.f32 %v2462, %v2883
      %v2916 = vmax.f32 %v2463, %v2884
      %v2917 = vmax.f32 %v2464, %v2885
      %v2918 = vmax.f32 %v2465, %v2886
      %v2919 = vmax.f32 %v2466, %v2887
      %v2920 = vmax.f32 %v2467, %v2888
      %v2921 = vmax.f32 %v2468, %v2889
      %v2922 = vmax.f32 %v2469, %v2890
      %v2923 = vmax.f32 %v2470, %v2891
      %v2924 = vmax.f32 %v2471, %v2892
      %v2925 = vmax.f32 %v2472, %v2893
      %v2926 = vmax.f32 %v2473, %v2894
      %v2927 = vmax.f32 %v2474, %v2895
      %v2928 = vmax.f32 %v2475, %v2896
      %v2929 = vmax.f32 %v2476, %v2897
      %v2930 = vmax.f32 %v2477, %v2898
      %v2931 = vld [vmem:[%s240 + $0x1] sm:$0xff]
      %v2932 = vld [vmem:[%s240 + $0x9] sm:$0xff]
      %v2933 = vld [vmem:[%s240 + $0x19] sm:$0xff]
      %v2934 = vld [vmem:[%s240 + $0x21] sm:$0xff]
      %v2935 = vld [vmem:[%s240 + $0x31] sm:$0xff]
      %v2936 = vld [vmem:[%s240 + $0x39] sm:$0xff]
      %v2937 = vld [vmem:[%s240 + $0x49] sm:$0xff]
      %v2938 = vld [vmem:[%s240 + $0x51] sm:$0xff]
      %v2939 = vld [vmem:[%s240 + $0x61] sm:$0xff]
      %v2940 = vld [vmem:[%s240 + $0x69] sm:$0xff]
      %v2941 = vld [vmem:[%s240 + $0x79] sm:$0xff]
      %v2942 = vld [vmem:[%s240 + $0x81] sm:$0xff]
      %v2943 = vld [vmem:[%s240 + $0x91] sm:$0xff]
      %v2944 = vld [vmem:[%s240 + $0x99] sm:$0xff]
      %v2945 = vld [vmem:[%s240 + $0xa9] sm:$0xff]
      %v2946 = vld [vmem:[%s240 + $0xb1] sm:$0xff]
      %v2947 = vld [vmem:[%s240 + $0xc1] sm:$0xff]
      %v2948 = vld [vmem:[%s240 + $0xc9] sm:$0xff]
      %v2949 = vld [vmem:[%s240 + $0xd9] sm:$0xff]
      %v2950 = vld [vmem:[%s240 + $0xe1] sm:$0xff]
      %v2951 = vld [vmem:[%s240 + $0xf1] sm:$0xff]
      %v2952 = vld [vmem:[%s240 + $0xf9] sm:$0xff]
      %v2953 = vld [vmem:[%s240 + $0x109] sm:$0xff]
      %v2954 = vld [vmem:[%s240 + $0x111] sm:$0xff]
      %v2955 = vld [vmem:[%s240 + $0x121] sm:$0xff]
      %v2956 = vld [vmem:[%s240 + $0x129] sm:$0xff]
      %v2957 = vld [vmem:[%s240 + $0x139] sm:$0xff]
      %v2958 = vld [vmem:[%s240 + $0x141] sm:$0xff]
      %v2959 = vld [vmem:[%s240 + $0x151] sm:$0xff]
      %v2960 = vld [vmem:[%s240 + $0x159] sm:$0xff]
      %v2961 = vld [vmem:[%s240 + $0x169] sm:$0xff]
      %v2962 = vld [vmem:[%s240 + $0x171] sm:$0xff]
      %v2963 = vmax.f32 %v2899, %v2931
      %v2964 = vmax.f32 %v2900, %v2932
      %v2965 = vmax.f32 %v2901, %v2933
      %v2966 = vmax.f32 %v2902, %v2934
      %v2967 = vmax.f32 %v2903, %v2935
      %v2968 = vmax.f32 %v2904, %v2936
      %v2969 = vmax.f32 %v2905, %v2937
      %v2970 = vmax.f32 %v2906, %v2938
      %v2971 = vmax.f32 %v2907, %v2939
      %v2972 = vmax.f32 %v2908, %v2940
      %v2973 = vmax.f32 %v2909, %v2941
      %v2974 = vmax.f32 %v2910, %v2942
      %v2975 = vmax.f32 %v2911, %v2943
      %v2976 = vmax.f32 %v2912, %v2944
      %v2977 = vmax.f32 %v2913, %v2945
      %v2978 = vmax.f32 %v2914, %v2946
      %v2979 = vmax.f32 %v2915, %v2947
      %v2980 = vmax.f32 %v2916, %v2948
      %v2981 = vmax.f32 %v2917, %v2949
      %v2982 = vmax.f32 %v2918, %v2950
      %v2983 = vmax.f32 %v2919, %v2951
      %v2984 = vmax.f32 %v2920, %v2952
      %v2985 = vmax.f32 %v2921, %v2953
      %v2986 = vmax.f32 %v2922, %v2954
      %v2987 = vmax.f32 %v2923, %v2955
      %v2988 = vmax.f32 %v2924, %v2956
      %v2989 = vmax.f32 %v2925, %v2957
      %v2990 = vmax.f32 %v2926, %v2958
      %v2991 = vmax.f32 %v2927, %v2959
      %v2992 = vmax.f32 %v2928, %v2960
      %v2993 = vmax.f32 %v2929, %v2961
      %v2994 = vmax.f32 %v2930, %v2962
      %v2995 = vld [vmem:[%s240 + $0x3] sm:$0xff]
      %v2996 = vld [vmem:[%s240 + $0xb] sm:$0xff]
      %v2997 = vld [vmem:[%s240 + $0x1b] sm:$0xff]
      %v2998 = vld [vmem:[%s240 + $0x23] sm:$0xff]
      %v2999 = vld [vmem:[%s240 + $0x33] sm:$0xff]
      %v3000 = vld [vmem:[%s240 + $0x3b] sm:$0xff]
      %v3001 = vld [vmem:[%s240 + $0x4b] sm:$0xff]
      %v3002 = vld [vmem:[%s240 + $0x53] sm:$0xff]
      %v3003 = vld [vmem:[%s240 + $0x63] sm:$0xff]
      %v3004 = vld [vmem:[%s240 + $0x6b] sm:$0xff]
      %v3005 = vld [vmem:[%s240 + $0x7b] sm:$0xff]
      %v3006 = vld [vmem:[%s240 + $0x83] sm:$0xff]
      %v3007 = vld [vmem:[%s240 + $0x93] sm:$0xff]
      %v3008 = vld [vmem:[%s240 + $0x9b] sm:$0xff]
      %v3009 = vld [vmem:[%s240 + $0xab] sm:$0xff]
      %v3010 = vld [vmem:[%s240 + $0xb3] sm:$0xff]
      %v3011 = vld [vmem:[%s240 + $0xc3] sm:$0xff]
      %v3012 = vld [vmem:[%s240 + $0xcb] sm:$0xff]
      %v3013 = vld [vmem:[%s240 + $0xdb] sm:$0xff]
      %v3014 = vld [vmem:[%s240 + $0xe3] sm:$0xff]
      %v3015 = vld [vmem:[%s240 + $0xf3] sm:$0xff]
      %v3016 = vld [vmem:[%s240 + $0xfb] sm:$0xff]
      %v3017 = vld [vmem:[%s240 + $0x10b] sm:$0xff]
      %v3018 = vld [vmem:[%s240 + $0x113] sm:$0xff]
      %v3019 = vld [vmem:[%s240 + $0x123] sm:$0xff]
      %v3020 = vld [vmem:[%s240 + $0x12b] sm:$0xff]
      %v3021 = vld [vmem:[%s240 + $0x13b] sm:$0xff]
      %v3022 = vld [vmem:[%s240 + $0x143] sm:$0xff]
      %v3023 = vld [vmem:[%s240 + $0x153] sm:$0xff]
      %v3024 = vld [vmem:[%s240 + $0x15b] sm:$0xff]
      %v3025 = vld [vmem:[%s240 + $0x16b] sm:$0xff]
      %v3026 = vld [vmem:[%s240 + $0x173] sm:$0xff]
      %v3027 = vmax.f32 %v2963, %v2995
      %v3028 = vmax.f32 %v2964, %v2996
      %v3029 = vmax.f32 %v2965, %v2997
      %v3030 = vmax.f32 %v2966, %v2998
      %v3031 = vmax.f32 %v2967, %v2999
      %v3032 = vmax.f32 %v2968, %v3000
      %v3033 = vmax.f32 %v2969, %v3001
      %v3034 = vmax.f32 %v2970, %v3002
      %v3035 = vmax.f32 %v2971, %v3003
      %v3036 = vmax.f32 %v2972, %v3004
      %v3037 = vmax.f32 %v2973, %v3005
      %v3038 = vmax.f32 %v2974, %v3006
      %v3039 = vmax.f32 %v2975, %v3007
      %v3040 = vmax.f32 %v2976, %v3008
      %v3041 = vmax.f32 %v2977, %v3009
      %v3042 = vmax.f32 %v2978, %v3010
      %v3043 = vmax.f32 %v2979, %v3011
      %v3044 = vmax.f32 %v2980, %v3012
      %v3045 = vmax.f32 %v2981, %v3013
      %v3046 = vmax.f32 %v2982, %v3014
      %v3047 = vmax.f32 %v2983, %v3015
      %v3048 = vmax.f32 %v2984, %v3016
      %v3049 = vmax.f32 %v2985, %v3017
      %v3050 = vmax.f32 %v2986, %v3018
      %v3051 = vmax.f32 %v2987, %v3019
      %v3052 = vmax.f32 %v2988, %v3020
      %v3053 = vmax.f32 %v2989, %v3021
      %v3054 = vmax.f32 %v2990, %v3022
      %v3055 = vmax.f32 %v2991, %v3023
      %v3056 = vmax.f32 %v2992, %v3024
      %v3057 = vmax.f32 %v2993, %v3025
      %v3058 = vmax.f32 %v2994, %v3026
      %v3059 = vld [vmem:[%s240 + $0x4] sm:$0xff]
      %v3060 = vld [vmem:[%s240 + $0xc] sm:$0xff]
      %v3061 = vld [vmem:[%s240 + $0x1c] sm:$0xff]
      %v3062 = vld [vmem:[%s240 + $0x24] sm:$0xff]
      %v3063 = vld [vmem:[%s240 + $0x34] sm:$0xff]
      %v3064 = vld [vmem:[%s240 + $0x3c] sm:$0xff]
      %v3065 = vld [vmem:[%s240 + $0x4c] sm:$0xff]
      %v3066 = vld [vmem:[%s240 + $0x54] sm:$0xff]
      %v3067 = vld [vmem:[%s240 + $0x64] sm:$0xff]
      %v3068 = vld [vmem:[%s240 + $0x6c] sm:$0xff]
      %v3069 = vld [vmem:[%s240 + $0x7c] sm:$0xff]
      %v3070 = vld [vmem:[%s240 + $0x84] sm:$0xff]
      %v3071 = vld [vmem:[%s240 + $0x94] sm:$0xff]
      %v3072 = vld [vmem:[%s240 + $0x9c] sm:$0xff]
      %v3073 = vld [vmem:[%s240 + $0xac] sm:$0xff]
      %v3074 = vld [vmem:[%s240 + $0xb4] sm:$0xff]
      %v3075 = vld [vmem:[%s240 + $0xc4] sm:$0xff]
      %v3076 = vld [vmem:[%s240 + $0xcc] sm:$0xff]
      %v3077 = vld [vmem:[%s240 + $0xdc] sm:$0xff]
      %v3078 = vld [vmem:[%s240 + $0xe4] sm:$0xff]
      %v3079 = vld [vmem:[%s240 + $0xf4] sm:$0xff]
      %v3080 = vld [vmem:[%s240 + $0xfc] sm:$0xff]
      %v3081 = vld [vmem:[%s240 + $0x10c] sm:$0xff]
      %v3082 = vld [vmem:[%s240 + $0x114] sm:$0xff]
      %v3083 = vld [vmem:[%s240 + $0x124] sm:$0xff]
      %v3084 = vld [vmem:[%s240 + $0x12c] sm:$0xff]
      %v3085 = vld [vmem:[%s240 + $0x13c] sm:$0xff]
      %v3086 = vld [vmem:[%s240 + $0x144] sm:$0xff]
      %v3087 = vld [vmem:[%s240 + $0x154] sm:$0xff]
      %v3088 = vld [vmem:[%s240 + $0x15c] sm:$0xff]
      %v3089 = vld [vmem:[%s240 + $0x16c] sm:$0xff]
      %v3090 = vld [vmem:[%s240 + $0x174] sm:$0xff]
      %v3091 = vmax.f32 %v3027, %v3059
      %v3092 = vmax.f32 %v3028, %v3060
      %v3093 = vmax.f32 %v3029, %v3061
      %v3094 = vmax.f32 %v3030, %v3062
      %v3095 = vmax.f32 %v3031, %v3063
      %v3096 = vmax.f32 %v3032, %v3064
      %v3097 = vmax.f32 %v3033, %v3065
      %v3098 = vmax.f32 %v3034, %v3066
      %v3099 = vmax.f32 %v3035, %v3067
      %v3100 = vmax.f32 %v3036, %v3068
      %v3101 = vmax.f32 %v3037, %v3069
      %v3102 = vmax.f32 %v3038, %v3070
      %v3103 = vmax.f32 %v3039, %v3071
      %v3104 = vmax.f32 %v3040, %v3072
      %v3105 = vmax.f32 %v3041, %v3073
      %v3106 = vmax.f32 %v3042, %v3074
      %v3107 = vmax.f32 %v3043, %v3075
      %v3108 = vmax.f32 %v3044, %v3076
      %v3109 = vmax.f32 %v3045, %v3077
      %v3110 = vmax.f32 %v3046, %v3078
      %v3111 = vmax.f32 %v3047, %v3079
      %v3112 = vmax.f32 %v3048, %v3080
      %v3113 = vmax.f32 %v3049, %v3081
      %v3114 = vmax.f32 %v3050, %v3082
      %v3115 = vmax.f32 %v3051, %v3083
      %v3116 = vmax.f32 %v3052, %v3084
      %v3117 = vmax.f32 %v3053, %v3085
      %v3118 = vmax.f32 %v3054, %v3086
      %v3119 = vmax.f32 %v3055, %v3087
      %v3120 = vmax.f32 %v3056, %v3088
      %v3121 = vmax.f32 %v3057, %v3089
      %v3122 = vmax.f32 %v3058, %v3090
      %3123 = vst.msk [vmem:[%s240 + $0x2] sm:$0xff] %vm225, %v3091
      %3124 = vst.msk [vmem:[%s240 + $0xa] sm:$0xff] %vm225, %v3092
      %3125 = vst.msk [vmem:[%s240 + $0x1a] sm:$0xff] %vm225, %v3093
      %3126 = vst.msk [vmem:[%s240 + $0x22] sm:$0xff] %vm225, %v3094
      %3127 = vst.msk [vmem:[%s240 + $0x32] sm:$0xff] %vm225, %v3095
      %3128 = vst.msk [vmem:[%s240 + $0x3a] sm:$0xff] %vm225, %v3096
      %3129 = vst.msk [vmem:[%s240 + $0x4a] sm:$0xff] %vm225, %v3097
      %3130 = vst.msk [vmem:[%s240 + $0x52] sm:$0xff] %vm225, %v3098
      %3131 = vst.msk [vmem:[%s240 + $0x62] sm:$0xff] %vm225, %v3099
      %3132 = vst.msk [vmem:[%s240 + $0x6a] sm:$0xff] %vm225, %v3100
      %3133 = vst.msk [vmem:[%s240 + $0x7a] sm:$0xff] %vm225, %v3101
      %3134 = vst.msk [vmem:[%s240 + $0x82] sm:$0xff] %vm225, %v3102
      %3135 = vst.msk [vmem:[%s240 + $0x92] sm:$0xff] %vm225, %v3103
      %3136 = vst.msk [vmem:[%s240 + $0x9a] sm:$0xff] %vm225, %v3104
      %3137 = vst.msk [vmem:[%s240 + $0xaa] sm:$0xff] %vm225, %v3105
      %3138 = vst.msk [vmem:[%s240 + $0xb2] sm:$0xff] %vm225, %v3106
      %3139 = vst.msk [vmem:[%s240 + $0xc2] sm:$0xff] %vm225, %v3107
      %3140 = vst.msk [vmem:[%s240 + $0xca] sm:$0xff] %vm225, %v3108
      %3141 = vst.msk [vmem:[%s240 + $0xda] sm:$0xff] %vm225, %v3109
      %3142 = vst.msk [vmem:[%s240 + $0xe2] sm:$0xff] %vm225, %v3110
      %3143 = vst.msk [vmem:[%s240 + $0xf2] sm:$0xff] %vm225, %v3111
      %3144 = vst.msk [vmem:[%s240 + $0xfa] sm:$0xff] %vm225, %v3112
      %3145 = vst.msk [vmem:[%s240 + $0x10a] sm:$0xff] %vm225, %v3113
      %3146 = vst.msk [vmem:[%s240 + $0x112] sm:$0xff] %vm225, %v3114
      %3147 = vst.msk [vmem:[%s240 + $0x122] sm:$0xff] %vm225, %v3115
      %3148 = vst.msk [vmem:[%s240 + $0x12a] sm:$0xff] %vm225, %v3116
      %3149 = vst.msk [vmem:[%s240 + $0x13a] sm:$0xff] %vm225, %v3117
      %3150 = vst.msk [vmem:[%s240 + $0x142] sm:$0xff] %vm225, %v3118
      %3151 = vst.msk [vmem:[%s240 + $0x152] sm:$0xff] %vm225, %v3119
      %3152 = vst.msk [vmem:[%s240 + $0x15a] sm:$0xff] %vm225, %v3120
      %3153 = vst.msk [vmem:[%s240 + $0x16a] sm:$0xff] %vm225, %v3121
      %3154 = vst.msk [vmem:[%s240 + $0x172] sm:$0xff] %vm225, %v3122
      %v3155 = vld [vmem:[#allocation2 + $0x2] sm:$0xff]
      %v3156 = vld [vmem:[#allocation2 + $0xa] sm:$0xff]
      %v3157 = vld [vmem:[#allocation2 + $0x1a] sm:$0xff]
      %v3158 = vld [vmem:[#allocation2 + $0x22] sm:$0xff]
      %v3159 = vld [vmem:[#allocation2 + $0x32] sm:$0xff]
      %v3160 = vld [vmem:[#allocation2 + $0x3a] sm:$0xff]
      %v3161 = vld [vmem:[#allocation2 + $0x4a] sm:$0xff]
      %v3162 = vld [vmem:[#allocation2 + $0x52] sm:$0xff]
      %v3163 = vld [vmem:[#allocation2 + $0x62] sm:$0xff]
      %v3164 = vld [vmem:[#allocation2 + $0x6a] sm:$0xff]
      %v3165 = vld [vmem:[#allocation2 + $0x7a] sm:$0xff]
      %v3166 = vld [vmem:[#allocation2 + $0x82] sm:$0xff]
      %v3167 = vld [vmem:[#allocation2 + $0x92] sm:$0xff]
      %v3168 = vld [vmem:[#allocation2 + $0x9a] sm:$0xff]
      %v3169 = vld [vmem:[#allocation2 + $0xaa] sm:$0xff]
      %v3170 = vld [vmem:[#allocation2 + $0xb2] sm:$0xff]
      %v3171 = vld [vmem:[#allocation2 + $0xc2] sm:$0xff]
      %v3172 = vld [vmem:[#allocation2 + $0xca] sm:$0xff]
      %v3173 = vld [vmem:[#allocation2 + $0xda] sm:$0xff]
      %v3174 = vld [vmem:[#allocation2 + $0xe2] sm:$0xff]
      %v3175 = vld [vmem:[#allocation2 + $0xf2] sm:$0xff]
      %v3176 = vld [vmem:[#allocation2 + $0xfa] sm:$0xff]
      %v3177 = vld [vmem:[#allocation2 + $0x10a] sm:$0xff]
      %v3178 = vld [vmem:[#allocation2 + $0x112] sm:$0xff]
      %v3179 = vld [vmem:[#allocation2 + $0x122] sm:$0xff]
      %v3180 = vld [vmem:[#allocation2 + $0x12a] sm:$0xff]
      %v3181 = vld [vmem:[#allocation2 + $0x13a] sm:$0xff]
      %v3182 = vld [vmem:[#allocation2 + $0x142] sm:$0xff]
      %v3183 = vld [vmem:[#allocation2 + $0x152] sm:$0xff]
      %v3184 = vld [vmem:[#allocation2 + $0x15a] sm:$0xff]
      %v3185 = vld [vmem:[#allocation2 + $0x16a] sm:$0xff]
      %v3186 = vld [vmem:[#allocation2 + $0x172] sm:$0xff]
      %v3187 = vmax.f32 %v3091, %v3155
      %v3188 = vmax.f32 %v3092, %v3156
      %v3189 = vmax.f32 %v3093, %v3157
      %v3190 = vmax.f32 %v3094, %v3158
      %v3191 = vmax.f32 %v3095, %v3159
      %v3192 = vmax.f32 %v3096, %v3160
      %v3193 = vmax.f32 %v3097, %v3161
      %v3194 = vmax.f32 %v3098, %v3162
      %v3195 = vmax.f32 %v3099, %v3163
      %v3196 = vmax.f32 %v3100, %v3164
      %v3197 = vmax.f32 %v3101, %v3165
      %v3198 = vmax.f32 %v3102, %v3166
      %v3199 = vmax.f32 %v3103, %v3167
      %v3200 = vmax.f32 %v3104, %v3168
      %v3201 = vmax.f32 %v3105, %v3169
      %v3202 = vmax.f32 %v3106, %v3170
      %v3203 = vmax.f32 %v3107, %v3171
      %v3204 = vmax.f32 %v3108, %v3172
      %v3205 = vmax.f32 %v3109, %v3173
      %v3206 = vmax.f32 %v3110, %v3174
      %v3207 = vmax.f32 %v3111, %v3175
      %v3208 = vmax.f32 %v3112, %v3176
      %v3209 = vmax.f32 %v3113, %v3177
      %v3210 = vmax.f32 %v3114, %v3178
      %v3211 = vmax.f32 %v3115, %v3179
      %v3212 = vmax.f32 %v3116, %v3180
      %v3213 = vmax.f32 %v3117, %v3181
      %v3214 = vmax.f32 %v3118, %v3182
      %v3215 = vmax.f32 %v3119, %v3183
      %v3216 = vmax.f32 %v3120, %v3184
      %v3217 = vmax.f32 %v3121, %v3185
      %v3218 = vmax.f32 %v3122, %v3186
      %v3219 = vld [vmem:[%s1057 + $0x2] sm:$0xff]
      %v3220 = vld [vmem:[%s1057 + $0xa] sm:$0xff]
      %v3221 = vld [vmem:[%s1057 + $0x1a] sm:$0xff]
      %v3222 = vld [vmem:[%s1057 + $0x22] sm:$0xff]
      %v3223 = vld [vmem:[%s1057 + $0x32] sm:$0xff]
      %v3224 = vld [vmem:[%s1057 + $0x3a] sm:$0xff]
      %v3225 = vld [vmem:[%s1057 + $0x4a] sm:$0xff]
      %v3226 = vld [vmem:[%s1057 + $0x52] sm:$0xff]
      %v3227 = vld [vmem:[%s1057 + $0x62] sm:$0xff]
      %v3228 = vld [vmem:[%s1057 + $0x6a] sm:$0xff]
      %v3229 = vld [vmem:[%s1057 + $0x7a] sm:$0xff]
      %v3230 = vld [vmem:[%s1057 + $0x82] sm:$0xff]
      %v3231 = vld [vmem:[%s1057 + $0x92] sm:$0xff]
      %v3232 = vld [vmem:[%s1057 + $0x9a] sm:$0xff]
      %v3233 = vld [vmem:[%s1057 + $0xaa] sm:$0xff]
      %v3234 = vld [vmem:[%s1057 + $0xb2] sm:$0xff]
      %v3235 = vld [vmem:[%s1057 + $0xc2] sm:$0xff]
      %v3236 = vld [vmem:[%s1057 + $0xca] sm:$0xff]
      %v3237 = vld [vmem:[%s1057 + $0xda] sm:$0xff]
      %v3238 = vld [vmem:[%s1057 + $0xe2] sm:$0xff]
      %v3239 = vld [vmem:[%s1057 + $0xf2] sm:$0xff]
      %v3240 = vld [vmem:[%s1057 + $0xfa] sm:$0xff]
      %v3241 = vld [vmem:[%s1057 + $0x10a] sm:$0xff]
      %v3242 = vld [vmem:[%s1057 + $0x112] sm:$0xff]
      %v3243 = vld [vmem:[%s1057 + $0x122] sm:$0xff]
      %v3244 = vld [vmem:[%s1057 + $0x12a] sm:$0xff]
      %v3245 = vld [vmem:[%s1057 + $0x13a] sm:$0xff]
      %v3246 = vld [vmem:[%s1057 + $0x142] sm:$0xff]
      %v3247 = vld [vmem:[%s1057 + $0x152] sm:$0xff]
      %v3248 = vld [vmem:[%s1057 + $0x15a] sm:$0xff]
      %v3249 = vld [vmem:[%s1057 + $0x16a] sm:$0xff]
      %v3250 = vld [vmem:[%s1057 + $0x172] sm:$0xff]
      %v3251 = vmax.f32 %v3187, %v3219
      %v3252 = vmax.f32 %v3188, %v3220
      %v3253 = vmax.f32 %v3189, %v3221
      %v3254 = vmax.f32 %v3190, %v3222
      %v3255 = vmax.f32 %v3191, %v3223
      %v3256 = vmax.f32 %v3192, %v3224
      %v3257 = vmax.f32 %v3193, %v3225
      %v3258 = vmax.f32 %v3194, %v3226
      %v3259 = vmax.f32 %v3195, %v3227
      %v3260 = vmax.f32 %v3196, %v3228
      %v3261 = vmax.f32 %v3197, %v3229
      %v3262 = vmax.f32 %v3198, %v3230
      %v3263 = vmax.f32 %v3199, %v3231
      %v3264 = vmax.f32 %v3200, %v3232
      %v3265 = vmax.f32 %v3201, %v3233
      %v3266 = vmax.f32 %v3202, %v3234
      %v3267 = vmax.f32 %v3203, %v3235
      %v3268 = vmax.f32 %v3204, %v3236
      %v3269 = vmax.f32 %v3205, %v3237
      %v3270 = vmax.f32 %v3206, %v3238
      %v3271 = vmax.f32 %v3207, %v3239
      %v3272 = vmax.f32 %v3208, %v3240
      %v3273 = vmax.f32 %v3209, %v3241
      %v3274 = vmax.f32 %v3210, %v3242
      %v3275 = vmax.f32 %v3211, %v3243
      %v3276 = vmax.f32 %v3212, %v3244
      %v3277 = vmax.f32 %v3213, %v3245
      %v3278 = vmax.f32 %v3214, %v3246
      %v3279 = vmax.f32 %v3215, %v3247
      %v3280 = vmax.f32 %v3216, %v3248
      %v3281 = vmax.f32 %v3217, %v3249
      %v3282 = vmax.f32 %v3218, %v3250
      %v3283 = vld [vmem:[%s1122 + $0x2] sm:$0xff]
      %v3284 = vld [vmem:[%s1122 + $0xa] sm:$0xff]
      %v3285 = vld [vmem:[%s1122 + $0x1a] sm:$0xff]
      %v3286 = vld [vmem:[%s1122 + $0x22] sm:$0xff]
      %v3287 = vld [vmem:[%s1122 + $0x32] sm:$0xff]
      %v3288 = vld [vmem:[%s1122 + $0x3a] sm:$0xff]
      %v3289 = vld [vmem:[%s1122 + $0x4a] sm:$0xff]
      %v3290 = vld [vmem:[%s1122 + $0x52] sm:$0xff]
      %v3291 = vld [vmem:[%s1122 + $0x62] sm:$0xff]
      %v3292 = vld [vmem:[%s1122 + $0x6a] sm:$0xff]
      %v3293 = vld [vmem:[%s1122 + $0x7a] sm:$0xff]
      %v3294 = vld [vmem:[%s1122 + $0x82] sm:$0xff]
      %v3295 = vld [vmem:[%s1122 + $0x92] sm:$0xff]
      %v3296 = vld [vmem:[%s1122 + $0x9a] sm:$0xff]
      %v3297 = vld [vmem:[%s1122 + $0xaa] sm:$0xff]
      %v3298 = vld [vmem:[%s1122 + $0xb2] sm:$0xff]
      %v3299 = vld [vmem:[%s1122 + $0xc2] sm:$0xff]
      %v3300 = vld [vmem:[%s1122 + $0xca] sm:$0xff]
      %v3301 = vld [vmem:[%s1122 + $0xda] sm:$0xff]
      %v3302 = vld [vmem:[%s1122 + $0xe2] sm:$0xff]
      %v3303 = vld [vmem:[%s1122 + $0xf2] sm:$0xff]
      %v3304 = vld [vmem:[%s1122 + $0xfa] sm:$0xff]
      %v3305 = vld [vmem:[%s1122 + $0x10a] sm:$0xff]
      %v3306 = vld [vmem:[%s1122 + $0x112] sm:$0xff]
      %v3307 = vld [vmem:[%s1122 + $0x122] sm:$0xff]
      %v3308 = vld [vmem:[%s1122 + $0x12a] sm:$0xff]
      %v3309 = vld [vmem:[%s1122 + $0x13a] sm:$0xff]
      %v3310 = vld [vmem:[%s1122 + $0x142] sm:$0xff]
      %v3311 = vld [vmem:[%s1122 + $0x152] sm:$0xff]
      %v3312 = vld [vmem:[%s1122 + $0x15a] sm:$0xff]
      %v3313 = vld [vmem:[%s1122 + $0x16a] sm:$0xff]
      %v3314 = vld [vmem:[%s1122 + $0x172] sm:$0xff]
      %v3315 = vmax.f32 %v3251, %v3283
      %v3316 = vmax.f32 %v3252, %v3284
      %v3317 = vmax.f32 %v3253, %v3285
      %v3318 = vmax.f32 %v3254, %v3286
      %v3319 = vmax.f32 %v3255, %v3287
      %v3320 = vmax.f32 %v3256, %v3288
      %v3321 = vmax.f32 %v3257, %v3289
      %v3322 = vmax.f32 %v3258, %v3290
      %v3323 = vmax.f32 %v3259, %v3291
      %v3324 = vmax.f32 %v3260, %v3292
      %v3325 = vmax.f32 %v3261, %v3293
      %v3326 = vmax.f32 %v3262, %v3294
      %v3327 = vmax.f32 %v3263, %v3295
      %v3328 = vmax.f32 %v3264, %v3296
      %v3329 = vmax.f32 %v3265, %v3297
      %v3330 = vmax.f32 %v3266, %v3298
      %v3331 = vmax.f32 %v3267, %v3299
      %v3332 = vmax.f32 %v3268, %v3300
      %v3333 = vmax.f32 %v3269, %v3301
      %v3334 = vmax.f32 %v3270, %v3302
      %v3335 = vmax.f32 %v3271, %v3303
      %v3336 = vmax.f32 %v3272, %v3304
      %v3337 = vmax.f32 %v3273, %v3305
      %v3338 = vmax.f32 %v3274, %v3306
      %v3339 = vmax.f32 %v3275, %v3307
      %v3340 = vmax.f32 %v3276, %v3308
      %v3341 = vmax.f32 %v3277, %v3309
      %v3342 = vmax.f32 %v3278, %v3310
      %v3343 = vmax.f32 %v3279, %v3311
      %v3344 = vmax.f32 %v3280, %v3312
      %v3345 = vmax.f32 %v3281, %v3313
      %v3346 = vmax.f32 %v3282, %v3314
      %v3347 = vld [vmem:[%s1187 + $0x2] sm:$0xff]
      %v3348 = vld [vmem:[%s1187 + $0xa] sm:$0xff]
      %v3349 = vld [vmem:[%s1187 + $0x1a] sm:$0xff]
      %v3350 = vld [vmem:[%s1187 + $0x22] sm:$0xff]
      %v3351 = vld [vmem:[%s1187 + $0x32] sm:$0xff]
      %v3352 = vld [vmem:[%s1187 + $0x3a] sm:$0xff]
      %v3353 = vld [vmem:[%s1187 + $0x4a] sm:$0xff]
      %v3354 = vld [vmem:[%s1187 + $0x52] sm:$0xff]
      %v3355 = vld [vmem:[%s1187 + $0x62] sm:$0xff]
      %v3356 = vld [vmem:[%s1187 + $0x6a] sm:$0xff]
      %v3357 = vld [vmem:[%s1187 + $0x7a] sm:$0xff]
      %v3358 = vld [vmem:[%s1187 + $0x82] sm:$0xff]
      %v3359 = vld [vmem:[%s1187 + $0x92] sm:$0xff]
      %v3360 = vld [vmem:[%s1187 + $0x9a] sm:$0xff]
      %v3361 = vld [vmem:[%s1187 + $0xaa] sm:$0xff]
      %v3362 = vld [vmem:[%s1187 + $0xb2] sm:$0xff]
      %v3363 = vld [vmem:[%s1187 + $0xc2] sm:$0xff]
      %v3364 = vld [vmem:[%s1187 + $0xca] sm:$0xff]
      %v3365 = vld [vmem:[%s1187 + $0xda] sm:$0xff]
      %v3366 = vld [vmem:[%s1187 + $0xe2] sm:$0xff]
      %v3367 = vld [vmem:[%s1187 + $0xf2] sm:$0xff]
      %v3368 = vld [vmem:[%s1187 + $0xfa] sm:$0xff]
      %v3369 = vld [vmem:[%s1187 + $0x10a] sm:$0xff]
      %v3370 = vld [vmem:[%s1187 + $0x112] sm:$0xff]
      %v3371 = vld [vmem:[%s1187 + $0x122] sm:$0xff]
      %v3372 = vld [vmem:[%s1187 + $0x12a] sm:$0xff]
      %v3373 = vld [vmem:[%s1187 + $0x13a] sm:$0xff]
      %v3374 = vld [vmem:[%s1187 + $0x142] sm:$0xff]
      %v3375 = vld [vmem:[%s1187 + $0x152] sm:$0xff]
      %v3376 = vld [vmem:[%s1187 + $0x15a] sm:$0xff]
      %v3377 = vld [vmem:[%s1187 + $0x16a] sm:$0xff]
      %v3378 = vld [vmem:[%s1187 + $0x172] sm:$0xff]
      %v3379 = vmax.f32 %v3315, %v3347
      %v3380 = vmax.f32 %v3316, %v3348
      %v3381 = vmax.f32 %v3317, %v3349
      %v3382 = vmax.f32 %v3318, %v3350
      %v3383 = vmax.f32 %v3319, %v3351
      %v3384 = vmax.f32 %v3320, %v3352
      %v3385 = vmax.f32 %v3321, %v3353
      %v3386 = vmax.f32 %v3322, %v3354
      %v3387 = vmax.f32 %v3323, %v3355
      %v3388 = vmax.f32 %v3324, %v3356
      %v3389 = vmax.f32 %v3325, %v3357
      %v3390 = vmax.f32 %v3326, %v3358
      %v3391 = vmax.f32 %v3327, %v3359
      %v3392 = vmax.f32 %v3328, %v3360
      %v3393 = vmax.f32 %v3329, %v3361
      %v3394 = vmax.f32 %v3330, %v3362
      %v3395 = vmax.f32 %v3331, %v3363
      %v3396 = vmax.f32 %v3332, %v3364
      %v3397 = vmax.f32 %v3333, %v3365
      %v3398 = vmax.f32 %v3334, %v3366
      %v3399 = vmax.f32 %v3335, %v3367
      %v3400 = vmax.f32 %v3336, %v3368
      %v3401 = vmax.f32 %v3337, %v3369
      %v3402 = vmax.f32 %v3338, %v3370
      %v3403 = vmax.f32 %v3339, %v3371
      %v3404 = vmax.f32 %v3340, %v3372
      %v3405 = vmax.f32 %v3341, %v3373
      %v3406 = vmax.f32 %v3342, %v3374
      %v3407 = vmax.f32 %v3343, %v3375
      %v3408 = vmax.f32 %v3344, %v3376
      %v3409 = vmax.f32 %v3345, %v3377
      %v3410 = vmax.f32 %v3346, %v3378
      %v3411 = vld [vmem:[%s3 + $0x6] sm:$0x3]
      %v3413 = vsel %vm225, %v3379, 0
      %v3416 = vsel %vm225, %v3380, 0
      %v3419 = vsel %vm225, %v3381, 0
      %v3422 = vsel %vm225, %v3382, 0
      %v3425 = vsel %vm225, %v3383, 0
      %v3428 = vsel %vm225, %v3384, 0
      %v3431 = vsel %vm225, %v3385, 0
      %v3434 = vsel %vm225, %v3386, 0
      %v3437 = vsel %vm225, %v3387, 0
      %v3440 = vsel %vm225, %v3388, 0
      %v3443 = vsel %vm225, %v3389, 0
      %v3446 = vsel %vm225, %v3390, 0
      %v3449 = vsel %vm225, %v3391, 0
      %v3452 = vsel %vm225, %v3392, 0
      %v3455 = vsel %vm225, %v3393, 0
      %v3458 = vsel %vm225, %v3394, 0
      %v3461 = vsel %vm225, %v3395, 0
      %v3464 = vsel %vm225, %v3396, 0
      %v3467 = vsel %vm225, %v3397, 0
      %v3470 = vsel %vm225, %v3398, 0
      %v3473 = vsel %vm225, %v3399, 0
      %v3476 = vsel %vm225, %v3400, 0
      %v3479 = vsel %vm225, %v3401, 0
      %v3482 = vsel %vm225, %v3402, 0
      %v3485 = vsel %vm225, %v3403, 0
      %v3488 = vsel %vm225, %v3404, 0
      %v3491 = vsel %vm225, %v3405, 0
      %v3494 = vsel %vm225, %v3406, 0
      %v3497 = vsel %vm225, %v3407, 0
      %v3500 = vsel %vm225, %v3408, 0
      %v3503 = vsel %vm225, %v3409, 0
      %v3506 = vsel %vm225, %v3410, 0
      %v3509 = vsel %vm1349, %v3411, 0
      %3511 = vmatprep.subr.mxu0 0.0
      %3512 = vmatpush1.msra.mxu0 %v3509
      %3513 = vmatprep.subr.mxu0 0.0
      %3514 = vmatpush1.msra.mxu0 0.0
      %3515 = vmatprep.subr.mxu0 0.0
      %3516 = vmatpush1.msra.mxu0 0.0
      %3517 = vmatprep.subr.mxu0 0.0
      %3518 = vmatpush1.msra.mxu0 0.0
      %3519 = vmatprep.subr.mxu0 0.0
      %3520 = vmatpush1.msra.mxu0 0.0
      %3521 = vmatprep.subr.mxu0 0.0
      %3522 = vmatpush1.msra.mxu0 0.0
      %3523 = vmatprep.subr.mxu0 0.0
      %3524 = vmatpush1.msra.mxu0 0.0
      %3525 = vmatprep.subr.mxu0 0.0
      %3526 = vmatpush1.msra.mxu0 0.0
      %3527 = vmatprep.subr.mxu0 0.0
      %3528 = vmatpush1.msra.mxu0 0.0
      %3529 = vmatprep.subr.mxu0 0.0
      %3530 = vmatpush1.msra.mxu0 0.0
      %3531 = vmatprep.subr.mxu0 0.0
      %3532 = vmatpush1.msra.mxu0 0.0
      %3533 = vmatprep.subr.mxu0 0.0
      %3534 = vmatpush1.msra.mxu0 0.0
      %3535 = vmatprep.subr.mxu0 0.0
      %3536 = vmatpush1.msra.mxu0 0.0
      %3537 = vmatprep.subr.mxu0 0.0
      %3538 = vmatpush1.msra.mxu0 0.0
      %3539 = vmatprep.subr.mxu0 0.0
      %3540 = vmatpush1.msra.mxu0 0.0
      %3541 = vmatprep.subr.mxu0 0.0
      %3542 = vmatpush1.msra.mxu0 0.0
      %3543 = vmatprep.subr.mxu0 0.0
      %3544 = vmatpush1.msra.mxu0 0.0
      %3545 = vmatprep.subr.mxu0 0.0
      %3546 = vmatpush1.msra.mxu0 0.0
      %3547 = vmatprep.subr.mxu0 0.0
      %3548 = vmatpush1.msra.mxu0 0.0
      %3549 = vmatprep.subr.mxu0 0.0
      %3550 = vmatpush1.msra.mxu0 0.0
      %3551 = vmatprep.subr.mxu0 0.0
      %3552 = vmatpush1.msra.mxu0 0.0
      %3553 = vmatprep.subr.mxu0 0.0
      %3554 = vmatpush1.msra.mxu0 0.0
      %3555 = vmatprep.subr.mxu0 0.0
      %3556 = vmatpush1.msra.mxu0 0.0
      %3557 = vmatprep.subr.mxu0 0.0
      %3558 = vmatpush1.msra.mxu0 0.0
      %3559 = vmatprep.subr.mxu0 0.0
      %3560 = vmatpush1.msra.mxu0 0.0
      %3561 = vmatprep.subr.mxu0 0.0
      %3562 = vmatpush1.msra.mxu0 0.0
      %3563 = vmatprep.subr.mxu0 0.0
      %3564 = vmatpush1.msra.mxu0 0.0
      %3565 = vmatprep.subr.mxu0 0.0
      %3566 = vmatpush1.msra.mxu0 0.0
      %3567 = vmatprep.subr.mxu0 0.0
      %3568 = vmatpush1.msra.mxu0 0.0
      %3569 = vmatprep.subr.mxu0 0.0
      %3570 = vmatpush1.msra.mxu0 0.0
      %3571 = vmatprep.subr.mxu0 0.0
      %3572 = vmatpush1.msra.mxu0 0.0
      %3573 = vmatprep.subr.mxu0 0.0
      %3574 = vmatpush1.msra.mxu0 0.0
      %3575 = vmatprep.mubr.f32.mxu0 0.0
      %3576 = vmatmul.mubr.f32.gmra.mrb[0].mxu0 %v3413
      %v3577 = vpop.f32.mrb[0].mxu0
      %v3578 = vadd.f32 0.0, %v3577
      %v3579 = vpop.f32.mrb[0].mxu0
      %3580 = vmatprep.mubr.f32.mxu0 0.0
      %3581 = vmatmul.mubr.f32.gmra.mrb[0].mxu0 %v3416
      %v3582 = vpop.f32.mrb[0].mxu0
      %v3583 = vadd.f32 0.0, %v3582
      %v3584 = vpop.f32.mrb[0].mxu0
      %3585 = vmatprep.mubr.f32.mxu0 0.0
      %3586 = vmatmul.mubr.f32.gmra.mrb[0].mxu0 %v3419
      %v3587 = vpop.f32.mrb[0].mxu0
      %v3588 = vadd.f32 0.0, %v3587
      %v3589 = vpop.f32.mrb[0].mxu0
      %3590 = vmatprep.mubr.f32.mxu0 0.0
      %3591 = vmatmul.mubr.f32.gmra.mrb[0].mxu0 %v3422
      %v3592 = vpop.f32.mrb[0].mxu0
      %v3593 = vadd.f32 0.0, %v3592
      %v3594 = vpop.f32.mrb[0].mxu0
      %3595 = vmatprep.mubr.f32.mxu0 0.0
      %3596 = vmatmul.mubr.f32.gmra.mrb[0].mxu0 %v3425
      %v3597 = vpop.f32.mrb[0].mxu0
      %v3598 = vadd.f32 0.0, %v3597
      %v3599 = vpop.f32.mrb[0].mxu0
      %3600 = vmatprep.mubr.f32.mxu0 0.0
      %3601 = vmatmul.mubr.f32.gmra.mrb[0].mxu0 %v3428
      %v3602 = vpop.f32.mrb[0].mxu0
      %v3603 = vadd.f32 0.0, %v3602
      %v3604 = vpop.f32.mrb[0].mxu0
      %3605 = vmatprep.mubr.f32.mxu0 0.0
      %3606 = vmatmul.mubr.f32.gmra.mrb[0].mxu0 %v3431
      %v3607 = vpop.f32.mrb[0].mxu0
      %v3608 = vadd.f32 0.0, %v3607
      %v3609 = vpop.f32.mrb[0].mxu0
      %3610 = vmatprep.mubr.f32.mxu0 0.0
      %3611 = vmatmul.mubr.f32.gmra.mrb[0].mxu0 %v3434
      %v3612 = vpop.f32.mrb[0].mxu0
      %v3613 = vadd.f32 0.0, %v3612
      %v3614 = vpop.f32.mrb[0].mxu0
      %3615 = vmatprep.mubr.f32.mxu0 0.0
      %3616 = vmatmul.mubr.f32.gmra.mrb[0].mxu0 %v3437
      %v3617 = vpop.f32.mrb[0].mxu0
      %v3618 = vadd.f32 0.0, %v3617
      %v3619 = vpop.f32.mrb[0].mxu0
      %3620 = vmatprep.mubr.f32.mxu0 0.0
      %3621 = vmatmul.mubr.f32.gmra.mrb[0].mxu0 %v3440
      %v3622 = vpop.f32.mrb[0].mxu0
      %v3623 = vadd.f32 0.0, %v3622
      %v3624 = vpop.f32.mrb[0].mxu0
      %3625 = vmatprep.mubr.f32.mxu0 0.0
      %3626 = vmatmul.mubr.f32.gmra.mrb[0].mxu0 %v3443
      %v3627 = vpop.f32.mrb[0].mxu0
      %v3628 = vadd.f32 0.0, %v3627
      %v3629 = vpop.f32.mrb[0].mxu0
      %3630 = vmatprep.mubr.f32.mxu0 0.0
      %3631 = vmatmul.mubr.f32.gmra.mrb[0].mxu0 %v3446
      %v3632 = vpop.f32.mrb[0].mxu0
      %v3633 = vadd.f32 0.0, %v3632
      %v3634 = vpop.f32.mrb[0].mxu0
      %3635 = vmatprep.mubr.f32.mxu0 0.0
      %3636 = vmatmul.mubr.f32.gmra.mrb[0].mxu0 %v3449
      %v3637 = vpop.f32.mrb[0].mxu0
      %v3638 = vadd.f32 0.0, %v3637
      %v3639 = vpop.f32.mrb[0].mxu0
      %3640 = vmatprep.mubr.f32.mxu0 0.0
      %3641 = vmatmul.mubr.f32.gmra.mrb[0].mxu0 %v3452
      %v3642 = vpop.f32.mrb[0].mxu0
      %v3643 = vadd.f32 0.0, %v3642
      %v3644 = vpop.f32.mrb[0].mxu0
      %3645 = vmatprep.mubr.f32.mxu0 0.0
      %3646 = vmatmul.mubr.f32.gmra.mrb[0].mxu0 %v3455
      %v3647 = vpop.f32.mrb[0].mxu0
      %v3648 = vadd.f32 0.0, %v3647
      %v3649 = vpop.f32.mrb[0].mxu0
      %3650 = vmatprep.mubr.f32.mxu0 0.0
      %3651 = vmatmul.mubr.f32.gmra.mrb[0].mxu0 %v3458
      %v3652 = vpop.f32.mrb[0].mxu0
      %v3653 = vadd.f32 0.0, %v3652
      %v3654 = vpop.f32.mrb[0].mxu0
      %3655 = vmatprep.mubr.f32.mxu0 0.0
      %3656 = vmatmul.mubr.f32.gmra.mrb[0].mxu0 %v3461
      %v3657 = vpop.f32.mrb[0].mxu0
      %v3658 = vadd.f32 0.0, %v3657
      %v3659 = vpop.f32.mrb[0].mxu0
      %3660 = vmatprep.mubr.f32.mxu0 0.0
      %3661 = vmatmul.mubr.f32.gmra.mrb[0].mxu0 %v3464
      %v3662 = vpop.f32.mrb[0].mxu0
      %v3663 = vadd.f32 0.0, %v3662
      %v3664 = vpop.f32.mrb[0].mxu0
      %3665 = vmatprep.mubr.f32.mxu0 0.0
      %3666 = vmatmul.mubr.f32.gmra.mrb[0].mxu0 %v3467
      %v3667 = vpop.f32.mrb[0].mxu0
      %v3668 = vadd.f32 0.0, %v3667
      %v3669 = vpop.f32.mrb[0].mxu0
      %3670 = vmatprep.mubr.f32.mxu0 0.0
      %3671 = vmatmul.mubr.f32.gmra.mrb[0].mxu0 %v3470
      %v3672 = vpop.f32.mrb[0].mxu0
      %v3673 = vadd.f32 0.0, %v3672
      %v3674 = vpop.f32.mrb[0].mxu0
      %3675 = vmatprep.mubr.f32.mxu0 0.0
      %3676 = vmatmul.mubr.f32.gmra.mrb[0].mxu0 %v3473
      %v3677 = vpop.f32.mrb[0].mxu0
      %v3678 = vadd.f32 0.0, %v3677
      %v3679 = vpop.f32.mrb[0].mxu0
      %3680 = vmatprep.mubr.f32.mxu0 0.0
      %3681 = vmatmul.mubr.f32.gmra.mrb[0].mxu0 %v3476
      %v3682 = vpop.f32.mrb[0].mxu0
      %v3683 = vadd.f32 0.0, %v3682
      %v3684 = vpop.f32.mrb[0].mxu0
      %3685 = vmatprep.mubr.f32.mxu0 0.0
      %3686 = vmatmul.mubr.f32.gmra.mrb[0].mxu0 %v3479
      %v3687 = vpop.f32.mrb[0].mxu0
      %v3688 = vadd.f32 0.0, %v3687
      %v3689 = vpop.f32.mrb[0].mxu0
      %3690 = vmatprep.mubr.f32.mxu0 0.0
      %3691 = vmatmul.mubr.f32.gmra.mrb[0].mxu0 %v3482
      %v3692 = vpop.f32.mrb[0].mxu0
      %v3693 = vadd.f32 0.0, %v3692
      %v3694 = vpop.f32.mrb[0].mxu0
      %3695 = vmatprep.mubr.f32.mxu0 0.0
      %3696 = vmatmul.mubr.f32.gmra.mrb[0].mxu0 %v3485
      %v3697 = vpop.f32.mrb[0].mxu0
      %v3698 = vadd.f32 0.0, %v3697
      %v3699 = vpop.f32.mrb[0].mxu0
      %3700 = vmatprep.mubr.f32.mxu0 0.0
      %3701 = vmatmul.mubr.f32.gmra.mrb[0].mxu0 %v3488
      %v3702 = vpop.f32.mrb[0].mxu0
      %v3703 = vadd.f32 0.0, %v3702
      %v3704 = vpop.f32.mrb[0].mxu0
      %3705 = vmatprep.mubr.f32.mxu0 0.0
      %3706 = vmatmul.mubr.f32.gmra.mrb[0].mxu0 %v3491
      %v3707 = vpop.f32.mrb[0].mxu0
      %v3708 = vadd.f32 0.0, %v3707
      %v3709 = vpop.f32.mrb[0].mxu0
      %3710 = vmatprep.mubr.f32.mxu0 0.0
      %3711 = vmatmul.mubr.f32.gmra.mrb[0].mxu0 %v3494
      %v3712 = vpop.f32.mrb[0].mxu0
      %v3713 = vadd.f32 0.0, %v3712
      %v3714 = vpop.f32.mrb[0].mxu0
      %3715 = vmatprep.mubr.f32.mxu0 0.0
      %3716 = vmatmul.mubr.f32.gmra.mrb[0].mxu0 %v3497
      %v3717 = vpop.f32.mrb[0].mxu0
      %v3718 = vadd.f32 0.0, %v3717
      %v3719 = vpop.f32.mrb[0].mxu0
      %3720 = vmatprep.mubr.f32.mxu0 0.0
      %3721 = vmatmul.mubr.f32.gmra.mrb[0].mxu0 %v3500
      %v3722 = vpop.f32.mrb[0].mxu0
      %v3723 = vadd.f32 0.0, %v3722
      %v3724 = vpop.f32.mrb[0].mxu0
      %3725 = vmatprep.mubr.f32.mxu0 0.0
      %3726 = vmatmul.mubr.f32.gmra.mrb[0].mxu0 %v3503
      %v3727 = vpop.f32.mrb[0].mxu0
      %v3728 = vadd.f32 0.0, %v3727
      %v3729 = vpop.f32.mrb[0].mxu0
      %3730 = vmatprep.mubr.f32.mxu0 0.0
      %3731 = vmatmul.mubr.f32.gmra.mrb[0].mxu0 %v3506
      %v3732 = vpop.f32.mrb[0].mxu0
      %v3733 = vadd.f32 0.0, %v3732
      %v3734 = vpop.f32.mrb[0].mxu0
      %3735 = vdwg.mxu0
      %v3736 = vadd.f32 %v2803, %v3578
      %v3737 = vadd.f32 %v2804, %v3583
      %v3738 = vadd.f32 %v2805, %v3588
      %v3739 = vadd.f32 %v2806, %v3593
      %v3740 = vadd.f32 %v2807, %v3598
      %v3741 = vadd.f32 %v2808, %v3603
      %v3742 = vadd.f32 %v2809, %v3608
      %v3743 = vadd.f32 %v2810, %v3613
      %v3744 = vadd.f32 %v2811, %v3618
      %v3745 = vadd.f32 %v2812, %v3623
      %v3746 = vadd.f32 %v2813, %v3628
      %v3747 = vadd.f32 %v2814, %v3633
      %v3748 = vadd.f32 %v2815, %v3638
      %v3749 = vadd.f32 %v2816, %v3643
      %v3750 = vadd.f32 %v2817, %v3648
      %v3751 = vadd.f32 %v2818, %v3653
      %v3752 = vadd.f32 %v2819, %v3658
      %v3753 = vadd.f32 %v2820, %v3663
      %v3754 = vadd.f32 %v2821, %v3668
      %v3755 = vadd.f32 %v2822, %v3673
      %v3756 = vadd.f32 %v2823, %v3678
      %v3757 = vadd.f32 %v2824, %v3683
      %v3758 = vadd.f32 %v2825, %v3688
      %v3759 = vadd.f32 %v2826, %v3693
      %v3760 = vadd.f32 %v2827, %v3698
      %v3761 = vadd.f32 %v2828, %v3703
      %v3762 = vadd.f32 %v2829, %v3708
      %v3763 = vadd.f32 %v2830, %v3713
      %v3764 = vadd.f32 %v2831, %v3718
      %v3765 = vadd.f32 %v2832, %v3723
      %v3766 = vadd.f32 %v2833, %v3728
      %v3767 = vadd.f32 %v2834, %v3733
      %v3768 = vld [vmem:[%s4] sm:$0x1]
      %v3770 = vlaneseq
      %v3771 = vshrl.u32 %v3770, 7
      %v3772 = vsub.s32 0, %v3771
      %v3773 = vrot.slane %v3768, %v3772
      %v3775 = vadd.f32 %v3736, %v3773
      %v3776 = vadd.f32 %v3737, %v3773
      %v3777 = vadd.f32 %v3738, %v3773
      %v3778 = vadd.f32 %v3739, %v3773
      %v3779 = vadd.f32 %v3740, %v3773
      %v3780 = vadd.f32 %v3741, %v3773
      %v3781 = vadd.f32 %v3742, %v3773
      %v3782 = vadd.f32 %v3743, %v3773
      %v3783 = vadd.f32 %v3744, %v3773
      %v3784 = vadd.f32 %v3745, %v3773
      %v3785 = vadd.f32 %v3746, %v3773
      %v3786 = vadd.f32 %v3747, %v3773
      %v3787 = vadd.f32 %v3748, %v3773
      %v3788 = vadd.f32 %v3749, %v3773
      %v3789 = vadd.f32 %v3750, %v3773
      %v3790 = vadd.f32 %v3751, %v3773
      %v3791 = vadd.f32 %v3752, %v3773
      %v3792 = vadd.f32 %v3753, %v3773
      %v3793 = vadd.f32 %v3754, %v3773
      %v3794 = vadd.f32 %v3755, %v3773
      %v3795 = vadd.f32 %v3756, %v3773
      %v3796 = vadd.f32 %v3757, %v3773
      %v3797 = vadd.f32 %v3758, %v3773
      %v3798 = vadd.f32 %v3759, %v3773
      %v3799 = vadd.f32 %v3760, %v3773
      %v3800 = vadd.f32 %v3761, %v3773
      %v3801 = vadd.f32 %v3762, %v3773
      %v3802 = vadd.f32 %v3763, %v3773
      %v3803 = vadd.f32 %v3764, %v3773
      %v3804 = vadd.f32 %v3765, %v3773
      %v3805 = vadd.f32 %v3766, %v3773
      %v3806 = vadd.f32 %v3767, %v3773
      %v3807 = vmax.f32 %v3775, 0.0
      %v3808 = vmax.f32 %v3776, 0.0
      %v3809 = vmax.f32 %v3777, 0.0
      %v3810 = vmax.f32 %v3778, 0.0
      %v3811 = vmax.f32 %v3779, 0.0
      %v3812 = vmax.f32 %v3780, 0.0
      %v3813 = vmax.f32 %v3781, 0.0
      %v3814 = vmax.f32 %v3782, 0.0
      %v3815 = vmax.f32 %v3783, 0.0
      %v3816 = vmax.f32 %v3784, 0.0
      %v3817 = vmax.f32 %v3785, 0.0
      %v3818 = vmax.f32 %v3786, 0.0
      %v3819 = vmax.f32 %v3787, 0.0
      %v3820 = vmax.f32 %v3788, 0.0
      %v3821 = vmax.f32 %v3789, 0.0
      %v3822 = vmax.f32 %v3790, 0.0
      %v3823 = vmax.f32 %v3791, 0.0
      %v3824 = vmax.f32 %v3792, 0.0
      %v3825 = vmax.f32 %v3793, 0.0
      %v3826 = vmax.f32 %v3794, 0.0
      %v3827 = vmax.f32 %v3795, 0.0
      %v3828 = vmax.f32 %v3796, 0.0
      %v3829 = vmax.f32 %v3797, 0.0
      %v3830 = vmax.f32 %v3798, 0.0
      %v3831 = vmax.f32 %v3799, 0.0
      %v3832 = vmax.f32 %v3800, 0.0
      %v3833 = vmax.f32 %v3801, 0.0
      %v3834 = vmax.f32 %v3802, 0.0
      %v3835 = vmax.f32 %v3803, 0.0
      %v3836 = vmax.f32 %v3804, 0.0
      %v3837 = vmax.f32 %v3805, 0.0
      %v3838 = vmax.f32 %v3806, 0.0
      %vm3839 = vcmask 64512
      %3840 = vst.msk [vmem:[%s224] sm:$0xff] %vm3839, %v3807
      %3841 = vst.msk [vmem:[%s224 + $0x8] sm:$0xff] %vm3839, %v3808
      %3842 = vst.msk [vmem:[%s224 + $0x10] sm:$0xff] %vm3839, %v3809
      %3843 = vst.msk [vmem:[%s224 + $0x18] sm:$0xff] %vm3839, %v3810
      %3844 = vst.msk [vmem:[%s224 + $0x20] sm:$0xff] %vm3839, %v3811
      %3845 = vst.msk [vmem:[%s224 + $0x28] sm:$0xff] %vm3839, %v3812
      %3846 = vst.msk [vmem:[%s224 + $0x30] sm:$0xff] %vm3839, %v3813
      %3847 = vst.msk [vmem:[%s224 + $0x38] sm:$0xff] %vm3839, %v3814
      %3848 = vst.msk [vmem:[%s224 + $0x40] sm:$0xff] %vm3839, %v3815
      %3849 = vst.msk [vmem:[%s224 + $0x48] sm:$0xff] %vm3839, %v3816
      %3850 = vst.msk [vmem:[%s224 + $0x50] sm:$0xff] %vm3839, %v3817
      %3851 = vst.msk [vmem:[%s224 + $0x58] sm:$0xff] %vm3839, %v3818
      %3852 = vst.msk [vmem:[%s224 + $0x60] sm:$0xff] %vm3839, %v3819
      %3853 = vst.msk [vmem:[%s224 + $0x68] sm:$0xff] %vm3839, %v3820
      %3854 = vst.msk [vmem:[%s224 + $0x70] sm:$0xff] %vm3839, %v3821
      %3855 = vst.msk [vmem:[%s224 + $0x78] sm:$0xff] %vm3839, %v3822
      %3856 = vst.msk [vmem:[%s224 + $0x80] sm:$0xff] %vm3839, %v3823
      %3857 = vst.msk [vmem:[%s224 + $0x88] sm:$0xff] %vm3839, %v3824
      %3858 = vst.msk [vmem:[%s224 + $0x90] sm:$0xff] %vm3839, %v3825
      %3859 = vst.msk [vmem:[%s224 + $0x98] sm:$0xff] %vm3839, %v3826
      %3860 = vst.msk [vmem:[%s224 + $0xa0] sm:$0xff] %vm3839, %v3827
      %3861 = vst.msk [vmem:[%s224 + $0xa8] sm:$0xff] %vm3839, %v3828
      %3862 = vst.msk [vmem:[%s224 + $0xb0] sm:$0xff] %vm3839, %v3829
      %3863 = vst.msk [vmem:[%s224 + $0xb8] sm:$0xff] %vm3839, %v3830
      %3864 = vst.msk [vmem:[%s224 + $0xc0] sm:$0xff] %vm3839, %v3831
      %3865 = vst.msk [vmem:[%s224 + $0xc8] sm:$0xff] %vm3839, %v3832
      %3866 = vst.msk [vmem:[%s224 + $0xd0] sm:$0xff] %vm3839, %v3833
      %3867 = vst.msk [vmem:[%s224 + $0xd8] sm:$0xff] %vm3839, %v3834
      %3868 = vst.msk [vmem:[%s224 + $0xe0] sm:$0xff] %vm3839, %v3835
      %3869 = vst.msk [vmem:[%s224 + $0xe8] sm:$0xff] %vm3839, %v3836
      %3870 = vst.msk [vmem:[%s224 + $0xf0] sm:$0xff] %vm3839, %v3837
      %3871 = vst.msk [vmem:[%s224 + $0xf8] sm:$0xff] %vm3839, %v3838
      %p3872 = scmp.lt.s32.totalorder %s16, 1
      %s3873 = scalar_select %p3872, %s16, 1
      %s3874 = smul.addr %s3873, 32
      %s3875 = smul.addr %s3874, 8
      %s3876 = scalar_lea.vmem %s5, %s3875
      // Predicated region
      $region41: #{tpu_custom_call.1} parent=39 // pred_check
        %p3877 = pneg %p144
      $region42: #{tpu_custom_call.1} parent=39 // pred_check_branch
        %3879 = sbr.rel (%p3877) target = $region44
      $region43: #{tpu_custom_call.1} parent=39 // pred_region
        _
      $region44: #{tpu_custom_call.1} parent=39 // pred_fallthru
        _
    $region40: #{tpu_custom_call.1} parent=5 // pred_fallthru
      _
    %p3880 = scmp.le.s32.totalorder 2, %s11
    // Predicated region
    $region45: #{tpu_custom_call.1} parent=5 // pred_check
      %p3881 = pneg %p3880
    $region46: #{tpu_custom_call.1} parent=5 // pred_check_branch
      %3883 = sbr.rel (%p3881) target = $region48
    $region47: #{tpu_custom_call.1} parent=5 // pred_region
      %s3884 = ssub.s32 %s11, 2
      // Predicated region
      $region49: #{tpu_custom_call.1} parent=47 // pred_check
        %p3885 = pneg %p150
      $region50: #{tpu_custom_call.1} parent=47 // pred_check_branch
        %3887 = sbr.rel (%p3885) target = $region52
      $region51: #{tpu_custom_call.1} parent=47 // pred_region
        %p3888 = scmp.lt.s32.totalorder %s17, 1
        %s3889 = scalar_select %p3888, %s17, 1
        %s3890 = smul.addr %s3889, 32
        %s3891 = smul.addr %s3890, 8
        %s3892 = scalar_lea.vmem %s5, %s3891
      $region52: #{tpu_custom_call.1} parent=47 // pred_fallthru
        _
    $region48: #{tpu_custom_call.1} parent=5 // pred_fallthru
      _
  $region6: #{tpu_custom_call.1} parent=0 // loop_footer
    %s15 = sadd.s32 1, %s11
  $region7: #{tpu_custom_call.1} parent=0 // loop_footer_branch
    %10 = sbr.rel target = $region3
  $region8: #{tpu_custom_call.1} parent=0 // loop_exit
    _

</llo_original>
